<compile_context>
chip_gen: v5e
topology: v5e:2x2
jax: 0.10.0
libtpu: 0.0.40
codegen_flags: <defaults>
</compile_context>

<pallas_src>
import functools
import math

import jax
import jax.numpy as jnp
from jax.experimental import pallas as pl
from jax.experimental.pallas import tpu as pltpu


def _gelu_exact(x):
    # PyTorch nn.GELU() default (erf-based).
    return 0.5 * x * (1.0 + jax.lax.erf(x * (1.0 / math.sqrt(2.0))))


def _gelu_tanh(x):
    # tanh approximation; tanh runs on the EUP (its own VLIW slot).
    c = math.sqrt(2.0 / math.pi)
    return 0.5 * x * (1.0 + jnp.tanh(c * (x + 0.044715 * x * x * x)))


def convnext_block_kernel(x_ref, dww_ref, dwb_ref, lng_ref, lnb_ref,
                          w1_ref, b1_ref, w2_ref, b2_ref, gamma_ref,
                          o_ref, xpad_ref, *, approx_gelu: bool):
    # x_ref   : (1, H, W, C)  unpadded NHWC image for this batch element
    #           (block index constant across the row-tile axis => resident).
    # o_ref   : (1, TH, W, C) output row tile.
    # xpad_ref: (TH+6, W+6, C) f32 VMEM scratch — zero-padded halo slab.
    _, TH, W, C = o_ref.shape
    t = pl.program_id(1)
    nt = pl.num_programs(1)
    r0 = t * TH                                       # first output row of this tile

    zeros3col = jnp.zeros((TH + 6, 3, C), jnp.float32)
    zeros3row = jnp.zeros((3, W, C), jnp.float32)

    # ---- build the zero-padded (TH+6, W+6, C) input slab in VMEM ----
    # 3-column borders are always zero (covers the corners too).
    xpad_ref[:, 0:3, :] = zeros3col
    xpad_ref[:, W + 3:W + 6, :] = zeros3col

    # Body rows (always valid) — also the residual input for this tile.
    body = x_ref[0, pl.ds(r0, TH), :, :]              # (TH, W, C) f32
    xpad_ref[3:TH + 3, 3:W + 3, :] = body

    # Top 3-row halo: copy from the image when it exists, else zero-pad.
    @pl.when(t == 0)
    def _():
        xpad_ref[0:3, 3:W + 3, :] = zeros3row

    @pl.when(t > 0)
    def _():
        xpad_ref[0:3, 3:W + 3, :] = x_ref[0, pl.ds(r0 - 3, 3), :, :]

    # Bottom 3-row halo.
    @pl.when(t == nt - 1)
    def _():
        xpad_ref[TH + 3:TH + 6, 3:W + 3, :] = zeros3row

    @pl.when(t < nt - 1)
    def _():
        xpad_ref[TH + 3:TH + 6, 3:W + 3, :] = x_ref[0, pl.ds(r0 + TH, 3), :, :]

    xtile = xpad_ref[...]                             # (TH+6, W+6, C) f32
    dww = dww_ref[...]                                # (7, 7, C)

    # ---- depthwise 7x7 conv (f32) ----
    # Materialize the W-axis shift once per kw (7 shifted slabs, not 49); the
    # 7 kh taps are cheap leading-dim slices.  Keep 7 per-kw partial
    # accumulators and sum them with a balanced tree for better VALU packing.
    partials = []
    for kw in range(7):
        xs = xtile[:, kw:kw + W, :]                   # (TH+6, W, C)
        p = xs[0:TH] * dww[0, kw]
        for kh in range(1, 7):
            p = p + xs[kh:kh + TH] * dww[kh, kw]
        partials.append(p)
    while len(partials) > 1:
        nxt = [partials[i] + partials[i + 1] for i in range(0, len(partials) - 1, 2)]
        if len(partials) % 2:
            nxt.append(partials[-1])
        partials = nxt
    acc = partials[0] + dwb_ref[0]                    # (TH, W, C)

    # ---- LayerNorm over channels (eps=1e-6, biased variance), one pass ----
    inv_c = 1.0 / C
    mean = jnp.sum(acc, axis=-1, keepdims=True) * inv_c
    mean_sq = jnp.sum(acc * acc, axis=-1, keepdims=True) * inv_c
    var = mean_sq - mean * mean
    xn = (acc - mean) * jax.lax.rsqrt(var + 1e-6)
    xn = xn * lng_ref[0] + lnb_ref[0]

    # ---- pointwise MLP on the MXU: bf16 inputs, f32 accumulation ----
    xm = xn.reshape(TH * W, C).astype(jnp.bfloat16)
    h = jnp.dot(xm, w1_ref[...], preferred_element_type=jnp.float32) + b1_ref[0]
    h = _gelu_tanh(h) if approx_gelu else _gelu_exact(h)
    y = jnp.dot(h.astype(jnp.bfloat16), w2_ref[...],
                preferred_element_type=jnp.float32) + b2_ref[0]

    # ---- layer scale (gamma) + residual (drop_path == identity) ----
    y = (y * gamma_ref[0]).reshape(TH, W, C)
    o_ref[0] = (body + y).astype(o_ref.dtype)


def _vmem_limit_and_tile_budget():
    """Per-generation (vmem_limit_bytes, GELU-intermediate tile cap in bytes)."""
    try:
        kind = jax.devices()[0].device_kind.lower()
    except Exception:
        kind = ""
    if "v7" in kind or "7x" in kind:
        # v7x: 64 MiB physical VMEM per TensorCore — stay well below it.
        return 44 * 1024 * 1024, 4 * 1024 * 1024
    if any(s in kind for s in ("v4", "v5", "v6")):
        # v4/v5e/v6e: 128 MiB physical VMEM.
        return 96 * 1024 * 1024, 8 * 1024 * 1024
    return 48 * 1024 * 1024, 4 * 1024 * 1024


def _pick_tile_h(H, W, C, budget_bytes):
    """Largest divisor of H whose (TH*W, 4C) f32 GELU intermediate fits the budget,
    but never a pathologically skinny tile (TH*W < 8 sublanes)."""
    bytes_per_row = 4 * (4 * C) * W
    max_rows = max(1, budget_bytes // max(1, bytes_per_row))
    best = 1
    for cand in range(1, H + 1):
        if H % cand == 0 and cand <= max_rows:
            best = cand
    if best * W < 8:                       # avoid sub-sublane matmul M
        for cand in range(best, H + 1):
            if H % cand == 0 and cand * W >= 8:
                best = cand
                break
    return best


def convnext_block(x_nchw, params, tile_h=None, approx_gelu=True):
    dww, dwb, lng, lnb, w1, b1, w2, b2, gamma = params
    N, C, H, W = x_nchw.shape
    C4 = 4 * C

    vmem_limit, tile_budget = _vmem_limit_and_tile_budget()
    TH = _pick_tile_h(H, W, C, tile_budget) if tile_h is None else tile_h
    assert H % TH == 0, f"tile_h={TH} must divide H={H}"
    nT = H // TH

    # Channels-last so LayerNorm / Linear reduce over the lane (fast) axis.
    # TODO(synk): keep NHWC end-to-end across a ConvNeXt stack to drop this
    # per-block HBM transpose pass (and the one after the kernel); the module
    # interface is NCHW so it stays here.  Padding is now done inside the kernel.
    x_nhwc = jnp.transpose(x_nchw, (0, 2, 3, 1))

    # bf16 weights for the MXU path (halves weight VMEM; f32 accumulation).
    w1b = w1.astype(jnp.bfloat16)
    w2b = w2.astype(jnp.bfloat16)

    kernel = functools.partial(convnext_block_kernel, approx_gelu=approx_gelu)

    # Advisory cost estimate (dwconv + two pointwise matmuls; GELU transcendental).
    flops = int(2 * N * H * W * C * (49 + 8 * C))
    transcendentals = int(N * H * W * 4 * C)
    bytes_accessed = int(4 * 2 * N * H * W * C + 2 * 2 * 4 * C * C)

    out_nhwc = pl.pallas_call(
        kernel,
        out_shape=jax.ShapeDtypeStruct((N, H, W, C), x_nhwc.dtype),
        grid_spec=pltpu.PrefetchScalarGridSpec(
            num_scalar_prefetch=0,
            grid=(N, nT),
            in_specs=[
                pl.BlockSpec((1, H, W, C), lambda n, t: (n, 0, 0, 0)),  # unpadded x (resident per batch)
                pl.BlockSpec((7, 7, C), lambda n, t: (0, 0, 0)),        # dw conv weight
                pl.BlockSpec((1, C), lambda n, t: (0, 0)),              # dw conv bias
                pl.BlockSpec((1, C), lambda n, t: (0, 0)),              # LN weight
                pl.BlockSpec((1, C), lambda n, t: (0, 0)),              # LN bias
                pl.BlockSpec((C, C4), lambda n, t: (0, 0)),             # w1 (bf16)
                pl.BlockSpec((1, C4), lambda n, t: (0, 0)),             # b1
                pl.BlockSpec((C4, C), lambda n, t: (0, 0)),             # w2 (bf16)
                pl.BlockSpec((1, C), lambda n, t: (0, 0)),              # b2
                pl.BlockSpec((1, C), lambda n, t: (0, 0)),              # layer scale gamma
            ],
            out_specs=pl.BlockSpec((1, TH, W, C), lambda n, t: (n, t, 0, 0)),
            scratch_shapes=[pltpu.VMEM((TH + 6, W + 6, C), jnp.float32)],
        ),
        compiler_params=pltpu.CompilerParams(
            dimension_semantics=("parallel", "parallel"),
            vmem_limit_bytes=vmem_limit),
        cost_estimate=pl.CostEstimate(flops=flops,
                                      transcendentals=transcendentals,
                                      bytes_accessed=bytes_accessed),
    )(x_nhwc, dww, dwb.reshape(1, C), lng.reshape(1, C), lnb.reshape(1, C),
      w1b, b1.reshape(1, C4), w2b, b2.reshape(1, C), gamma.reshape(1, C))

    return jnp.transpose(out_nhwc, (0, 3, 1, 2))                  # back to NCHW


def reference_block(x_nchw, params):
    """Pure-JAX f32 reference (exact erf GELU, like PyTorch nn.GELU())."""
    dww, dwb, lng, lnb, w1, b1, w2, b2, gamma = params
    C = x_nchw.shape[1]
    k = jnp.transpose(dww, (2, 0, 1))[:, None, :, :]              # (C,1,7,7) OIHW
    y = jax.lax.conv_general_dilated(
        x_nchw, k, window_strides=(1, 1), padding=((3, 3), (3, 3)),
        feature_group_count=C,
        dimension_numbers=("NCHW", "OIHW", "NCHW"))
    y = y + dwb[None, :, None, None]
    y = jnp.transpose(y, (0, 2, 3, 1))
    mean = y.mean(-1, keepdims=True)
    var = ((y - mean) ** 2).mean(-1, keepdims=True)
    y = (y - mean) / jnp.sqrt(var + 1e-6) * lng + lnb
    y = y @ w1 + b1
    y = _gelu_exact(y)
    y = y @ w2 + b2
    y = y * gamma
    y = jnp.transpose(y, (0, 3, 1, 2))
    return x_nchw + y


def init_params(key, dim, layer_scale_init_value=1e-6):
    ks = jax.random.split(key, 6)
    dww = jax.random.normal(ks[0], (7, 7, dim), jnp.float32) * 0.1    # dwconv weight (k,k,C)
    dwb = jax.random.normal(ks[1], (dim,), jnp.float32) * 0.1         # dwconv bias
    lng = jnp.ones((dim,), jnp.float32)                               # LayerNorm weight
    lnb = jnp.zeros((dim,), jnp.float32)                              # LayerNorm bias
    w1 = jax.random.normal(ks[2], (dim, 4 * dim), jnp.float32) * 0.05 # pwconv1 (stored transposed)
    b1 = jax.random.normal(ks[3], (4 * dim,), jnp.float32) * 0.05
    w2 = jax.random.normal(ks[4], (4 * dim, dim), jnp.float32) * 0.05 # pwconv2 (stored transposed)
    b2 = jax.random.normal(ks[5], (dim,), jnp.float32) * 0.05
    gamma = layer_scale_init_value * jnp.ones((dim,), jnp.float32)    # layer scale
    return (dww, dwb, lng, lnb, w1, b1, w2, b2, gamma)


if __name__ == "__main__":
    key = jax.random.PRNGKey(0)
    kx, kp = jax.random.split(key)

    N, C, H, W = 2, 32, 16, 16
    x = jax.random.normal(kx, (N, C, H, W), jnp.float32)
    # layer_scale=1.0 (instead of the 1e-6 default) so the correctness check
    # actually exercises the MLP branch instead of it being crushed by gamma.
    params = init_params(kp, C, layer_scale_init_value=1.0)

    # tile_h=8 -> 2 row tiles per image: exercises in-kernel halo/zero-padding.
    out = convnext_block(x, params, tile_h=8)
    out = jax.block_until_ready(out)

    ref = reference_block(x, params)
    assert out.shape == (N, C, H, W)
    err = jnp.max(jnp.abs(out - ref))
    # Tolerance absorbs bf16 MXU matmuls + tanh-approx GELU (both flagged above).
    assert jnp.allclose(out, ref, atol=3e-2, rtol=3e-2), f"max abs err {err}"

    print("KERNEL_OK")
</pallas_src>

<mosaic_0001>
module attributes {stable_mosaic.version = 11 : i64} {
  func.func @convnext_block_kernel(%arg0: i32, %arg1: i32, %arg2: memref<1x16x16x32xf32, #tpu.memory_space<vmem>>, %arg3: memref<7x7x32xf32, #tpu.memory_space<vmem>>, %arg4: memref<1x32xf32, #tpu.memory_space<vmem>>, %arg5: memref<1x32xf32, #tpu.memory_space<vmem>>, %arg6: memref<1x32xf32, #tpu.memory_space<vmem>>, %arg7: memref<32x128xbf16, #tpu.memory_space<vmem>>, %arg8: memref<1x128xf32, #tpu.memory_space<vmem>>, %arg9: memref<128x32xbf16, #tpu.memory_space<vmem>>, %arg10: memref<1x32xf32, #tpu.memory_space<vmem>>, %arg11: memref<1x32xf32, #tpu.memory_space<vmem>>, %arg12: memref<1x8x16x32xf32, #tpu.memory_space<vmem>>, %arg13: memref<14x22x32xf32, #tpu.memory_space<vmem>>) attributes {dimension_semantics = [#tpu.dimension_semantics<parallel>, #tpu.dimension_semantics<parallel>], iteration_bounds = array<i64: 2, 2>, scalar_prefetch = 0 : i64, scratch_operands = 1 : i64, tpu.core_type = #tpu.core_type<tc>, window_params = [{transform_indices = @transform_0, window_bounds = array<i64: 1, 16, 16, 32>}, {pipeline_mode = #tpu.pipeline_mode<synchronous>, transform_indices = @transform_1, window_bounds = array<i64: 7, 7, 32>}, {pipeline_mode = #tpu.pipeline_mode<synchronous>, transform_indices = @transform_2, window_bounds = array<i64: 1, 32>}, {pipeline_mode = #tpu.pipeline_mode<synchronous>, transform_indices = @transform_3, window_bounds = array<i64: 1, 32>}, {pipeline_mode = #tpu.pipeline_mode<synchronous>, transform_indices = @transform_4, window_bounds = array<i64: 1, 32>}, {pipeline_mode = #tpu.pipeline_mode<synchronous>, transform_indices = @transform_5, window_bounds = array<i64: 32, 128>}, {pipeline_mode = #tpu.pipeline_mode<synchronous>, transform_indices = @transform_6, window_bounds = array<i64: 1, 128>}, {pipeline_mode = #tpu.pipeline_mode<synchronous>, transform_indices = @transform_7, window_bounds = array<i64: 128, 32>}, {pipeline_mode = #tpu.pipeline_mode<synchronous>, transform_indices = @transform_8, window_bounds = array<i64: 1, 32>}, {pipeline_mode = #tpu.pipeline_mode<synchronous>, transform_indices = @transform_9, window_bounds = array<i64: 1, 32>}, {transform_indices = @transform_10, window_bounds = array<i64: 1, 8, 16, 32>}]} {
    %c8_i32 = arith.constant 8 : i32
    %0 = arith.muli %arg1, %c8_i32 : i32
    %cst = arith.constant 0.000000e+00 : f32
    %1 = vector.broadcast %cst : f32 to vector<14x3x32xf32>
    %cst_0 = arith.constant 0.000000e+00 : f32
    %2 = vector.broadcast %cst_0 : f32 to vector<3x16x32xf32>
    %c0 = arith.constant 0 : index
    %c0_1 = arith.constant 0 : index
    %c0_2 = arith.constant 0 : index
    %3 = vector.load %arg13[%c0, %c0_1, %c0_2] : memref<14x22x32xf32, #tpu.memory_space<vmem>>, vector<14x3x32xf32>
    tpu.vector_store %arg13[%c0, %c0_1, %c0_2], %1 {strides = array<i32>} : memref<14x22x32xf32, #tpu.memory_space<vmem>>, vector<14x3x32xf32>,
    %c0_3 = arith.constant 0 : index
    %c19 = arith.constant 19 : index
    %c0_4 = arith.constant 0 : index
    %4 = vector.load %arg13[%c0_3, %c19, %c0_4] : memref<14x22x32xf32, #tpu.memory_space<vmem>>, vector<14x3x32xf32>
    tpu.vector_store %arg13[%c0_3, %c19, %c0_4], %1 {strides = array<i32>} : memref<14x22x32xf32, #tpu.memory_space<vmem>>, vector<14x3x32xf32>,
    %c0_5 = arith.constant 0 : index
    %5 = arith.index_cast %0 : i32 to index
    %c0_6 = arith.constant 0 : index
    %c0_7 = arith.constant 0 : index
    %6 = vector.load %arg2[%c0_5, %5, %c0_6, %c0_7] : memref<1x16x16x32xf32, #tpu.memory_space<vmem>>, vector<1x8x16x32xf32>
    %7 = vector.shape_cast %6 : vector<1x8x16x32xf32> to vector<8x16x32xf32>
    %c3 = arith.constant 3 : index
    %c3_8 = arith.constant 3 : index
    %c0_9 = arith.constant 0 : index
    %8 = vector.load %arg13[%c3, %c3_8, %c0_9] : memref<14x22x32xf32, #tpu.memory_space<vmem>>, vector<8x16x32xf32>
    tpu.vector_store %arg13[%c3, %c3_8, %c0_9], %7 {strides = array<i32>} : memref<14x22x32xf32, #tpu.memory_space<vmem>>, vector<8x16x32xf32>,
    %c0_i32 = arith.constant 0 : i32
    %9 = arith.cmpi eq, %arg1, %c0_i32 : i32
    %10 = arith.extui %9 : i1 to i32
    %c0_i32_10 = arith.constant 0 : i32
    %11 = arith.cmpi ne, %10, %c0_i32_10 : i32
    scf.if %11 {
      %c0_53 = arith.constant 0 : index
      %c3_54 = arith.constant 3 : index
      %c0_55 = arith.constant 0 : index
      %445 = vector.load %arg13[%c0_53, %c3_54, %c0_55] : memref<14x22x32xf32, #tpu.memory_space<vmem>>, vector<3x16x32xf32>
      tpu.vector_store %arg13[%c0_53, %c3_54, %c0_55], %2 {strides = array<i32>} : memref<14x22x32xf32, #tpu.memory_space<vmem>>, vector<3x16x32xf32>,
    } else {
    }
    %c0_i32_11 = arith.constant 0 : i32
    %12 = arith.cmpi sgt, %arg1, %c0_i32_11 : i32
    %13 = arith.extui %12 : i1 to i32
    %c0_i32_12 = arith.constant 0 : i32
    %14 = arith.cmpi ne, %13, %c0_i32_12 : i32
    scf.if %14 {
      %c3_i32 = arith.constant 3 : i32
      %445 = arith.subi %0, %c3_i32 : i32
      %c0_53 = arith.constant 0 : index
      %446 = arith.index_cast %445 : i32 to index
      %c0_54 = arith.constant 0 : index
      %c0_55 = arith.constant 0 : index
      %447 = vector.load %arg2[%c0_53, %446, %c0_54, %c0_55] : memref<1x16x16x32xf32, #tpu.memory_space<vmem>>, vector<1x3x16x32xf32>
      %448 = vector.shape_cast %447 : vector<1x3x16x32xf32> to vector<3x16x32xf32>
      %c0_56 = arith.constant 0 : index
      %c3_57 = arith.constant 3 : index
      %c0_58 = arith.constant 0 : index
      %449 = vector.load %arg13[%c0_56, %c3_57, %c0_58] : memref<14x22x32xf32, #tpu.memory_space<vmem>>, vector<3x16x32xf32>
      tpu.vector_store %arg13[%c0_56, %c3_57, %c0_58], %448 {strides = array<i32>} : memref<14x22x32xf32, #tpu.memory_space<vmem>>, vector<3x16x32xf32>,
    } else {
    }
    %c1_i32 = arith.constant 1 : i32
    %15 = arith.cmpi eq, %arg1, %c1_i32 : i32
    %16 = arith.extui %15 : i1 to i32
    %c0_i32_13 = arith.constant 0 : i32
    %17 = arith.cmpi ne, %16, %c0_i32_13 : i32
    scf.if %17 {
      %c11 = arith.constant 11 : index
      %c3_53 = arith.constant 3 : index
      %c0_54 = arith.constant 0 : index
      %445 = vector.load %arg13[%c11, %c3_53, %c0_54] : memref<14x22x32xf32, #tpu.memory_space<vmem>>, vector<3x16x32xf32>
      tpu.vector_store %arg13[%c11, %c3_53, %c0_54], %2 {strides = array<i32>} : memref<14x22x32xf32, #tpu.memory_space<vmem>>, vector<3x16x32xf32>,
    } else {
    }
    %c1_i32_14 = arith.constant 1 : i32
    %18 = arith.cmpi slt, %arg1, %c1_i32_14 : i32
    %19 = arith.extui %18 : i1 to i32
    %c0_i32_15 = arith.constant 0 : i32
    %20 = arith.cmpi ne, %19, %c0_i32_15 : i32
    scf.if %20 {
      %c8_i32_53 = arith.constant 8 : i32
      %445 = arith.addi %0, %c8_i32_53 : i32
      %c0_54 = arith.constant 0 : index
      %446 = arith.index_cast %445 : i32 to index
      %c0_55 = arith.constant 0 : index
      %c0_56 = arith.constant 0 : index
      %447 = vector.load %arg2[%c0_54, %446, %c0_55, %c0_56] : memref<1x16x16x32xf32, #tpu.memory_space<vmem>>, vector<1x3x16x32xf32>
      %448 = vector.shape_cast %447 : vector<1x3x16x32xf32> to vector<3x16x32xf32>
      %c11 = arith.constant 11 : index
      %c3_57 = arith.constant 3 : index
      %c0_58 = arith.constant 0 : index
      %449 = vector.load %arg13[%c11, %c3_57, %c0_58] : memref<14x22x32xf32, #tpu.memory_space<vmem>>, vector<3x16x32xf32>
      tpu.vector_store %arg13[%c11, %c3_57, %c0_58], %448 {strides = array<i32>} : memref<14x22x32xf32, #tpu.memory_space<vmem>>, vector<3x16x32xf32>,
    } else {
    }
    %c0_16 = arith.constant 0 : index
    %c0_17 = arith.constant 0 : index
    %c0_18 = arith.constant 0 : index
    %21 = vector.load %arg13[%c0_16, %c0_17, %c0_18] : memref<14x22x32xf32, #tpu.memory_space<vmem>>, vector<14x22x32xf32>
    %c0_19 = arith.constant 0 : index
    %c0_20 = arith.constant 0 : index
    %c0_21 = arith.constant 0 : index
    %22 = vector.load %arg3[%c0_19, %c0_20, %c0_21] : memref<7x7x32xf32, #tpu.memory_space<vmem>>, vector<7x7x32xf32>
    %23 = vector.extract_strided_slice %21 {offsets = [0, 0, 0], sizes = [14, 16, 32], strides = [1, 1, 1]} : vector<14x22x32xf32> to vector<14x16x32xf32>
    %24 = vector.extract_strided_slice %23 {offsets = [0, 0, 0], sizes = [8, 16, 32], strides = [1, 1, 1]} : vector<14x16x32xf32> to vector<8x16x32xf32>
    %25 = vector.extract_strided_slice %22 {offsets = [0, 0, 0], sizes = [1, 1, 32], strides = [1, 1, 1]} : vector<7x7x32xf32> to vector<1x1x32xf32>
    %26 = vector.shape_cast %25 : vector<1x1x32xf32> to vector<32xf32>
    %27 = vector.shape_cast %26 : vector<32xf32> to vector<1x1x32xf32>
    %28 = vector.broadcast %27 : vector<1x1x32xf32> to vector<8x16x32xf32>
    %29 = arith.mulf %24, %28 : vector<8x16x32xf32>
    %30 = vector.extract_strided_slice %23 {offsets = [1, 0, 0], sizes = [8, 16, 32], strides = [1, 1, 1]} : vector<14x16x32xf32> to vector<8x16x32xf32>
    %31 = vector.extract_strided_slice %22 {offsets = [1, 0, 0], sizes = [1, 1, 32], strides = [1, 1, 1]} : vector<7x7x32xf32> to vector<1x1x32xf32>
    %32 = vector.shape_cast %31 : vector<1x1x32xf32> to vector<32xf32>
    %33 = vector.shape_cast %32 : vector<32xf32> to vector<1x1x32xf32>
    %34 = vector.broadcast %33 : vector<1x1x32xf32> to vector<8x16x32xf32>
    %35 = arith.mulf %30, %34 : vector<8x16x32xf32>
    %36 = arith.addf %29, %35 : vector<8x16x32xf32>
    %37 = vector.extract_strided_slice %23 {offsets = [2, 0, 0], sizes = [8, 16, 32], strides = [1, 1, 1]} : vector<14x16x32xf32> to vector<8x16x32xf32>
    %38 = vector.extract_strided_slice %22 {offsets = [2, 0, 0], sizes = [1, 1, 32], strides = [1, 1, 1]} : vector<7x7x32xf32> to vector<1x1x32xf32>
    %39 = vector.shape_cast %38 : vector<1x1x32xf32> to vector<32xf32>
    %40 = vector.shape_cast %39 : vector<32xf32> to vector<1x1x32xf32>
    %41 = vector.broadcast %40 : vector<1x1x32xf32> to vector<8x16x32xf32>
    %42 = arith.mulf %37, %41 : vector<8x16x32xf32>
    %43 = arith.addf %36, %42 : vector<8x16x32xf32>
    %44 = vector.extract_strided_slice %23 {offsets = [3, 0, 0], sizes = [8, 16, 32], strides = [1, 1, 1]} : vector<14x16x32xf32> to vector<8x16x32xf32>
    %45 = vector.extract_strided_slice %22 {offsets = [3, 0, 0], sizes = [1, 1, 32], strides = [1, 1, 1]} : vector<7x7x32xf32> to vector<1x1x32xf32>
    %46 = vector.shape_cast %45 : vector<1x1x32xf32> to vector<32xf32>
    %47 = vector.shape_cast %46 : vector<32xf32> to vector<1x1x32xf32>
    %48 = vector.broadcast %47 : vector<1x1x32xf32> to vector<8x16x32xf32>
    %49 = arith.mulf %44, %48 : vector<8x16x32xf32>
    %50 = arith.addf %43, %49 : vector<8x16x32xf32>
    %51 = vector.extract_strided_slice %23 {offsets = [4, 0, 0], sizes = [8, 16, 32], strides = [1, 1, 1]} : vector<14x16x32xf32> to vector<8x16x32xf32>
    %52 = vector.extract_strided_slice %22 {offsets = [4, 0, 0], sizes = [1, 1, 32], strides = [1, 1, 1]} : vector<7x7x32xf32> to vector<1x1x32xf32>
    %53 = vector.shape_cast %52 : vector<1x1x32xf32> to vector<32xf32>
    %54 = vector.shape_cast %53 : vector<32xf32> to vector<1x1x32xf32>
    %55 = vector.broadcast %54 : vector<1x1x32xf32> to vector<8x16x32xf32>
    %56 = arith.mulf %51, %55 : vector<8x16x32xf32>
    %57 = arith.addf %50, %56 : vector<8x16x32xf32>
    %58 = vector.extract_strided_slice %23 {offsets = [5, 0, 0], sizes = [8, 16, 32], strides = [1, 1, 1]} : vector<14x16x32xf32> to vector<8x16x32xf32>
    %59 = vector.extract_strided_slice %22 {offsets = [5, 0, 0], sizes = [1, 1, 32], strides = [1, 1, 1]} : vector<7x7x32xf32> to vector<1x1x32xf32>
    %60 = vector.shape_cast %59 : vector<1x1x32xf32> to vector<32xf32>
    %61 = vector.shape_cast %60 : vector<32xf32> to vector<1x1x32xf32>
    %62 = vector.broadcast %61 : vector<1x1x32xf32> to vector<8x16x32xf32>
    %63 = arith.mulf %58, %62 : vector<8x16x32xf32>
    %64 = arith.addf %57, %63 : vector<8x16x32xf32>
    %65 = vector.extract_strided_slice %23 {offsets = [6, 0, 0], sizes = [8, 16, 32], strides = [1, 1, 1]} : vector<14x16x32xf32> to vector<8x16x32xf32>
    %66 = vector.extract_strided_slice %22 {offsets = [6, 0, 0], sizes = [1, 1, 32], strides = [1, 1, 1]} : vector<7x7x32xf32> to vector<1x1x32xf32>
    %67 = vector.shape_cast %66 : vector<1x1x32xf32> to vector<32xf32>
    %68 = vector.shape_cast %67 : vector<32xf32> to vector<1x1x32xf32>
    %69 = vector.broadcast %68 : vector<1x1x32xf32> to vector<8x16x32xf32>
    %70 = arith.mulf %65, %69 : vector<8x16x32xf32>
    %71 = arith.addf %64, %70 : vector<8x16x32xf32>
    %72 = vector.extract_strided_slice %21 {offsets = [0, 1, 0], sizes = [14, 16, 32], strides = [1, 1, 1]} : vector<14x22x32xf32> to vector<14x16x32xf32>
    %73 = vector.extract_strided_slice %72 {offsets = [0, 0, 0], sizes = [8, 16, 32], strides = [1, 1, 1]} : vector<14x16x32xf32> to vector<8x16x32xf32>
    %74 = vector.extract_strided_slice %22 {offsets = [0, 1, 0], sizes = [1, 1, 32], strides = [1, 1, 1]} : vector<7x7x32xf32> to vector<1x1x32xf32>
    %75 = vector.shape_cast %74 : vector<1x1x32xf32> to vector<32xf32>
    %76 = vector.shape_cast %75 : vector<32xf32> to vector<1x1x32xf32>
    %77 = vector.broadcast %76 : vector<1x1x32xf32> to vector<8x16x32xf32>
    %78 = arith.mulf %73, %77 : vector<8x16x32xf32>
    %79 = vector.extract_strided_slice %72 {offsets = [1, 0, 0], sizes = [8, 16, 32], strides = [1, 1, 1]} : vector<14x16x32xf32> to vector<8x16x32xf32>
    %80 = vector.extract_strided_slice %22 {offsets = [1, 1, 0], sizes = [1, 1, 32], strides = [1, 1, 1]} : vector<7x7x32xf32> to vector<1x1x32xf32>
    %81 = vector.shape_cast %80 : vector<1x1x32xf32> to vector<32xf32>
    %82 = vector.shape_cast %81 : vector<32xf32> to vector<1x1x32xf32>
    %83 = vector.broadcast %82 : vector<1x1x32xf32> to vector<8x16x32xf32>
    %84 = arith.mulf %79, %83 : vector<8x16x32xf32>
    %85 = arith.addf %78, %84 : vector<8x16x32xf32>
    %86 = vector.extract_strided_slice %72 {offsets = [2, 0, 0], sizes = [8, 16, 32], strides = [1, 1, 1]} : vector<14x16x32xf32> to vector<8x16x32xf32>
    %87 = vector.extract_strided_slice %22 {offsets = [2, 1, 0], sizes = [1, 1, 32], strides = [1, 1, 1]} : vector<7x7x32xf32> to vector<1x1x32xf32>
    %88 = vector.shape_cast %87 : vector<1x1x32xf32> to vector<32xf32>
    %89 = vector.shape_cast %88 : vector<32xf32> to vector<1x1x32xf32>
    %90 = vector.broadcast %89 : vector<1x1x32xf32> to vector<8x16x32xf32>
    %91 = arith.mulf %86, %90 : vector<8x16x32xf32>
    %92 = arith.addf %85, %91 : vector<8x16x32xf32>
    %93 = vector.extract_strided_slice %72 {offsets = [3, 0, 0], sizes = [8, 16, 32], strides = [1, 1, 1]} : vector<14x16x32xf32> to vector<8x16x32xf32>
    %94 = vector.extract_strided_slice %22 {offsets = [3, 1, 0], sizes = [1, 1, 32], strides = [1, 1, 1]} : vector<7x7x32xf32> to vector<1x1x32xf32>
    %95 = vector.shape_cast %94 : vector<1x1x32xf32> to vector<32xf32>
    %96 = vector.shape_cast %95 : vector<32xf32> to vector<1x1x32xf32>
    %97 = vector.broadcast %96 : vector<1x1x32xf32> to vector<8x16x32xf32>
    %98 = arith.mulf %93, %97 : vector<8x16x32xf32>
    %99 = arith.addf %92, %98 : vector<8x16x32xf32>
    %100 = vector.extract_strided_slice %72 {offsets = [4, 0, 0], sizes = [8, 16, 32], strides = [1, 1, 1]} : vector<14x16x32xf32> to vector<8x16x32xf32>
    %101 = vector.extract_strided_slice %22 {offsets = [4, 1, 0], sizes = [1, 1, 32], strides = [1, 1, 1]} : vector<7x7x32xf32> to vector<1x1x32xf32>
    %102 = vector.shape_cast %101 : vector<1x1x32xf32> to vector<32xf32>
    %103 = vector.shape_cast %102 : vector<32xf32> to vector<1x1x32xf32>
    %104 = vector.broadcast %103 : vector<1x1x32xf32> to vector<8x16x32xf32>
    %105 = arith.mulf %100, %104 : vector<8x16x32xf32>
    %106 = arith.addf %99, %105 : vector<8x16x32xf32>
    %107 = vector.extract_strided_slice %72 {offsets = [5, 0, 0], sizes = [8, 16, 32], strides = [1, 1, 1]} : vector<14x16x32xf32> to vector<8x16x32xf32>
    %108 = vector.extract_strided_slice %22 {offsets = [5, 1, 0], sizes = [1, 1, 32], strides = [1, 1, 1]} : vector<7x7x32xf32> to vector<1x1x32xf32>
    %109 = vector.shape_cast %108 : vector<1x1x32xf32> to vector<32xf32>
    %110 = vector.shape_cast %109 : vector<32xf32> to vector<1x1x32xf32>
    %111 = vector.broadcast %110 : vector<1x1x32xf32> to vector<8x16x32xf32>
    %112 = arith.mulf %107, %111 : vector<8x16x32xf32>
    %113 = arith.addf %106, %112 : vector<8x16x32xf32>
    %114 = vector.extract_strided_slice %72 {offsets = [6, 0, 0], sizes = [8, 16, 32], strides = [1, 1, 1]} : vector<14x16x32xf32> to vector<8x16x32xf32>
    %115 = vector.extract_strided_slice %22 {offsets = [6, 1, 0], sizes = [1, 1, 32], strides = [1, 1, 1]} : vector<7x7x32xf32> to vector<1x1x32xf32>
    %116 = vector.shape_cast %115 : vector<1x1x32xf32> to vector<32xf32>
    %117 = vector.shape_cast %116 : vector<32xf32> to vector<1x1x32xf32>
    %118 = vector.broadcast %117 : vector<1x1x32xf32> to vector<8x16x32xf32>
    %119 = arith.mulf %114, %118 : vector<8x16x32xf32>
    %120 = arith.addf %113, %119 : vector<8x16x32xf32>
    %121 = vector.extract_strided_slice %21 {offsets = [0, 2, 0], sizes = [14, 16, 32], strides = [1, 1, 1]} : vector<14x22x32xf32> to vector<14x16x32xf32>
    %122 = vector.extract_strided_slice %121 {offsets = [0, 0, 0], sizes = [8, 16, 32], strides = [1, 1, 1]} : vector<14x16x32xf32> to vector<8x16x32xf32>
    %123 = vector.extract_strided_slice %22 {offsets = [0, 2, 0], sizes = [1, 1, 32], strides = [1, 1, 1]} : vector<7x7x32xf32> to vector<1x1x32xf32>
    %124 = vector.shape_cast %123 : vector<1x1x32xf32> to vector<32xf32>
    %125 = vector.shape_cast %124 : vector<32xf32> to vector<1x1x32xf32>
    %126 = vector.broadcast %125 : vector<1x1x32xf32> to vector<8x16x32xf32>
    %127 = arith.mulf %122, %126 : vector<8x16x32xf32>
    %128 = vector.extract_strided_slice %121 {offsets = [1, 0, 0], sizes = [8, 16, 32], strides = [1, 1, 1]} : vector<14x16x32xf32> to vector<8x16x32xf32>
    %129 = vector.extract_strided_slice %22 {offsets = [1, 2, 0], sizes = [1, 1, 32], strides = [1, 1, 1]} : vector<7x7x32xf32> to vector<1x1x32xf32>
    %130 = vector.shape_cast %129 : vector<1x1x32xf32> to vector<32xf32>
    %131 = vector.shape_cast %130 : vector<32xf32> to vector<1x1x32xf32>
    %132 = vector.broadcast %131 : vector<1x1x32xf32> to vector<8x16x32xf32>
    %133 = arith.mulf %128, %132 : vector<8x16x32xf32>
    %134 = arith.addf %127, %133 : vector<8x16x32xf32>
    %135 = vector.extract_strided_slice %121 {offsets = [2, 0, 0], sizes = [8, 16, 32], strides = [1, 1, 1]} : vector<14x16x32xf32> to vector<8x16x32xf32>
    %136 = vector.extract_strided_slice %22 {offsets = [2, 2, 0], sizes = [1, 1, 32], strides = [1, 1, 1]} : vector<7x7x32xf32> to vector<1x1x32xf32>
    %137 = vector.shape_cast %136 : vector<1x1x32xf32> to vector<32xf32>
    %138 = vector.shape_cast %137 : vector<32xf32> to vector<1x1x32xf32>
    %139 = vector.broadcast %138 : vector<1x1x32xf32> to vector<8x16x32xf32>
    %140 = arith.mulf %135, %139 : vector<8x16x32xf32>
    %141 = arith.addf %134, %140 : vector<8x16x32xf32>
    %142 = vector.extract_strided_slice %121 {offsets = [3, 0, 0], sizes = [8, 16, 32], strides = [1, 1, 1]} : vector<14x16x32xf32> to vector<8x16x32xf32>
    %143 = vector.extract_strided_slice %22 {offsets = [3, 2, 0], sizes = [1, 1, 32], strides = [1, 1, 1]} : vector<7x7x32xf32> to vector<1x1x32xf32>
    %144 = vector.shape_cast %143 : vector<1x1x32xf32> to vector<32xf32>
    %145 = vector.shape_cast %144 : vector<32xf32> to vector<1x1x32xf32>
    %146 = vector.broadcast %145 : vector<1x1x32xf32> to vector<8x16x32xf32>
    %147 = arith.mulf %142, %146 : vector<8x16x32xf32>
    %148 = arith.addf %141, %147 : vector<8x16x32xf32>
    %149 = vector.extract_strided_slice %121 {offsets = [4, 0, 0], sizes = [8, 16, 32], strides = [1, 1, 1]} : vector<14x16x32xf32> to vector<8x16x32xf32>
    %150 = vector.extract_strided_slice %22 {offsets = [4, 2, 0], sizes = [1, 1, 32], strides = [1, 1, 1]} : vector<7x7x32xf32> to vector<1x1x32xf32>
    %151 = vector.shape_cast %150 : vector<1x1x32xf32> to vector<32xf32>
    %152 = vector.shape_cast %151 : vector<32xf32> to vector<1x1x32xf32>
    %153 = vector.broadcast %152 : vector<1x1x32xf32> to vector<8x16x32xf32>
    %154 = arith.mulf %149, %153 : vector<8x16x32xf32>
    %155 = arith.addf %148, %154 : vector<8x16x32xf32>
    %156 = vector.extract_strided_slice %121 {offsets = [5, 0, 0], sizes = [8, 16, 32], strides = [1, 1, 1]} : vector<14x16x32xf32> to vector<8x16x32xf32>
    %157 = vector.extract_strided_slice %22 {offsets = [5, 2, 0], sizes = [1, 1, 32], strides = [1, 1, 1]} : vector<7x7x32xf32> to vector<1x1x32xf32>
    %158 = vector.shape_cast %157 : vector<1x1x32xf32> to vector<32xf32>
    %159 = vector.shape_cast %158 : vector<32xf32> to vector<1x1x32xf32>
    %160 = vector.broadcast %159 : vector<1x1x32xf32> to vector<8x16x32xf32>
    %161 = arith.mulf %156, %160 : vector<8x16x32xf32>
    %162 = arith.addf %155, %161 : vector<8x16x32xf32>
    %163 = vector.extract_strided_slice %121 {offsets = [6, 0, 0], sizes = [8, 16, 32], strides = [1, 1, 1]} : vector<14x16x32xf32> to vector<8x16x32xf32>
    %164 = vector.extract_strided_slice %22 {offsets = [6, 2, 0], sizes = [1, 1, 32], strides = [1, 1, 1]} : vector<7x7x32xf32> to vector<1x1x32xf32>
    %165 = vector.shape_cast %164 : vector<1x1x32xf32> to vector<32xf32>
    %166 = vector.shape_cast %165 : vector<32xf32> to vector<1x1x32xf32>
    %167 = vector.broadcast %166 : vector<1x1x32xf32> to vector<8x16x32xf32>
    %168 = arith.mulf %163, %167 : vector<8x16x32xf32>
    %169 = arith.addf %162, %168 : vector<8x16x32xf32>
    %170 = vector.extract_strided_slice %21 {offsets = [0, 3, 0], sizes = [14, 16, 32], strides = [1, 1, 1]} : vector<14x22x32xf32> to vector<14x16x32xf32>
    %171 = vector.extract_strided_slice %170 {offsets = [0, 0, 0], sizes = [8, 16, 32], strides = [1, 1, 1]} : vector<14x16x32xf32> to vector<8x16x32xf32>
    %172 = vector.extract_strided_slice %22 {offsets = [0, 3, 0], sizes = [1, 1, 32], strides = [1, 1, 1]} : vector<7x7x32xf32> to vector<1x1x32xf32>
    %173 = vector.shape_cast %172 : vector<1x1x32xf32> to vector<32xf32>
    %174 = vector.shape_cast %173 : vector<32xf32> to vector<1x1x32xf32>
    %175 = vector.broadcast %174 : vector<1x1x32xf32> to vector<8x16x32xf32>
    %176 = arith.mulf %171, %175 : vector<8x16x32xf32>
    %177 = vector.extract_strided_slice %170 {offsets = [1, 0, 0], sizes = [8, 16, 32], strides = [1, 1, 1]} : vector<14x16x32xf32> to vector<8x16x32xf32>
    %178 = vector.extract_strided_slice %22 {offsets = [1, 3, 0], sizes = [1, 1, 32], strides = [1, 1, 1]} : vector<7x7x32xf32> to vector<1x1x32xf32>
    %179 = vector.shape_cast %178 : vector<1x1x32xf32> to vector<32xf32>
    %180 = vector.shape_cast %179 : vector<32xf32> to vector<1x1x32xf32>
    %181 = vector.broadcast %180 : vector<1x1x32xf32> to vector<8x16x32xf32>
    %182 = arith.mulf %177, %181 : vector<8x16x32xf32>
    %183 = arith.addf %176, %182 : vector<8x16x32xf32>
    %184 = vector.extract_strided_slice %170 {offsets = [2, 0, 0], sizes = [8, 16, 32], strides = [1, 1, 1]} : vector<14x16x32xf32> to vector<8x16x32xf32>
    %185 = vector.extract_strided_slice %22 {offsets = [2, 3, 0], sizes = [1, 1, 32], strides = [1, 1, 1]} : vector<7x7x32xf32> to vector<1x1x32xf32>
    %186 = vector.shape_cast %185 : vector<1x1x32xf32> to vector<32xf32>
    %187 = vector.shape_cast %186 : vector<32xf32> to vector<1x1x32xf32>
    %188 = vector.broadcast %187 : vector<1x1x32xf32> to vector<8x16x32xf32>
    %189 = arith.mulf %184, %188 : vector<8x16x32xf32>
    %190 = arith.addf %183, %189 : vector<8x16x32xf32>
    %191 = vector.extract_strided_slice %170 {offsets = [3, 0, 0], sizes = [8, 16, 32], strides = [1, 1, 1]} : vector<14x16x32xf32> to vector<8x16x32xf32>
    %192 = vector.extract_strided_slice %22 {offsets = [3, 3, 0], sizes = [1, 1, 32], strides = [1, 1, 1]} : vector<7x7x32xf32> to vector<1x1x32xf32>
    %193 = vector.shape_cast %192 : vector<1x1x32xf32> to vector<32xf32>
    %194 = vector.shape_cast %193 : vector<32xf32> to vector<1x1x32xf32>
    %195 = vector.broadcast %194 : vector<1x1x32xf32> to vector<8x16x32xf32>
    %196 = arith.mulf %191, %195 : vector<8x16x32xf32>
    %197 = arith.addf %190, %196 : vector<8x16x32xf32>
    %198 = vector.extract_strided_slice %170 {offsets = [4, 0, 0], sizes = [8, 16, 32], strides = [1, 1, 1]} : vector<14x16x32xf32> to vector<8x16x32xf32>
    %199 = vector.extract_strided_slice %22 {offsets = [4, 3, 0], sizes = [1, 1, 32], strides = [1, 1, 1]} : vector<7x7x32xf32> to vector<1x1x32xf32>
    %200 = vector.shape_cast %199 : vector<1x1x32xf32> to vector<32xf32>
    %201 = vector.shape_cast %200 : vector<32xf32> to vector<1x1x32xf32>
    %202 = vector.broadcast %201 : vector<1x1x32xf32> to vector<8x16x32xf32>
    %203 = arith.mulf %198, %202 : vector<8x16x32xf32>
    %204 = arith.addf %197, %203 : vector<8x16x32xf32>
    %205 = vector.extract_strided_slice %170 {offsets = [5, 0, 0], sizes = [8, 16, 32], strides = [1, 1, 1]} : vector<14x16x32xf32> to vector<8x16x32xf32>
    %206 = vector.extract_strided_slice %22 {offsets = [5, 3, 0], sizes = [1, 1, 32], strides = [1, 1, 1]} : vector<7x7x32xf32> to vector<1x1x32xf32>
    %207 = vector.shape_cast %206 : vector<1x1x32xf32> to vector<32xf32>
    %208 = vector.shape_cast %207 : vector<32xf32> to vector<1x1x32xf32>
    %209 = vector.broadcast %208 : vector<1x1x32xf32> to vector<8x16x32xf32>
    %210 = arith.mulf %205, %209 : vector<8x16x32xf32>
    %211 = arith.addf %204, %210 : vector<8x16x32xf32>
    %212 = vector.extract_strided_slice %170 {offsets = [6, 0, 0], sizes = [8, 16, 32], strides = [1, 1, 1]} : vector<14x16x32xf32> to vector<8x16x32xf32>
    %213 = vector.extract_strided_slice %22 {offsets = [6, 3, 0], sizes = [1, 1, 32], strides = [1, 1, 1]} : vector<7x7x32xf32> to vector<1x1x32xf32>
    %214 = vector.shape_cast %213 : vector<1x1x32xf32> to vector<32xf32>
    %215 = vector.shape_cast %214 : vector<32xf32> to vector<1x1x32xf32>
    %216 = vector.broadcast %215 : vector<1x1x32xf32> to vector<8x16x32xf32>
    %217 = arith.mulf %212, %216 : vector<8x16x32xf32>
    %218 = arith.addf %211, %217 : vector<8x16x32xf32>
    %219 = vector.extract_strided_slice %21 {offsets = [0, 4, 0], sizes = [14, 16, 32], strides = [1, 1, 1]} : vector<14x22x32xf32> to vector<14x16x32xf32>
    %220 = vector.extract_strided_slice %219 {offsets = [0, 0, 0], sizes = [8, 16, 32], strides = [1, 1, 1]} : vector<14x16x32xf32> to vector<8x16x32xf32>
    %221 = vector.extract_strided_slice %22 {offsets = [0, 4, 0], sizes = [1, 1, 32], strides = [1, 1, 1]} : vector<7x7x32xf32> to vector<1x1x32xf32>
    %222 = vector.shape_cast %221 : vector<1x1x32xf32> to vector<32xf32>
    %223 = vector.shape_cast %222 : vector<32xf32> to vector<1x1x32xf32>
    %224 = vector.broadcast %223 : vector<1x1x32xf32> to vector<8x16x32xf32>
    %225 = arith.mulf %220, %224 : vector<8x16x32xf32>
    %226 = vector.extract_strided_slice %219 {offsets = [1, 0, 0], sizes = [8, 16, 32], strides = [1, 1, 1]} : vector<14x16x32xf32> to vector<8x16x32xf32>
    %227 = vector.extract_strided_slice %22 {offsets = [1, 4, 0], sizes = [1, 1, 32], strides = [1, 1, 1]} : vector<7x7x32xf32> to vector<1x1x32xf32>
    %228 = vector.shape_cast %227 : vector<1x1x32xf32> to vector<32xf32>
    %229 = vector.shape_cast %228 : vector<32xf32> to vector<1x1x32xf32>
    %230 = vector.broadcast %229 : vector<1x1x32xf32> to vector<8x16x32xf32>
    %231 = arith.mulf %226, %230 : vector<8x16x32xf32>
    %232 = arith.addf %225, %231 : vector<8x16x32xf32>
    %233 = vector.extract_strided_slice %219 {offsets = [2, 0, 0], sizes = [8, 16, 32], strides = [1, 1, 1]} : vector<14x16x32xf32> to vector<8x16x32xf32>
    %234 = vector.extract_strided_slice %22 {offsets = [2, 4, 0], sizes = [1, 1, 32], strides = [1, 1, 1]} : vector<7x7x32xf32> to vector<1x1x32xf32>
    %235 = vector.shape_cast %234 : vector<1x1x32xf32> to vector<32xf32>
    %236 = vector.shape_cast %235 : vector<32xf32> to vector<1x1x32xf32>
    %237 = vector.broadcast %236 : vector<1x1x32xf32> to vector<8x16x32xf32>
    %238 = arith.mulf %233, %237 : vector<8x16x32xf32>
    %239 = arith.addf %232, %238 : vector<8x16x32xf32>
    %240 = vector.extract_strided_slice %219 {offsets = [3, 0, 0], sizes = [8, 16, 32], strides = [1, 1, 1]} : vector<14x16x32xf32> to vector<8x16x32xf32>
    %241 = vector.extract_strided_slice %22 {offsets = [3, 4, 0], sizes = [1, 1, 32], strides = [1, 1, 1]} : vector<7x7x32xf32> to vector<1x1x32xf32>
    %242 = vector.shape_cast %241 : vector<1x1x32xf32> to vector<32xf32>
    %243 = vector.shape_cast %242 : vector<32xf32> to vector<1x1x32xf32>
    %244 = vector.broadcast %243 : vector<1x1x32xf32> to vector<8x16x32xf32>
    %245 = arith.mulf %240, %244 : vector<8x16x32xf32>
    %246 = arith.addf %239, %245 : vector<8x16x32xf32>
    %247 = vector.extract_strided_slice %219 {offsets = [4, 0, 0], sizes = [8, 16, 32], strides = [1, 1, 1]} : vector<14x16x32xf32> to vector<8x16x32xf32>
    %248 = vector.extract_strided_slice %22 {offsets = [4, 4, 0], sizes = [1, 1, 32], strides = [1, 1, 1]} : vector<7x7x32xf32> to vector<1x1x32xf32>
    %249 = vector.shape_cast %248 : vector<1x1x32xf32> to vector<32xf32>
    %250 = vector.shape_cast %249 : vector<32xf32> to vector<1x1x32xf32>
    %251 = vector.broadcast %250 : vector<1x1x32xf32> to vector<8x16x32xf32>
    %252 = arith.mulf %247, %251 : vector<8x16x32xf32>
    %253 = arith.addf %246, %252 : vector<8x16x32xf32>
    %254 = vector.extract_strided_slice %219 {offsets = [5, 0, 0], sizes = [8, 16, 32], strides = [1, 1, 1]} : vector<14x16x32xf32> to vector<8x16x32xf32>
    %255 = vector.extract_strided_slice %22 {offsets = [5, 4, 0], sizes = [1, 1, 32], strides = [1, 1, 1]} : vector<7x7x32xf32> to vector<1x1x32xf32>
    %256 = vector.shape_cast %255 : vector<1x1x32xf32> to vector<32xf32>
    %257 = vector.shape_cast %256 : vector<32xf32> to vector<1x1x32xf32>
    %258 = vector.broadcast %257 : vector<1x1x32xf32> to vector<8x16x32xf32>
    %259 = arith.mulf %254, %258 : vector<8x16x32xf32>
    %260 = arith.addf %253, %259 : vector<8x16x32xf32>
    %261 = vector.extract_strided_slice %219 {offsets = [6, 0, 0], sizes = [8, 16, 32], strides = [1, 1, 1]} : vector<14x16x32xf32> to vector<8x16x32xf32>
    %262 = vector.extract_strided_slice %22 {offsets = [6, 4, 0], sizes = [1, 1, 32], strides = [1, 1, 1]} : vector<7x7x32xf32> to vector<1x1x32xf32>
    %263 = vector.shape_cast %262 : vector<1x1x32xf32> to vector<32xf32>
    %264 = vector.shape_cast %263 : vector<32xf32> to vector<1x1x32xf32>
    %265 = vector.broadcast %264 : vector<1x1x32xf32> to vector<8x16x32xf32>
    %266 = arith.mulf %261, %265 : vector<8x16x32xf32>
    %267 = arith.addf %260, %266 : vector<8x16x32xf32>
    %268 = vector.extract_strided_slice %21 {offsets = [0, 5, 0], sizes = [14, 16, 32], strides = [1, 1, 1]} : vector<14x22x32xf32> to vector<14x16x32xf32>
    %269 = vector.extract_strided_slice %268 {offsets = [0, 0, 0], sizes = [8, 16, 32], strides = [1, 1, 1]} : vector<14x16x32xf32> to vector<8x16x32xf32>
    %270 = vector.extract_strided_slice %22 {offsets = [0, 5, 0], sizes = [1, 1, 32], strides = [1, 1, 1]} : vector<7x7x32xf32> to vector<1x1x32xf32>
    %271 = vector.shape_cast %270 : vector<1x1x32xf32> to vector<32xf32>
    %272 = vector.shape_cast %271 : vector<32xf32> to vector<1x1x32xf32>
    %273 = vector.broadcast %272 : vector<1x1x32xf32> to vector<8x16x32xf32>
    %274 = arith.mulf %269, %273 : vector<8x16x32xf32>
    %275 = vector.extract_strided_slice %268 {offsets = [1, 0, 0], sizes = [8, 16, 32], strides = [1, 1, 1]} : vector<14x16x32xf32> to vector<8x16x32xf32>
    %276 = vector.extract_strided_slice %22 {offsets = [1, 5, 0], sizes = [1, 1, 32], strides = [1, 1, 1]} : vector<7x7x32xf32> to vector<1x1x32xf32>
    %277 = vector.shape_cast %276 : vector<1x1x32xf32> to vector<32xf32>
    %278 = vector.shape_cast %277 : vector<32xf32> to vector<1x1x32xf32>
    %279 = vector.broadcast %278 : vector<1x1x32xf32> to vector<8x16x32xf32>
    %280 = arith.mulf %275, %279 : vector<8x16x32xf32>
    %281 = arith.addf %274, %280 : vector<8x16x32xf32>
    %282 = vector.extract_strided_slice %268 {offsets = [2, 0, 0], sizes = [8, 16, 32], strides = [1, 1, 1]} : vector<14x16x32xf32> to vector<8x16x32xf32>
    %283 = vector.extract_strided_slice %22 {offsets = [2, 5, 0], sizes = [1, 1, 32], strides = [1, 1, 1]} : vector<7x7x32xf32> to vector<1x1x32xf32>
    %284 = vector.shape_cast %283 : vector<1x1x32xf32> to vector<32xf32>
    %285 = vector.shape_cast %284 : vector<32xf32> to vector<1x1x32xf32>
    %286 = vector.broadcast %285 : vector<1x1x32xf32> to vector<8x16x32xf32>
    %287 = arith.mulf %282, %286 : vector<8x16x32xf32>
    %288 = arith.addf %281, %287 : vector<8x16x32xf32>
    %289 = vector.extract_strided_slice %268 {offsets = [3, 0, 0], sizes = [8, 16, 32], strides = [1, 1, 1]} : vector<14x16x32xf32> to vector<8x16x32xf32>
    %290 = vector.extract_strided_slice %22 {offsets = [3, 5, 0], sizes = [1, 1, 32], strides = [1, 1, 1]} : vector<7x7x32xf32> to vector<1x1x32xf32>
    %291 = vector.shape_cast %290 : vector<1x1x32xf32> to vector<32xf32>
    %292 = vector.shape_cast %291 : vector<32xf32> to vector<1x1x32xf32>
    %293 = vector.broadcast %292 : vector<1x1x32xf32> to vector<8x16x32xf32>
    %294 = arith.mulf %289, %293 : vector<8x16x32xf32>
    %295 = arith.addf %288, %294 : vector<8x16x32xf32>
    %296 = vector.extract_strided_slice %268 {offsets = [4, 0, 0], sizes = [8, 16, 32], strides = [1, 1, 1]} : vector<14x16x32xf32> to vector<8x16x32xf32>
    %297 = vector.extract_strided_slice %22 {offsets = [4, 5, 0], sizes = [1, 1, 32], strides = [1, 1, 1]} : vector<7x7x32xf32> to vector<1x1x32xf32>
    %298 = vector.shape_cast %297 : vector<1x1x32xf32> to vector<32xf32>
    %299 = vector.shape_cast %298 : vector<32xf32> to vector<1x1x32xf32>
    %300 = vector.broadcast %299 : vector<1x1x32xf32> to vector<8x16x32xf32>
    %301 = arith.mulf %296, %300 : vector<8x16x32xf32>
    %302 = arith.addf %295, %301 : vector<8x16x32xf32>
    %303 = vector.extract_strided_slice %268 {offsets = [5, 0, 0], sizes = [8, 16, 32], strides = [1, 1, 1]} : vector<14x16x32xf32> to vector<8x16x32xf32>
    %304 = vector.extract_strided_slice %22 {offsets = [5, 5, 0], sizes = [1, 1, 32], strides = [1, 1, 1]} : vector<7x7x32xf32> to vector<1x1x32xf32>
    %305 = vector.shape_cast %304 : vector<1x1x32xf32> to vector<32xf32>
    %306 = vector.shape_cast %305 : vector<32xf32> to vector<1x1x32xf32>
    %307 = vector.broadcast %306 : vector<1x1x32xf32> to vector<8x16x32xf32>
    %308 = arith.mulf %303, %307 : vector<8x16x32xf32>
    %309 = arith.addf %302, %308 : vector<8x16x32xf32>
    %310 = vector.extract_strided_slice %268 {offsets = [6, 0, 0], sizes = [8, 16, 32], strides = [1, 1, 1]} : vector<14x16x32xf32> to vector<8x16x32xf32>
    %311 = vector.extract_strided_slice %22 {offsets = [6, 5, 0], sizes = [1, 1, 32], strides = [1, 1, 1]} : vector<7x7x32xf32> to vector<1x1x32xf32>
    %312 = vector.shape_cast %311 : vector<1x1x32xf32> to vector<32xf32>
    %313 = vector.shape_cast %312 : vector<32xf32> to vector<1x1x32xf32>
    %314 = vector.broadcast %313 : vector<1x1x32xf32> to vector<8x16x32xf32>
    %315 = arith.mulf %310, %314 : vector<8x16x32xf32>
    %316 = arith.addf %309, %315 : vector<8x16x32xf32>
    %317 = vector.extract_strided_slice %21 {offsets = [0, 6, 0], sizes = [14, 16, 32], strides = [1, 1, 1]} : vector<14x22x32xf32> to vector<14x16x32xf32>
    %318 = vector.extract_strided_slice %317 {offsets = [0, 0, 0], sizes = [8, 16, 32], strides = [1, 1, 1]} : vector<14x16x32xf32> to vector<8x16x32xf32>
    %319 = vector.extract_strided_slice %22 {offsets = [0, 6, 0], sizes = [1, 1, 32], strides = [1, 1, 1]} : vector<7x7x32xf32> to vector<1x1x32xf32>
    %320 = vector.shape_cast %319 : vector<1x1x32xf32> to vector<32xf32>
    %321 = vector.shape_cast %320 : vector<32xf32> to vector<1x1x32xf32>
    %322 = vector.broadcast %321 : vector<1x1x32xf32> to vector<8x16x32xf32>
    %323 = arith.mulf %318, %322 : vector<8x16x32xf32>
    %324 = vector.extract_strided_slice %317 {offsets = [1, 0, 0], sizes = [8, 16, 32], strides = [1, 1, 1]} : vector<14x16x32xf32> to vector<8x16x32xf32>
    %325 = vector.extract_strided_slice %22 {offsets = [1, 6, 0], sizes = [1, 1, 32], strides = [1, 1, 1]} : vector<7x7x32xf32> to vector<1x1x32xf32>
    %326 = vector.shape_cast %325 : vector<1x1x32xf32> to vector<32xf32>
    %327 = vector.shape_cast %326 : vector<32xf32> to vector<1x1x32xf32>
    %328 = vector.broadcast %327 : vector<1x1x32xf32> to vector<8x16x32xf32>
    %329 = arith.mulf %324, %328 : vector<8x16x32xf32>
    %330 = arith.addf %323, %329 : vector<8x16x32xf32>
    %331 = vector.extract_strided_slice %317 {offsets = [2, 0, 0], sizes = [8, 16, 32], strides = [1, 1, 1]} : vector<14x16x32xf32> to vector<8x16x32xf32>
    %332 = vector.extract_strided_slice %22 {offsets = [2, 6, 0], sizes = [1, 1, 32], strides = [1, 1, 1]} : vector<7x7x32xf32> to vector<1x1x32xf32>
    %333 = vector.shape_cast %332 : vector<1x1x32xf32> to vector<32xf32>
    %334 = vector.shape_cast %333 : vector<32xf32> to vector<1x1x32xf32>
    %335 = vector.broadcast %334 : vector<1x1x32xf32> to vector<8x16x32xf32>
    %336 = arith.mulf %331, %335 : vector<8x16x32xf32>
    %337 = arith.addf %330, %336 : vector<8x16x32xf32>
    %338 = vector.extract_strided_slice %317 {offsets = [3, 0, 0], sizes = [8, 16, 32], strides = [1, 1, 1]} : vector<14x16x32xf32> to vector<8x16x32xf32>
    %339 = vector.extract_strided_slice %22 {offsets = [3, 6, 0], sizes = [1, 1, 32], strides = [1, 1, 1]} : vector<7x7x32xf32> to vector<1x1x32xf32>
    %340 = vector.shape_cast %339 : vector<1x1x32xf32> to vector<32xf32>
    %341 = vector.shape_cast %340 : vector<32xf32> to vector<1x1x32xf32>
    %342 = vector.broadcast %341 : vector<1x1x32xf32> to vector<8x16x32xf32>
    %343 = arith.mulf %338, %342 : vector<8x16x32xf32>
    %344 = arith.addf %337, %343 : vector<8x16x32xf32>
    %345 = vector.extract_strided_slice %317 {offsets = [4, 0, 0], sizes = [8, 16, 32], strides = [1, 1, 1]} : vector<14x16x32xf32> to vector<8x16x32xf32>
    %346 = vector.extract_strided_slice %22 {offsets = [4, 6, 0], sizes = [1, 1, 32], strides = [1, 1, 1]} : vector<7x7x32xf32> to vector<1x1x32xf32>
    %347 = vector.shape_cast %346 : vector<1x1x32xf32> to vector<32xf32>
    %348 = vector.shape_cast %347 : vector<32xf32> to vector<1x1x32xf32>
    %349 = vector.broadcast %348 : vector<1x1x32xf32> to vector<8x16x32xf32>
    %350 = arith.mulf %345, %349 : vector<8x16x32xf32>
    %351 = arith.addf %344, %350 : vector<8x16x32xf32>
    %352 = vector.extract_strided_slice %317 {offsets = [5, 0, 0], sizes = [8, 16, 32], strides = [1, 1, 1]} : vector<14x16x32xf32> to vector<8x16x32xf32>
    %353 = vector.extract_strided_slice %22 {offsets = [5, 6, 0], sizes = [1, 1, 32], strides = [1, 1, 1]} : vector<7x7x32xf32> to vector<1x1x32xf32>
    %354 = vector.shape_cast %353 : vector<1x1x32xf32> to vector<32xf32>
    %355 = vector.shape_cast %354 : vector<32xf32> to vector<1x1x32xf32>
    %356 = vector.broadcast %355 : vector<1x1x32xf32> to vector<8x16x32xf32>
    %357 = arith.mulf %352, %356 : vector<8x16x32xf32>
    %358 = arith.addf %351, %357 : vector<8x16x32xf32>
    %359 = vector.extract_strided_slice %317 {offsets = [6, 0, 0], sizes = [8, 16, 32], strides = [1, 1, 1]} : vector<14x16x32xf32> to vector<8x16x32xf32>
    %360 = vector.extract_strided_slice %22 {offsets = [6, 6, 0], sizes = [1, 1, 32], strides = [1, 1, 1]} : vector<7x7x32xf32> to vector<1x1x32xf32>
    %361 = vector.shape_cast %360 : vector<1x1x32xf32> to vector<32xf32>
    %362 = vector.shape_cast %361 : vector<32xf32> to vector<1x1x32xf32>
    %363 = vector.broadcast %362 : vector<1x1x32xf32> to vector<8x16x32xf32>
    %364 = arith.mulf %359, %363 : vector<8x16x32xf32>
    %365 = arith.addf %358, %364 : vector<8x16x32xf32>
    %366 = arith.addf %71, %120 : vector<8x16x32xf32>
    %367 = arith.addf %169, %218 : vector<8x16x32xf32>
    %368 = arith.addf %267, %316 : vector<8x16x32xf32>
    %369 = arith.addf %366, %367 : vector<8x16x32xf32>
    %370 = arith.addf %368, %365 : vector<8x16x32xf32>
    %371 = arith.addf %369, %370 : vector<8x16x32xf32>
    %c0_22 = arith.constant 0 : index
    %c0_23 = arith.constant 0 : index
    %372 = vector.load %arg4[%c0_22, %c0_23] : memref<1x32xf32, #tpu.memory_space<vmem>>, vector<1x32xf32>
    %373 = vector.shape_cast %372 : vector<1x32xf32> to vector<32xf32>
    %374 = vector.shape_cast %373 : vector<32xf32> to vector<1x1x32xf32>
    %375 = vector.broadcast %374 : vector<1x1x32xf32> to vector<8x16x32xf32>
    %376 = arith.addf %371, %375 : vector<8x16x32xf32>
    %cst_24 = arith.constant dense<0.000000e+00> : vector<8x16xf32>
    %377 = vector.multi_reduction <add>, %376, %cst_24 [2] : vector<8x16x32xf32> to vector<8x16xf32>
    %378 = vector.shape_cast %377 : vector<8x16xf32> to vector<8x16x1xf32>
    %cst_25 = arith.constant 3.125000e-02 : f32
    %379 = vector.broadcast %cst_25 : f32 to vector<8x16x1xf32>
    %380 = arith.mulf %378, %379 : vector<8x16x1xf32>
    %381 = arith.mulf %376, %376 : vector<8x16x32xf32>
    %cst_26 = arith.constant dense<0.000000e+00> : vector<8x16xf32>
    %382 = vector.multi_reduction <add>, %381, %cst_26 [2] : vector<8x16x32xf32> to vector<8x16xf32>
    %383 = vector.shape_cast %382 : vector<8x16xf32> to vector<8x16x1xf32>
    %cst_27 = arith.constant 3.125000e-02 : f32
    %384 = vector.broadcast %cst_27 : f32 to vector<8x16x1xf32>
    %385 = arith.mulf %383, %384 : vector<8x16x1xf32>
    %386 = arith.mulf %380, %380 : vector<8x16x1xf32>
    %387 = arith.subf %385, %386 : vector<8x16x1xf32>
    %388 = vector.broadcast %380 : vector<8x16x1xf32> to vector<8x16x32xf32>
    %389 = arith.subf %376, %388 : vector<8x16x32xf32>
    %cst_28 = arith.constant 9.99999997E-7 : f32
    %390 = vector.broadcast %cst_28 : f32 to vector<8x16x1xf32>
    %391 = arith.addf %387, %390 : vector<8x16x1xf32>
    %392 = math.rsqrt %391 : vector<8x16x1xf32>
    %393 = vector.broadcast %392 : vector<8x16x1xf32> to vector<8x16x32xf32>
    %394 = arith.mulf %389, %393 : vector<8x16x32xf32>
    %c0_29 = arith.constant 0 : index
    %c0_30 = arith.constant 0 : index
    %395 = vector.load %arg5[%c0_29, %c0_30] : memref<1x32xf32, #tpu.memory_space<vmem>>, vector<1x32xf32>
    %396 = vector.shape_cast %395 : vector<1x32xf32> to vector<32xf32>
    %397 = vector.shape_cast %396 : vector<32xf32> to vector<1x1x32xf32>
    %398 = vector.broadcast %397 : vector<1x1x32xf32> to vector<8x16x32xf32>
    %399 = arith.mulf %394, %398 : vector<8x16x32xf32>
    %c0_31 = arith.constant 0 : index
    %c0_32 = arith.constant 0 : index
    %400 = vector.load %arg6[%c0_31, %c0_32] : memref<1x32xf32, #tpu.memory_space<vmem>>, vector<1x32xf32>
    %401 = vector.shape_cast %400 : vector<1x32xf32> to vector<32xf32>
    %402 = vector.shape_cast %401 : vector<32xf32> to vector<1x1x32xf32>
    %403 = vector.broadcast %402 : vector<1x1x32xf32> to vector<8x16x32xf32>
    %404 = arith.addf %399, %403 : vector<8x16x32xf32>
    %405 = vector.shape_cast %404 : vector<8x16x32xf32> to vector<128x32xf32>
    %406 = arith.truncf %405 : vector<128x32xf32> to vector<128x32xbf16>
    %c0_33 = arith.constant 0 : index
    %c0_34 = arith.constant 0 : index
    %407 = vector.load %arg7[%c0_33, %c0_34] : memref<32x128xbf16, #tpu.memory_space<vmem>>, vector<32x128xbf16>
    %cst_35 = arith.constant dense<0.000000e+00> : vector<128x128xf32>
    %408 = tpu.matmul %406, %407, %cst_35 {dimension_numbers = #tpu.dot_dimension_numbers<[1], [0], [0], [1], [0, 0, 1, 1], [], []>} : vector<128x32xbf16>, vector<32x128xbf16>, vector<128x128xf32> -> vector<128x128xf32>
    %c0_36 = arith.constant 0 : index
    %c0_37 = arith.constant 0 : index
    %409 = vector.load %arg8[%c0_36, %c0_37] : memref<1x128xf32, #tpu.memory_space<vmem>>, vector<1x128xf32>
    %410 = vector.shape_cast %409 : vector<1x128xf32> to vector<128xf32>
    %411 = vector.shape_cast %410 : vector<128xf32> to vector<1x128xf32>
    %412 = vector.broadcast %411 : vector<1x128xf32> to vector<128x128xf32>
    %413 = arith.addf %408, %412 : vector<128x128xf32>
    %cst_38 = arith.constant 5.000000e-01 : f32
    %414 = vector.broadcast %cst_38 : f32 to vector<128x128xf32>
    %415 = arith.mulf %414, %413 : vector<128x128xf32>
    %cst_39 = arith.constant 4.471500e-02 : f32
    %416 = vector.broadcast %cst_39 : f32 to vector<128x128xf32>
    %417 = arith.mulf %416, %413 : vector<128x128xf32>
    %418 = arith.mulf %417, %413 : vector<128x128xf32>
    %419 = arith.mulf %418, %413 : vector<128x128xf32>
    %420 = arith.addf %413, %419 : vector<128x128xf32>
    %cst_40 = arith.constant 0.797884583 : f32
    %421 = vector.broadcast %cst_40 : f32 to vector<128x128xf32>
    %422 = arith.mulf %421, %420 : vector<128x128xf32>
    %423 = math.tanh %422 : vector<128x128xf32>
    %cst_41 = arith.constant 1.000000e+00 : f32
    %424 = vector.broadcast %cst_41 : f32 to vector<128x128xf32>
    %425 = arith.addf %424, %423 : vector<128x128xf32>
    %426 = arith.mulf %415, %425 : vector<128x128xf32>
    %427 = arith.truncf %426 : vector<128x128xf32> to vector<128x128xbf16>
    %c0_42 = arith.constant 0 : index
    %c0_43 = arith.constant 0 : index
    %428 = vector.load %arg9[%c0_42, %c0_43] : memref<128x32xbf16, #tpu.memory_space<vmem>>, vector<128x32xbf16>
    %cst_44 = arith.constant dense<0.000000e+00> : vector<128x32xf32>
    %429 = tpu.matmul %427, %428, %cst_44 {dimension_numbers = #tpu.dot_dimension_numbers<[1], [0], [0], [1], [0, 0, 1, 1], [], []>} : vector<128x128xbf16>, vector<128x32xbf16>, vector<128x32xf32> -> vector<128x32xf32>
    %c0_45 = arith.constant 0 : index
    %c0_46 = arith.constant 0 : index
    %430 = vector.load %arg10[%c0_45, %c0_46] : memref<1x32xf32, #tpu.memory_space<vmem>>, vector<1x32xf32>
    %431 = vector.shape_cast %430 : vector<1x32xf32> to vector<32xf32>
    %432 = vector.shape_cast %431 : vector<32xf32> to vector<1x32xf32>
    %433 = vector.broadcast %432 : vector<1x32xf32> to vector<128x32xf32>
    %434 = arith.addf %429, %433 : vector<128x32xf32>
    %c0_47 = arith.constant 0 : index
    %c0_48 = arith.constant 0 : index
    %435 = vector.load %arg11[%c0_47, %c0_48] : memref<1x32xf32, #tpu.memory_space<vmem>>, vector<1x32xf32>
    %436 = vector.shape_cast %435 : vector<1x32xf32> to vector<32xf32>
    %437 = vector.shape_cast %436 : vector<32xf32> to vector<1x32xf32>
    %438 = vector.broadcast %437 : vector<1x32xf32> to vector<128x32xf32>
    %439 = arith.mulf %434, %438 : vector<128x32xf32>
    %440 = vector.shape_cast %439 : vector<128x32xf32> to vector<8x16x32xf32>
    %441 = arith.addf %7, %440 : vector<8x16x32xf32>
    %c0_49 = arith.constant 0 : index
    %c0_50 = arith.constant 0 : index
    %c0_51 = arith.constant 0 : index
    %c0_52 = arith.constant 0 : index
    %442 = vector.load %arg12[%c0_49, %c0_50, %c0_51, %c0_52] : memref<1x8x16x32xf32, #tpu.memory_space<vmem>>, vector<1x8x16x32xf32>
    %443 = vector.shape_cast %442 : vector<1x8x16x32xf32> to vector<8x16x32xf32>
    %444 = vector.shape_cast %441 : vector<8x16x32xf32> to vector<1x8x16x32xf32>
    tpu.vector_store %arg12[%c0_49, %c0_50, %c0_51, %c0_52], %444 {strides = array<i32>} : memref<1x8x16x32xf32, #tpu.memory_space<vmem>>, vector<1x8x16x32xf32>,
    return
  }
  func.func @transform_0(%arg0: i32, %arg1: i32) -> (i32, i32, i32, i32) {
    %c0_i32 = arith.constant 0 : i32
    %c0_i32_0 = arith.constant 0 : i32
    %c0_i32_1 = arith.constant 0 : i32
    %c0_i32_2 = arith.constant 0 : i32
    return %arg0, %c0_i32, %c0_i32_0, %c0_i32_1 : i32, i32, i32, i32
  }
  func.func @transform_1(%arg0: i32, %arg1: i32) -> (i32, i32, i32) {
    %c0_i32 = arith.constant 0 : i32
    %c0_i32_0 = arith.constant 0 : i32
    %c0_i32_1 = arith.constant 0 : i32
    %c0_i32_2 = arith.constant 0 : i32
    return %c0_i32, %c0_i32_0, %c0_i32_1 : i32, i32, i32
  }
  func.func @transform_2(%arg0: i32, %arg1: i32) -> (i32, i32) {
    %c0_i32 = arith.constant 0 : i32
    %c0_i32_0 = arith.constant 0 : i32
    %c0_i32_1 = arith.constant 0 : i32
    return %c0_i32, %c0_i32_0 : i32, i32
  }
  func.func @transform_3(%arg0: i32, %arg1: i32) -> (i32, i32) {
    %c0_i32 = arith.constant 0 : i32
    %c0_i32_0 = arith.constant 0 : i32
    %c0_i32_1 = arith.constant 0 : i32
    return %c0_i32, %c0_i32_0 : i32, i32
  }
  func.func @transform_4(%arg0: i32, %arg1: i32) -> (i32, i32) {
    %c0_i32 = arith.constant 0 : i32
    %c0_i32_0 = arith.constant 0 : i32
    %c0_i32_1 = arith.constant 0 : i32
    return %c0_i32, %c0_i32_0 : i32, i32
  }
  func.func @transform_5(%arg0: i32, %arg1: i32) -> (i32, i32) {
    %c0_i32 = arith.constant 0 : i32
    %c0_i32_0 = arith.constant 0 : i32
    %c0_i32_1 = arith.constant 0 : i32
    return %c0_i32, %c0_i32_0 : i32, i32
  }
  func.func @transform_6(%arg0: i32, %arg1: i32) -> (i32, i32) {
    %c0_i32 = arith.constant 0 : i32
    %c0_i32_0 = arith.constant 0 : i32
    %c0_i32_1 = arith.constant 0 : i32
    return %c0_i32, %c0_i32_0 : i32, i32
  }
  func.func @transform_7(%arg0: i32, %arg1: i32) -> (i32, i32) {
    %c0_i32 = arith.constant 0 : i32
    %c0_i32_0 = arith.constant 0 : i32
    %c0_i32_1 = arith.constant 0 : i32
    return %c0_i32, %c0_i32_0 : i32, i32
  }
  func.func @transform_8(%arg0: i32, %arg1: i32) -> (i32, i32) {
    %c0_i32 = arith.constant 0 : i32
    %c0_i32_0 = arith.constant 0 : i32
    %c0_i32_1 = arith.constant 0 : i32
    return %c0_i32, %c0_i32_0 : i32, i32
  }
  func.func @transform_9(%arg0: i32, %arg1: i32) -> (i32, i32) {
    %c0_i32 = arith.constant 0 : i32
    %c0_i32_0 = arith.constant 0 : i32
    %c0_i32_1 = arith.constant 0 : i32
    return %c0_i32, %c0_i32_0 : i32, i32
  }
  func.func @transform_10(%arg0: i32, %arg1: i32) -> (i32, i32, i32, i32) {
    %c0_i32 = arith.constant 0 : i32
    %c0_i32_0 = arith.constant 0 : i32
    %c0_i32_1 = arith.constant 0 : i32
    return %arg0, %arg1, %c0_i32, %c0_i32_0 : i32, i32, i32, i32
  }
}

</mosaic_0001>

<llo_original>
// kernel: tpu_custom_call.1
$region0: #{tpu_custom_call.1}
  #allocation0 [shape = 'u32[]', space=smem, size = 0x4, offset = 0x4, fixed_abs, tag = 'smem constant byte address 0x4 - core index']
  #allocation1 [shape = 'u32[72,128]{1,0:T(1,128)}', space=vmem, size = 0x9000, scoped, tag = 'internal scratch']
  #allocation2 [shape = 'f32[14,22,32]{2,1,0:T(8,128)}', space=vmem, size = 0x2a000, scoped, tag = 'scratch operand']
  %s0 = inlined_call_operand.hbm [shape: f32[2,16,16,32], index: 0, kind: input, shape index: {}]
  %s1 = inlined_call_operand.vmem [shape: f32[7,7,32], index: 1, kind: input, shape index: {}]
  %s2 = inlined_call_operand.vmem [shape: f32[1,32], index: 2, kind: input, shape index: {}]
  %s3 = inlined_call_operand.vmem [shape: f32[1,32], index: 3, kind: input, shape index: {}]
  %s4 = inlined_call_operand.vmem [shape: f32[1,32], index: 4, kind: input, shape index: {}]
  %s5 = inlined_call_operand.vmem [shape: bf16[32,128], index: 5, kind: input, shape index: {}]
  %s6 = inlined_call_operand.vmem [shape: f32[1,128], index: 6, kind: input, shape index: {}]
  %s7 = inlined_call_operand.vmem [shape: bf16[128,32], index: 7, kind: input, shape index: {}]
  %s8 = inlined_call_operand.vmem [shape: f32[1,32], index: 8, kind: input, shape index: {}]
  %s9 = inlined_call_operand.vmem [shape: f32[1,32], index: 9, kind: input, shape index: {}]
  %s10 = inlined_call_operand.hbm [shape: f32[2,16,16,32], index: 10, kind: output, shape index: {}]
  %s11 = sld [smem:[#allocation0]]
  $region93: #{tpu_custom_call.1} parent=0
    _
  %s13 = ssub.s32 1, %s11
  %s14 = scalar_select 0, %s13, %s11
  $region1: #{tpu_custom_call.1} parent=0
    #allocation3 [shape = 'u8[262144]{0}', space=vmem, size = 0x40000, scoped, tag = 'input window, operand 0']
    #allocation4 [shape = 's32[2]{0}', space=sflag, size = 0x8, scoped, tag = 'scoped memory for tpu_custom_call.1']
    #allocation5 [shape = 's32[2]{0}', space=sflag, size = 0x8, scoped, tag = 'scoped memory for tpu_custom_call.1']
    #allocation6 [shape = 'u8[131072]{0}', space=vmem, size = 0x20000, scoped, tag = 'output window, operand 0']
    %15 = vsyncpa [#allocation4], 0
    %s16 = scalar_lea.sflag [#allocation4], 1
    %17 = vsyncpa %s16, 0
    %18 = vsyncpa [#allocation5], 0
    %s19 = scalar_lea.sflag [#allocation5], 1
    %20 = vsyncpa %s19, 0
    loop: start=0, step=1, limit=6
    $region2: #{tpu_custom_call.1} parent=1 // loop_pre_header
      _
    $region3: #{tpu_custom_call.1} parent=1 // loop_header
      %s22 = sphi 0, %s26
      %p23 = scmp.ge.s32.totalorder %s22, 6
      %s29 = sphi 0, %s41
      %s30 = sphi 0, %s37
      %s31 = sphi 0, %s29
      %s32 = sphi 0, %s30
      %s33 = sphi 0, %s31
      %s34 = sphi 0, %s32
      %s44 = sphi 0, %s46
      %s47 = sphi 0, %s44
      %s48 = sphi 0, %s47
      %s64 = sphi 0, %s48
      %s68 = sphi 0, %s68
      %s70 = sphi 0, %s68
      %s71 = sphi 0, %s70
      %s85 = sphi 0, %s71
      %s89 = sphi 0, %s89
      %s91 = sphi 0, %s89
      %s92 = sphi 0, %s91
      %s106 = sphi 0, %s92
      %s110 = sphi 0, %s110
      %s112 = sphi 0, %s110
      %s113 = sphi 0, %s112
      %s127 = sphi 0, %s113
      %s131 = sphi 0, %s131
      %s133 = sphi 0, %s131
      %s134 = sphi 0, %s133
      %s148 = sphi 0, %s134
      %s152 = sphi 0, %s152
      %s154 = sphi 0, %s152
      %s155 = sphi 0, %s154
      %s169 = sphi 0, %s155
      %s173 = sphi 0, %s173
      %s175 = sphi 0, %s173
      %s176 = sphi 0, %s175
      %s190 = sphi 0, %s176
      %s194 = sphi 0, %s194
      %s196 = sphi 0, %s194
      %s197 = sphi 0, %s196
      %s211 = sphi 0, %s197
      %s215 = sphi 0, %s215
      %s217 = sphi 0, %s215
      %s218 = sphi 0, %s217
      %s232 = sphi 0, %s218
      %s236 = sphi 0, %s236
      %s238 = sphi 0, %s236
      %s239 = sphi 0, %s238
      %s253 = sphi 0, %s239
      %s261 = sphi 0, %s263
      %s264 = sphi 0, %s261
      %s265 = sphi 0, %s264
      %s281 = sphi 0, %s265
    $region4: #{tpu_custom_call.1} parent=1 // loop_header_branch
      %25 = sbr.rel (%p23) target = $region8
    $region5: #{tpu_custom_call.1} parent=1 // loop_body
      %s27 = ssub.s32 %s22, 1
      %s28 = ssub.s32 %s22, 2
      %s35 = sadd.s32 1, %s30
      %p36 = scmp.ge.s32.totalorder %s35, 2
      %s37 = scalar_select %p36, 0, %s35
      %s38 = sadd.s32 1, %s29
      %s39 = scalar_select %p36, %s38, %s29
      %p40 = scmp.ge.s32.totalorder %s39, 2
      %s41 = scalar_select %p40, 0, %s39
      %s42 = ssub.s32 %s29, %s41
      %p43 = scmp.eq.s32.totalorder %s42, 0
      %s45 = sadd.s32 %s44, 1
      %s46 = scalar_select %p43, %s44, %s45
      %p49 = pneg %p43
      %p50 = scmp.eq.s32.totalorder %s22, 3
      %p51 = por %p49, %p50
      %p52 = scmp.ne.s32.totalorder %s44, %s47
      %p53 = scmp.eq.s32.totalorder %s22, 0
      %p54 = por %p52, %p53
      %p55 = scmp.ne.s32.totalorder %s44, %s47
      %p56 = scmp.eq.s32.totalorder %s27, 3
      %p57 = por %p55, %p56
      %p58 = scmp.ne.s32.totalorder %s47, %s48
      %p59 = scmp.eq.s32.totalorder %s27, 0
      %p60 = por %p58, %p59
      %p61 = scmp.ne.s32.totalorder %s47, %s48
      %p62 = scmp.eq.s32.totalorder %s28, 3
      %p63 = por %p61, %p62
      %p65 = scmp.ne.s32.totalorder %s48, %s64
      %p66 = scmp.eq.s32.totalorder %s28, 0
      %p67 = por %p65, %p66
      %s69 = sadd.s32 %s68, 1
      %p72 = scmp.eq.s32.totalorder %s22, 3
      %p73 = scmp.ne.s32.totalorder %s68, %s70
      %p74 = scmp.eq.s32.totalorder %s22, 0
      %p75 = por %p73, %p74
      %p76 = scmp.ne.s32.totalorder %s68, %s70
      %p77 = scmp.eq.s32.totalorder %s27, 3
      %p78 = por %p76, %p77
      %p79 = scmp.ne.s32.totalorder %s70, %s71
      %p80 = scmp.eq.s32.totalorder %s27, 0
      %p81 = por %p79, %p80
      %p82 = scmp.ne.s32.totalorder %s70, %s71
      %p83 = scmp.eq.s32.totalorder %s28, 3
      %p84 = por %p82, %p83
      %p86 = scmp.ne.s32.totalorder %s71, %s85
      %p87 = scmp.eq.s32.totalorder %s28, 0
      %p88 = por %p86, %p87
      %s90 = sadd.s32 %s89, 1
      %p93 = scmp.eq.s32.totalorder %s22, 3
      %p94 = scmp.ne.s32.totalorder %s89, %s91
      %p95 = scmp.eq.s32.totalorder %s22, 0
      %p96 = por %p94, %p95
      %p97 = scmp.ne.s32.totalorder %s89, %s91
      %p98 = scmp.eq.s32.totalorder %s27, 3
      %p99 = por %p97, %p98
      %p100 = scmp.ne.s32.totalorder %s91, %s92
      %p101 = scmp.eq.s32.totalorder %s27, 0
      %p102 = por %p100, %p101
      %p103 = scmp.ne.s32.totalorder %s91, %s92
      %p104 = scmp.eq.s32.totalorder %s28, 3
      %p105 = por %p103, %p104
      %p107 = scmp.ne.s32.totalorder %s92, %s106
      %p108 = scmp.eq.s32.totalorder %s28, 0
      %p109 = por %p107, %p108
      %s111 = sadd.s32 %s110, 1
      %p114 = scmp.eq.s32.totalorder %s22, 3
      %p115 = scmp.ne.s32.totalorder %s110, %s112
      %p116 = scmp.eq.s32.totalorder %s22, 0
      %p117 = por %p115, %p116
      %p118 = scmp.ne.s32.totalorder %s110, %s112
      %p119 = scmp.eq.s32.totalorder %s27, 3
      %p120 = por %p118, %p119
      %p121 = scmp.ne.s32.totalorder %s112, %s113
      %p122 = scmp.eq.s32.totalorder %s27, 0
      %p123 = por %p121, %p122
      %p124 = scmp.ne.s32.totalorder %s112, %s113
      %p125 = scmp.eq.s32.totalorder %s28, 3
      %p126 = por %p124, %p125
      %p128 = scmp.ne.s32.totalorder %s113, %s127
      %p129 = scmp.eq.s32.totalorder %s28, 0
      %p130 = por %p128, %p129
      %s132 = sadd.s32 %s131, 1
      %p135 = scmp.eq.s32.totalorder %s22, 3
      %p136 = scmp.ne.s32.totalorder %s131, %s133
      %p137 = scmp.eq.s32.totalorder %s22, 0
      %p138 = por %p136, %p137
      %p139 = scmp.ne.s32.totalorder %s131, %s133
      %p140 = scmp.eq.s32.totalorder %s27, 3
      %p141 = por %p139, %p140
      %p142 = scmp.ne.s32.totalorder %s133, %s134
      %p143 = scmp.eq.s32.totalorder %s27, 0
      %p144 = por %p142, %p143
      %p145 = scmp.ne.s32.totalorder %s133, %s134
      %p146 = scmp.eq.s32.totalorder %s28, 3
      %p147 = por %p145, %p146
      %p149 = scmp.ne.s32.totalorder %s134, %s148
      %p150 = scmp.eq.s32.totalorder %s28, 0
      %p151 = por %p149, %p150
      %s153 = sadd.s32 %s152, 1
      %p156 = scmp.eq.s32.totalorder %s22, 3
      %p157 = scmp.ne.s32.totalorder %s152, %s154
      %p158 = scmp.eq.s32.totalorder %s22, 0
      %p159 = por %p157, %p158
      %p160 = scmp.ne.s32.totalorder %s152, %s154
      %p161 = scmp.eq.s32.totalorder %s27, 3
      %p162 = por %p160, %p161
      %p163 = scmp.ne.s32.totalorder %s154, %s155
      %p164 = scmp.eq.s32.totalorder %s27, 0
      %p165 = por %p163, %p164
      %p166 = scmp.ne.s32.totalorder %s154, %s155
      %p167 = scmp.eq.s32.totalorder %s28, 3
      %p168 = por %p166, %p167
      %p170 = scmp.ne.s32.totalorder %s155, %s169
      %p171 = scmp.eq.s32.totalorder %s28, 0
      %p172 = por %p170, %p171
      %s174 = sadd.s32 %s173, 1
      %p177 = scmp.eq.s32.totalorder %s22, 3
      %p178 = scmp.ne.s32.totalorder %s173, %s175
      %p179 = scmp.eq.s32.totalorder %s22, 0
      %p180 = por %p178, %p179
      %p181 = scmp.ne.s32.totalorder %s173, %s175
      %p182 = scmp.eq.s32.totalorder %s27, 3
      %p183 = por %p181, %p182
      %p184 = scmp.ne.s32.totalorder %s175, %s176
      %p185 = scmp.eq.s32.totalorder %s27, 0
      %p186 = por %p184, %p185
      %p187 = scmp.ne.s32.totalorder %s175, %s176
      %p188 = scmp.eq.s32.totalorder %s28, 3
      %p189 = por %p187, %p188
      %p191 = scmp.ne.s32.totalorder %s176, %s190
      %p192 = scmp.eq.s32.totalorder %s28, 0
      %p193 = por %p191, %p192
      %s195 = sadd.s32 %s194, 1
      %p198 = scmp.eq.s32.totalorder %s22, 3
      %p199 = scmp.ne.s32.totalorder %s194, %s196
      %p200 = scmp.eq.s32.totalorder %s22, 0
      %p201 = por %p199, %p200
      %p202 = scmp.ne.s32.totalorder %s194, %s196
      %p203 = scmp.eq.s32.totalorder %s27, 3
      %p204 = por %p202, %p203
      %p205 = scmp.ne.s32.totalorder %s196, %s197
      %p206 = scmp.eq.s32.totalorder %s27, 0
      %p207 = por %p205, %p206
      %p208 = scmp.ne.s32.totalorder %s196, %s197
      %p209 = scmp.eq.s32.totalorder %s28, 3
      %p210 = por %p208, %p209
      %p212 = scmp.ne.s32.totalorder %s197, %s211
      %p213 = scmp.eq.s32.totalorder %s28, 0
      %p214 = por %p212, %p213
      %s216 = sadd.s32 %s215, 1
      %p219 = scmp.eq.s32.totalorder %s22, 3
      %p220 = scmp.ne.s32.totalorder %s215, %s217
      %p221 = scmp.eq.s32.totalorder %s22, 0
      %p222 = por %p220, %p221
      %p223 = scmp.ne.s32.totalorder %s215, %s217
      %p224 = scmp.eq.s32.totalorder %s27, 3
      %p225 = por %p223, %p224
      %p226 = scmp.ne.s32.totalorder %s217, %s218
      %p227 = scmp.eq.s32.totalorder %s27, 0
      %p228 = por %p226, %p227
      %p229 = scmp.ne.s32.totalorder %s217, %s218
      %p230 = scmp.eq.s32.totalorder %s28, 3
      %p231 = por %p229, %p230
      %p233 = scmp.ne.s32.totalorder %s218, %s232
      %p234 = scmp.eq.s32.totalorder %s28, 0
      %p235 = por %p233, %p234
      %s237 = sadd.s32 %s236, 1
      %p240 = scmp.eq.s32.totalorder %s22, 3
      %p241 = scmp.ne.s32.totalorder %s236, %s238
      %p242 = scmp.eq.s32.totalorder %s22, 0
      %p243 = por %p241, %p242
      %p244 = scmp.ne.s32.totalorder %s236, %s238
      %p245 = scmp.eq.s32.totalorder %s27, 3
      %p246 = por %p244, %p245
      %p247 = scmp.ne.s32.totalorder %s238, %s239
      %p248 = scmp.eq.s32.totalorder %s27, 0
      %p249 = por %p247, %p248
      %p250 = scmp.ne.s32.totalorder %s238, %s239
      %p251 = scmp.eq.s32.totalorder %s28, 3
      %p252 = por %p250, %p251
      %p254 = scmp.ne.s32.totalorder %s239, %s253
      %p255 = scmp.eq.s32.totalorder %s28, 0
      %p256 = por %p254, %p255
      %s257 = ssub.s32 %s29, %s41
      %s258 = ssub.s32 %s30, %s37
      %s259 = sor.u32 %s257, %s258
      %p260 = scmp.eq.s32.totalorder %s259, 0
      %s262 = sadd.s32 %s261, 1
      %s263 = scalar_select %p260, %s261, %s262
      %p266 = pneg %p260
      %p267 = scmp.eq.s32.totalorder %s22, 3
      %p268 = por %p266, %p267
      %p269 = scmp.ne.s32.totalorder %s261, %s264
      %p270 = scmp.eq.s32.totalorder %s22, 0
      %p271 = por %p269, %p270
      %p272 = scmp.ne.s32.totalorder %s261, %s264
      %p273 = scmp.eq.s32.totalorder %s27, 3
      %p274 = por %p272, %p273
      %p275 = scmp.ne.s32.totalorder %s264, %s265
      %p276 = scmp.eq.s32.totalorder %s27, 0
      %p277 = por %p275, %p276
      %p278 = scmp.ne.s32.totalorder %s264, %s265
      %p279 = scmp.eq.s32.totalorder %s28, 3
      %p280 = por %p278, %p279
      %p282 = scmp.ne.s32.totalorder %s265, %s281
      %p283 = scmp.eq.s32.totalorder %s28, 0
      %p284 = por %p282, %p283
      %p285 = scmp.le.s32.totalorder 1, %s22
      %p286 = scmp.lt.s32.totalorder %s22, 5
      %p287 = pnand %p285, %p286
      %p288 = pneg %p287
      // Predicated region
      $region9: #{tpu_custom_call.1} parent=5 // pred_check
        _
      $region10: #{tpu_custom_call.1} parent=5 // pred_check_branch
        %290 = sbr.rel (%p287) target = $region12
      $region11: #{tpu_custom_call.1} parent=5 // pred_region
        %s291 = ssub.s32 %s22, 1
        // Predicated region
        $region13: #{tpu_custom_call.1} parent=11 // pred_check
          %p292 = pneg %p81
        $region14: #{tpu_custom_call.1} parent=11 // pred_check_branch
          %294 = sbr.rel (%p292) target = $region16
        $region15: #{tpu_custom_call.1} parent=11 // pred_region
          _
        $region16: #{tpu_custom_call.1} parent=11 // pred_fallthru
          _
        // Predicated region
        $region17: #{tpu_custom_call.1} parent=11 // pred_check
          %p295 = pneg %p102
        $region18: #{tpu_custom_call.1} parent=11 // pred_check_branch
          %297 = sbr.rel (%p295) target = $region20
        $region19: #{tpu_custom_call.1} parent=11 // pred_region
          _
        $region20: #{tpu_custom_call.1} parent=11 // pred_fallthru
          _
        // Predicated region
        $region21: #{tpu_custom_call.1} parent=11 // pred_check
          %p298 = pneg %p123
        $region22: #{tpu_custom_call.1} parent=11 // pred_check_branch
          %300 = sbr.rel (%p298) target = $region24
        $region23: #{tpu_custom_call.1} parent=11 // pred_region
          _
        $region24: #{tpu_custom_call.1} parent=11 // pred_fallthru
          _
        // Predicated region
        $region25: #{tpu_custom_call.1} parent=11 // pred_check
          %p301 = pneg %p144
        $region26: #{tpu_custom_call.1} parent=11 // pred_check_branch
          %303 = sbr.rel (%p301) target = $region28
        $region27: #{tpu_custom_call.1} parent=11 // pred_region
          _
        $region28: #{tpu_custom_call.1} parent=11 // pred_fallthru
          _
        // Predicated region
        $region29: #{tpu_custom_call.1} parent=11 // pred_check
          %p304 = pneg %p165
        $region30: #{tpu_custom_call.1} parent=11 // pred_check_branch
          %306 = sbr.rel (%p304) target = $region32
        $region31: #{tpu_custom_call.1} parent=11 // pred_region
          _
        $region32: #{tpu_custom_call.1} parent=11 // pred_fallthru
          _
        // Predicated region
        $region33: #{tpu_custom_call.1} parent=11 // pred_check
          %p307 = pneg %p186
        $region34: #{tpu_custom_call.1} parent=11 // pred_check_branch
          %309 = sbr.rel (%p307) target = $region36
        $region35: #{tpu_custom_call.1} parent=11 // pred_region
          _
        $region36: #{tpu_custom_call.1} parent=11 // pred_fallthru
          _
        // Predicated region
        $region37: #{tpu_custom_call.1} parent=11 // pred_check
          %p310 = pneg %p207
        $region38: #{tpu_custom_call.1} parent=11 // pred_check_branch
          %312 = sbr.rel (%p310) target = $region40
        $region39: #{tpu_custom_call.1} parent=11 // pred_region
          _
        $region40: #{tpu_custom_call.1} parent=11 // pred_fallthru
          _
        // Predicated region
        $region41: #{tpu_custom_call.1} parent=11 // pred_check
          %p313 = pneg %p228
        $region42: #{tpu_custom_call.1} parent=11 // pred_check_branch
          %315 = sbr.rel (%p313) target = $region44
        $region43: #{tpu_custom_call.1} parent=11 // pred_region
          _
        $region44: #{tpu_custom_call.1} parent=11 // pred_fallthru
          _
        // Predicated region
        $region45: #{tpu_custom_call.1} parent=11 // pred_check
          %p316 = pneg %p249
        $region46: #{tpu_custom_call.1} parent=11 // pred_check_branch
          %318 = sbr.rel (%p316) target = $region48
        $region47: #{tpu_custom_call.1} parent=11 // pred_region
          _
        $region48: #{tpu_custom_call.1} parent=11 // pred_fallthru
          _
      $region12: #{tpu_custom_call.1} parent=5 // pred_fallthru
        _
      %p319 = scmp.lt.s32.totalorder %s22, 4
      // Predicated region
      $region49: #{tpu_custom_call.1} parent=5 // pred_check
        %p320 = pneg %p319
      $region50: #{tpu_custom_call.1} parent=5 // pred_check_branch
        %322 = sbr.rel (%p320) target = $region52
      $region51: #{tpu_custom_call.1} parent=5 // pred_region
        // Predicated region
        $region53: #{tpu_custom_call.1} parent=51 // pred_check
          %p323 = pneg %p54
        $region54: #{tpu_custom_call.1} parent=51 // pred_check_branch
          %325 = sbr.rel (%p323) target = $region56
        $region55: #{tpu_custom_call.1} parent=51 // pred_region
          %s326 = sand.u32 %s44, 1
          %s327 = scalar_lea.sflag [#allocation4], %s326
          %s328 = sand.u32 %s44, 1
          %s329 = smul.addr %s328, 256
          %s330 = scalar_lea.vmem [#allocation3], %s329
          %332 = vsyncadd %s327, 0
          %s333 = smul.addr %s29, 32
          %s334 = smul.addr %s333, 8
          %s335 = scalar_lea.hbm %s0, %s334
          %s336 = sshll.u32 %s335, 4
          %s337 = int_to_ptr.hbm [resolvable:$true] %s336
          %s338 = sshll.u32 %s330, 4
          %s339 = int_to_ptr.vmem [resolvable:$true] %s338
          %344 = dma.hbm_to_vmem [thread:$0]  %s337, 4096, %s339, %s327, 128, 128, 8
        $region56: #{tpu_custom_call.1} parent=51 // pred_fallthru
          _
      $region52: #{tpu_custom_call.1} parent=5 // pred_fallthru
        _
      %p345 = scmp.le.s32.totalorder 1, %s22
      %p346 = scmp.lt.s32.totalorder %s22, 5
      %p347 = pnand %p345, %p346
      %p348 = pneg %p347
      // Predicated region
      $region57: #{tpu_custom_call.1} parent=5 // pred_check
        _
      $region58: #{tpu_custom_call.1} parent=5 // pred_check_branch
        %350 = sbr.rel (%p347) target = $region60
      $region59: #{tpu_custom_call.1} parent=5 // pred_region
        %s351 = ssub.s32 %s22, 1
        %s352 = sand.u32 %s47, 1
        %s353 = scalar_lea.sflag [#allocation4], %s352
        %s354 = sand.u32 %s47, 1
        %s355 = smul.addr %s354, 256
        %s356 = scalar_lea.vmem [#allocation3], %s355
        // Predicated region
        $region61: #{tpu_custom_call.1} parent=59 // pred_check
          %p357 = pneg %p60
        $region62: #{tpu_custom_call.1} parent=59 // pred_check_branch
          %359 = sbr.rel (%p357) target = $region64
        $region63: #{tpu_custom_call.1} parent=59 // pred_region
          %361 = dma.done %s353, 4096
        $region64: #{tpu_custom_call.1} parent=59 // pred_fallthru
          _
        %s362 = sand.u32 %s47, 1
        %s363 = scalar_lea.sflag [#allocation4], %s362
        %s364 = sand.u32 %s47, 1
        %s365 = smul.addr %s364, 256
        %s366 = scalar_lea.vmem [#allocation3], %s365
        %p367 = pneg %p60
        %p368 = pneg %p57
        %p369 = pneg %p81
        %p370 = pneg %p78
        %p371 = pneg %p102
        %p372 = pneg %p99
        %p373 = pneg %p123
        %p374 = pneg %p120
        %p375 = pneg %p144
        %p376 = pneg %p141
        %p377 = pneg %p165
        %p378 = pneg %p162
        %p379 = pneg %p186
        %p380 = pneg %p183
        %p381 = pneg %p207
        %p382 = pneg %p204
        %p383 = pneg %p228
        %p384 = pneg %p225
        %p385 = pneg %p249
        %p386 = pneg %p246
        %p387 = pneg %p277
        %p388 = pneg %p274
        %s389 = sand.u32 %s264, 1
        %s390 = scalar_lea.sflag [#allocation5], %s389
        %s391 = sand.u32 %s264, 1
        %s392 = smul.addr %s391, 128
        %s393 = scalar_lea.vmem [#allocation6], %s392
        %s394 = smul.u32 8, %s32
        %s396 = smul.u32 %s32, 8
        %vm397 = vcmask 256000
        %398 = vst.msk [vmem:[#allocation2] sm:$0x7] %vm397, 0.0
        %399 = vst.msk [vmem:[#allocation2 + $0x18] sm:$0x7] %vm397, 0.0
        %400 = vst.msk [vmem:[#allocation2 + $0x30] sm:$0x7] %vm397, 0.0
        %401 = vst.msk [vmem:[#allocation2 + $0x48] sm:$0x7] %vm397, 0.0
        %402 = vst.msk [vmem:[#allocation2 + $0x60] sm:$0x7] %vm397, 0.0
        %403 = vst.msk [vmem:[#allocation2 + $0x78] sm:$0x7] %vm397, 0.0
        %404 = vst.msk [vmem:[#allocation2 + $0x90] sm:$0x7] %vm397, 0.0
        %405 = vst.msk [vmem:[#allocation2 + $0xa8] sm:$0x7] %vm397, 0.0
        %406 = vst.msk [vmem:[#allocation2 + $0xc0] sm:$0x7] %vm397, 0.0
        %407 = vst.msk [vmem:[#allocation2 + $0xd8] sm:$0x7] %vm397, 0.0
        %408 = vst.msk [vmem:[#allocation2 + $0xf0] sm:$0x7] %vm397, 0.0
        %409 = vst.msk [vmem:[#allocation2 + $0x108] sm:$0x7] %vm397, 0.0
        %410 = vst.msk [vmem:[#allocation2 + $0x120] sm:$0x7] %vm397, 0.0
        %411 = vst.msk [vmem:[#allocation2 + $0x138] sm:$0x7] %vm397, 0.0
        %412 = vst.msk [vmem:[#allocation2 + $0x13] sm:$0x7] %vm397, 0.0
        %413 = vst.msk [vmem:[#allocation2 + $0x2b] sm:$0x7] %vm397, 0.0
        %414 = vst.msk [vmem:[#allocation2 + $0x43] sm:$0x7] %vm397, 0.0
        %415 = vst.msk [vmem:[#allocation2 + $0x5b] sm:$0x7] %vm397, 0.0
        %416 = vst.msk [vmem:[#allocation2 + $0x73] sm:$0x7] %vm397, 0.0
        %417 = vst.msk [vmem:[#allocation2 + $0x8b] sm:$0x7] %vm397, 0.0
        %418 = vst.msk [vmem:[#allocation2 + $0xa3] sm:$0x7] %vm397, 0.0
        %419 = vst.msk [vmem:[#allocation2 + $0xbb] sm:$0x7] %vm397, 0.0
        %420 = vst.msk [vmem:[#allocation2 + $0xd3] sm:$0x7] %vm397, 0.0
        %421 = vst.msk [vmem:[#allocation2 + $0xeb] sm:$0x7] %vm397, 0.0
        %422 = vst.msk [vmem:[#allocation2 + $0x103] sm:$0x7] %vm397, 0.0
        %423 = vst.msk [vmem:[#allocation2 + $0x11b] sm:$0x7] %vm397, 0.0
        %424 = vst.msk [vmem:[#allocation2 + $0x133] sm:$0x7] %vm397, 0.0
        %425 = vst.msk [vmem:[#allocation2 + $0x14b] sm:$0x7] %vm397, 0.0
        %s426 = smul.u32 %s396, 16
        %s427 = scalar_lea.vmem %s356, %s426 [#allocation3]
        %v428 = vld [vmem:[%s427] sm:$0xff]
        %v429 = vld [vmem:[%s427 + $0x8] sm:$0xff]
        %v430 = vld [vmem:[%s427 + $0x10] sm:$0xff]
        %v431 = vld [vmem:[%s427 + $0x18] sm:$0xff]
        %v432 = vld [vmem:[%s427 + $0x20] sm:$0xff]
        %v433 = vld [vmem:[%s427 + $0x28] sm:$0xff]
        %v434 = vld [vmem:[%s427 + $0x30] sm:$0xff]
        %v435 = vld [vmem:[%s427 + $0x38] sm:$0xff]
        %v436 = vld [vmem:[%s427 + $0x40] sm:$0xff]
        %v437 = vld [vmem:[%s427 + $0x48] sm:$0xff]
        %v438 = vld [vmem:[%s427 + $0x50] sm:$0xff]
        %v439 = vld [vmem:[%s427 + $0x58] sm:$0xff]
        %v440 = vld [vmem:[%s427 + $0x60] sm:$0xff]
        %v441 = vld [vmem:[%s427 + $0x68] sm:$0xff]
        %v442 = vld [vmem:[%s427 + $0x70] sm:$0xff]
        %v443 = vld [vmem:[%s427 + $0x78] sm:$0xff]
        %s444 = scalar_lea.vmem [#allocation2], 72
        %vm445 = vcmask 261120
        %446 = vst.msk [vmem:[%s444 + $0x3] sm:$0xff] %vm445, %v428
        %447 = vst.msk [vmem:[%s444 + $0xb] sm:$0xff] %vm445, %v429
        %448 = vst.msk [vmem:[%s444 + $0x1b] sm:$0xff] %vm445, %v430
        %449 = vst.msk [vmem:[%s444 + $0x23] sm:$0xff] %vm445, %v431
        %450 = vst.msk [vmem:[%s444 + $0x33] sm:$0xff] %vm445, %v432
        %451 = vst.msk [vmem:[%s444 + $0x3b] sm:$0xff] %vm445, %v433
        %452 = vst.msk [vmem:[%s444 + $0x4b] sm:$0xff] %vm445, %v434
        %453 = vst.msk [vmem:[%s444 + $0x53] sm:$0xff] %vm445, %v435
        %454 = vst.msk [vmem:[%s444 + $0x63] sm:$0xff] %vm445, %v436
        %455 = vst.msk [vmem:[%s444 + $0x6b] sm:$0xff] %vm445, %v437
        %456 = vst.msk [vmem:[%s444 + $0x7b] sm:$0xff] %vm445, %v438
        %457 = vst.msk [vmem:[%s444 + $0x83] sm:$0xff] %vm445, %v439
        %458 = vst.msk [vmem:[%s444 + $0x93] sm:$0xff] %vm445, %v440
        %459 = vst.msk [vmem:[%s444 + $0x9b] sm:$0xff] %vm445, %v441
        %460 = vst.msk [vmem:[%s444 + $0xab] sm:$0xff] %vm445, %v442
        %461 = vst.msk [vmem:[%s444 + $0xb3] sm:$0xff] %vm445, %v443
        %p462 = scmp.eq.s32.totalorder %s32, 0
        // Predicated region
        $region65: #{tpu_custom_call.1} parent=59 // pred_check
          %p463 = pneg %p462
        $region66: #{tpu_custom_call.1} parent=59 // pred_check_branch
          %465 = sbr.rel (%p463) target = $region68
        $region67: #{tpu_custom_call.1} parent=59 // pred_region
          %466 = vst.msk [vmem:[#allocation2 + $0x3] sm:$0xff] %vm445, 0.0
          %467 = vst.msk [vmem:[#allocation2 + $0xb] sm:$0xff] %vm445, 0.0
          %468 = vst.msk [vmem:[#allocation2 + $0x1b] sm:$0xff] %vm445, 0.0
          %469 = vst.msk [vmem:[#allocation2 + $0x23] sm:$0xff] %vm445, 0.0
          %470 = vst.msk [vmem:[#allocation2 + $0x33] sm:$0xff] %vm445, 0.0
          %471 = vst.msk [vmem:[#allocation2 + $0x3b] sm:$0xff] %vm445, 0.0
        $region68: #{tpu_custom_call.1} parent=59 // pred_fallthru
          _
        %p472 = scmp.gt.s32.totalorder %s32, 0
        // Predicated region
        $region69: #{tpu_custom_call.1} parent=59 // pred_check
          %p473 = pneg %p472
        $region70: #{tpu_custom_call.1} parent=59 // pred_check_branch
          %475 = sbr.rel (%p473) target = $region72
        $region71: #{tpu_custom_call.1} parent=59 // pred_region
          %s476 = ssub.s32 %s396, 3
          %s477 = smul.u32 %s476, 16
          %s478 = scalar_lea.vmem %s356, %s477 [#allocation3]
          %v479 = vld [vmem:[%s478] sm:$0xff]
          %v480 = vld [vmem:[%s478 + $0x8] sm:$0xff]
          %v481 = vld [vmem:[%s478 + $0x10] sm:$0xff]
          %v482 = vld [vmem:[%s478 + $0x18] sm:$0xff]
          %v483 = vld [vmem:[%s478 + $0x20] sm:$0xff]
          %v484 = vld [vmem:[%s478 + $0x28] sm:$0xff]
          %485 = vst.msk [vmem:[#allocation2 + $0x3] sm:$0xff] %vm445, %v479
          %486 = vst.msk [vmem:[#allocation2 + $0xb] sm:$0xff] %vm445, %v480
          %487 = vst.msk [vmem:[#allocation2 + $0x1b] sm:$0xff] %vm445, %v481
          %488 = vst.msk [vmem:[#allocation2 + $0x23] sm:$0xff] %vm445, %v482
          %489 = vst.msk [vmem:[#allocation2 + $0x33] sm:$0xff] %vm445, %v483
          %490 = vst.msk [vmem:[#allocation2 + $0x3b] sm:$0xff] %vm445, %v484
        $region72: #{tpu_custom_call.1} parent=59 // pred_fallthru
          _
        %p491 = scmp.eq.s32.totalorder %s32, 1
        // Predicated region
        $region73: #{tpu_custom_call.1} parent=59 // pred_check
          %p492 = pneg %p491
        $region74: #{tpu_custom_call.1} parent=59 // pred_check_branch
          %494 = sbr.rel (%p492) target = $region76
        $region75: #{tpu_custom_call.1} parent=59 // pred_region
          %s495 = scalar_lea.vmem [#allocation2], 264
          %496 = vst.msk [vmem:[%s495 + $0x3] sm:$0xff] %vm445, 0.0
          %497 = vst.msk [vmem:[%s495 + $0xb] sm:$0xff] %vm445, 0.0
          %498 = vst.msk [vmem:[%s495 + $0x1b] sm:$0xff] %vm445, 0.0
          %499 = vst.msk [vmem:[%s495 + $0x23] sm:$0xff] %vm445, 0.0
          %500 = vst.msk [vmem:[%s495 + $0x33] sm:$0xff] %vm445, 0.0
          %501 = vst.msk [vmem:[%s495 + $0x3b] sm:$0xff] %vm445, 0.0
        $region76: #{tpu_custom_call.1} parent=59 // pred_fallthru
          _
        %p502 = scmp.lt.s32.totalorder %s32, 1
        // Predicated region
        $region77: #{tpu_custom_call.1} parent=59 // pred_check
          %p503 = pneg %p502
        $region78: #{tpu_custom_call.1} parent=59 // pred_check_branch
          %505 = sbr.rel (%p503) target = $region80
        $region79: #{tpu_custom_call.1} parent=59 // pred_region
          %s506 = sadd.s32 %s396, 8
          %s507 = smul.u32 %s506, 16
          %s508 = scalar_lea.vmem %s356, %s507 [#allocation3]
          %v509 = vld [vmem:[%s508] sm:$0xff]
          %v510 = vld [vmem:[%s508 + $0x8] sm:$0xff]
          %v511 = vld [vmem:[%s508 + $0x10] sm:$0xff]
          %v512 = vld [vmem:[%s508 + $0x18] sm:$0xff]
          %v513 = vld [vmem:[%s508 + $0x20] sm:$0xff]
          %v514 = vld [vmem:[%s508 + $0x28] sm:$0xff]
          %s515 = scalar_lea.vmem [#allocation2], 264
          %516 = vst.msk [vmem:[%s515 + $0x3] sm:$0xff] %vm445, %v509
          %517 = vst.msk [vmem:[%s515 + $0xb] sm:$0xff] %vm445, %v510
          %518 = vst.msk [vmem:[%s515 + $0x1b] sm:$0xff] %vm445, %v511
          %519 = vst.msk [vmem:[%s515 + $0x23] sm:$0xff] %vm445, %v512
          %520 = vst.msk [vmem:[%s515 + $0x33] sm:$0xff] %vm445, %v513
          %521 = vst.msk [vmem:[%s515 + $0x3b] sm:$0xff] %vm445, %v514
        $region80: #{tpu_custom_call.1} parent=59 // pred_fallthru
          _
        %v522 = vld [vmem:[#allocation2] sm:$0xff]
        %v523 = vld [vmem:[#allocation2 + $0x8] sm:$0xff]
        %v524 = vld [vmem:[#allocation2 + $0x10] sm:$0x3f]
        %v525 = vld [vmem:[#allocation2 + $0x18] sm:$0xff]
        %v526 = vld [vmem:[#allocation2 + $0x20] sm:$0xff]
        %v527 = vld [vmem:[#allocation2 + $0x28] sm:$0x3f]
        %v528 = vld [vmem:[#allocation2 + $0x30] sm:$0xff]
        %v529 = vld [vmem:[#allocation2 + $0x38] sm:$0xff]
        %v530 = vld [vmem:[#allocation2 + $0x40] sm:$0x3f]
        %v531 = vld [vmem:[#allocation2 + $0x48] sm:$0xff]
        %v532 = vld [vmem:[#allocation2 + $0x50] sm:$0xff]
        %v533 = vld [vmem:[#allocation2 + $0x58] sm:$0x3f]
        %v534 = vld [vmem:[#allocation2 + $0x60] sm:$0xff]
        %v535 = vld [vmem:[#allocation2 + $0x68] sm:$0xff]
        %v536 = vld [vmem:[#allocation2 + $0x70] sm:$0x3f]
        %v537 = vld [vmem:[#allocation2 + $0x78] sm:$0xff]
        %v538 = vld [vmem:[#allocation2 + $0x80] sm:$0xff]
        %v539 = vld [vmem:[#allocation2 + $0x88] sm:$0x3f]
        %v540 = vld [vmem:[#allocation2 + $0x90] sm:$0xff]
        %v541 = vld [vmem:[#allocation2 + $0x98] sm:$0xff]
        %v542 = vld [vmem:[#allocation2 + $0xa0] sm:$0x3f]
        %v543 = vld [vmem:[#allocation2 + $0xa8] sm:$0xff]
        %v544 = vld [vmem:[#allocation2 + $0xb0] sm:$0xff]
        %v545 = vld [vmem:[#allocation2 + $0xb8] sm:$0x3f]
        %v546 = vld [vmem:[#allocation2 + $0xc0] sm:$0xff]
        %v547 = vld [vmem:[#allocation2 + $0xc8] sm:$0xff]
        %v548 = vld [vmem:[#allocation2 + $0xd0] sm:$0x3f]
        %v549 = vld [vmem:[#allocation2 + $0xd8] sm:$0xff]
        %v550 = vld [vmem:[#allocation2 + $0xe0] sm:$0xff]
        %v551 = vld [vmem:[#allocation2 + $0xe8] sm:$0x3f]
        %v552 = vld [vmem:[#allocation2 + $0xf0] sm:$0xff]
        %v553 = vld [vmem:[#allocation2 + $0xf8] sm:$0xff]
        %v554 = vld [vmem:[#allocation2 + $0x100] sm:$0x3f]
        %v555 = vld [vmem:[#allocation2 + $0x108] sm:$0xff]
        %v556 = vld [vmem:[#allocation2 + $0x110] sm:$0xff]
        %v557 = vld [vmem:[#allocation2 + $0x118] sm:$0x3f]
        %v558 = vld [vmem:[#allocation2 + $0x120] sm:$0xff]
        %v559 = vld [vmem:[#allocation2 + $0x128] sm:$0xff]
        %v560 = vld [vmem:[#allocation2 + $0x130] sm:$0x3f]
        %v561 = vld [vmem:[#allocation2 + $0x138] sm:$0xff]
        %v562 = vld [vmem:[#allocation2 + $0x140] sm:$0xff]
        %v563 = vld [vmem:[#allocation2 + $0x148] sm:$0x3f]
        %v564 = vld [vmem:[%s1] sm:$0x7f]
        %v565 = vld [vmem:[%s1 + $0x8] sm:$0x7f]
        %v566 = vld [vmem:[%s1 + $0x10] sm:$0x7f]
        %v567 = vld [vmem:[%s1 + $0x18] sm:$0x7f]
        %v568 = vld [vmem:[%s1 + $0x20] sm:$0x7f]
        %v569 = vld [vmem:[%s1 + $0x28] sm:$0x7f]
        %v570 = vld [vmem:[%s1 + $0x30] sm:$0x7f]
        %v571 = vperm.slane %v564, 0
        %v572 = vmul.f32 %v522, %v571
        %v573 = vmul.f32 %v523, %v571
        %v574 = vmul.f32 %v525, %v571
        %v575 = vmul.f32 %v526, %v571
        %v576 = vmul.f32 %v528, %v571
        %v577 = vmul.f32 %v529, %v571
        %v578 = vmul.f32 %v531, %v571
        %v579 = vmul.f32 %v532, %v571
        %v580 = vmul.f32 %v534, %v571
        %v581 = vmul.f32 %v535, %v571
        %v582 = vmul.f32 %v537, %v571
        %v583 = vmul.f32 %v538, %v571
        %v584 = vmul.f32 %v540, %v571
        %v585 = vmul.f32 %v541, %v571
        %v586 = vmul.f32 %v543, %v571
        %v587 = vmul.f32 %v544, %v571
        %v588 = vperm.slane %v565, 0
        %v589 = vmul.f32 %v525, %v588
        %v590 = vmul.f32 %v526, %v588
        %v591 = vmul.f32 %v528, %v588
        %v592 = vmul.f32 %v529, %v588
        %v593 = vmul.f32 %v531, %v588
        %v594 = vmul.f32 %v532, %v588
        %v595 = vmul.f32 %v534, %v588
        %v596 = vmul.f32 %v535, %v588
        %v597 = vmul.f32 %v537, %v588
        %v598 = vmul.f32 %v538, %v588
        %v599 = vmul.f32 %v540, %v588
        %v600 = vmul.f32 %v541, %v588
        %v601 = vmul.f32 %v543, %v588
        %v602 = vmul.f32 %v544, %v588
        %v603 = vmul.f32 %v546, %v588
        %v604 = vmul.f32 %v547, %v588
        %v605 = vadd.f32 %v572, %v589
        %v606 = vadd.f32 %v573, %v590
        %v607 = vadd.f32 %v574, %v591
        %v608 = vadd.f32 %v575, %v592
        %v609 = vadd.f32 %v576, %v593
        %v610 = vadd.f32 %v577, %v594
        %v611 = vadd.f32 %v578, %v595
        %v612 = vadd.f32 %v579, %v596
        %v613 = vadd.f32 %v580, %v597
        %v614 = vadd.f32 %v581, %v598
        %v615 = vadd.f32 %v582, %v599
        %v616 = vadd.f32 %v583, %v600
        %v617 = vadd.f32 %v584, %v601
        %v618 = vadd.f32 %v585, %v602
        %v619 = vadd.f32 %v586, %v603
        %v620 = vadd.f32 %v587, %v604
        %v621 = vperm.slane %v566, 0
        %v622 = vmul.f32 %v528, %v621
        %v623 = vmul.f32 %v529, %v621
        %v624 = vmul.f32 %v531, %v621
        %v625 = vmul.f32 %v532, %v621
        %v626 = vmul.f32 %v534, %v621
        %v627 = vmul.f32 %v535, %v621
        %v628 = vmul.f32 %v537, %v621
        %v629 = vmul.f32 %v538, %v621
        %v630 = vmul.f32 %v540, %v621
        %v631 = vmul.f32 %v541, %v621
        %v632 = vmul.f32 %v543, %v621
        %v633 = vmul.f32 %v544, %v621
        %v634 = vmul.f32 %v546, %v621
        %v635 = vmul.f32 %v547, %v621
        %v636 = vmul.f32 %v549, %v621
        %v637 = vmul.f32 %v550, %v621
        %v638 = vadd.f32 %v605, %v622
        %v639 = vadd.f32 %v606, %v623
        %v640 = vadd.f32 %v607, %v624
        %v641 = vadd.f32 %v608, %v625
        %v642 = vadd.f32 %v609, %v626
        %v643 = vadd.f32 %v610, %v627
        %v644 = vadd.f32 %v611, %v628
        %v645 = vadd.f32 %v612, %v629
        %v646 = vadd.f32 %v613, %v630
        %v647 = vadd.f32 %v614, %v631
        %v648 = vadd.f32 %v615, %v632
        %v649 = vadd.f32 %v616, %v633
        %v650 = vadd.f32 %v617, %v634
        %v651 = vadd.f32 %v618, %v635
        %v652 = vadd.f32 %v619, %v636
        %v653 = vadd.f32 %v620, %v637
        %v654 = vperm.slane %v567, 0
        %v655 = vmul.f32 %v531, %v654
        %v656 = vmul.f32 %v532, %v654
        %v657 = vmul.f32 %v534, %v654
        %v658 = vmul.f32 %v535, %v654
        %v659 = vmul.f32 %v537, %v654
        %v660 = vmul.f32 %v538, %v654
        %v661 = vmul.f32 %v540, %v654
        %v662 = vmul.f32 %v541, %v654
        %v663 = vmul.f32 %v543, %v654
        %v664 = vmul.f32 %v544, %v654
        %v665 = vmul.f32 %v546, %v654
        %v666 = vmul.f32 %v547, %v654
        %v667 = vmul.f32 %v549, %v654
        %v668 = vmul.f32 %v550, %v654
        %v669 = vmul.f32 %v552, %v654
        %v670 = vmul.f32 %v553, %v654
        %v671 = vadd.f32 %v638, %v655
        %v672 = vadd.f32 %v639, %v656
        %v673 = vadd.f32 %v640, %v657
        %v674 = vadd.f32 %v641, %v658
        %v675 = vadd.f32 %v642, %v659
        %v676 = vadd.f32 %v643, %v660
        %v677 = vadd.f32 %v644, %v661
        %v678 = vadd.f32 %v645, %v662
        %v679 = vadd.f32 %v646, %v663
        %v680 = vadd.f32 %v647, %v664
        %v681 = vadd.f32 %v648, %v665
        %v682 = vadd.f32 %v649, %v666
        %v683 = vadd.f32 %v650, %v667
        %v684 = vadd.f32 %v651, %v668
        %v685 = vadd.f32 %v652, %v669
        %v686 = vadd.f32 %v653, %v670
        %v687 = vperm.slane %v568, 0
        %v688 = vmul.f32 %v534, %v687
        %v689 = vmul.f32 %v535, %v687
        %v690 = vmul.f32 %v537, %v687
        %v691 = vmul.f32 %v538, %v687
        %v692 = vmul.f32 %v540, %v687
        %v693 = vmul.f32 %v541, %v687
        %v694 = vmul.f32 %v543, %v687
        %v695 = vmul.f32 %v544, %v687
        %v696 = vmul.f32 %v546, %v687
        %v697 = vmul.f32 %v547, %v687
        %v698 = vmul.f32 %v549, %v687
        %v699 = vmul.f32 %v550, %v687
        %v700 = vmul.f32 %v552, %v687
        %v701 = vmul.f32 %v553, %v687
        %v702 = vmul.f32 %v555, %v687
        %v703 = vmul.f32 %v556, %v687
        %v704 = vadd.f32 %v671, %v688
        %v705 = vadd.f32 %v672, %v689
        %v706 = vadd.f32 %v673, %v690
        %v707 = vadd.f32 %v674, %v691
        %v708 = vadd.f32 %v675, %v692
        %v709 = vadd.f32 %v676, %v693
        %v710 = vadd.f32 %v677, %v694
        %v711 = vadd.f32 %v678, %v695
        %v712 = vadd.f32 %v679, %v696
        %v713 = vadd.f32 %v680, %v697
        %v714 = vadd.f32 %v681, %v698
        %v715 = vadd.f32 %v682, %v699
        %v716 = vadd.f32 %v683, %v700
        %v717 = vadd.f32 %v684, %v701
        %v718 = vadd.f32 %v685, %v702
        %v719 = vadd.f32 %v686, %v703
        %v720 = vperm.slane %v569, 0
        %v721 = vmul.f32 %v537, %v720
        %v722 = vmul.f32 %v538, %v720
        %v723 = vmul.f32 %v540, %v720
        %v724 = vmul.f32 %v541, %v720
        %v725 = vmul.f32 %v543, %v720
        %v726 = vmul.f32 %v544, %v720
        %v727 = vmul.f32 %v546, %v720
        %v728 = vmul.f32 %v547, %v720
        %v729 = vmul.f32 %v549, %v720
        %v730 = vmul.f32 %v550, %v720
        %v731 = vmul.f32 %v552, %v720
        %v732 = vmul.f32 %v553, %v720
        %v733 = vmul.f32 %v555, %v720
        %v734 = vmul.f32 %v556, %v720
        %v735 = vmul.f32 %v558, %v720
        %v736 = vmul.f32 %v559, %v720
        %v737 = vadd.f32 %v704, %v721
        %v738 = vadd.f32 %v705, %v722
        %v739 = vadd.f32 %v706, %v723
        %v740 = vadd.f32 %v707, %v724
        %v741 = vadd.f32 %v708, %v725
        %v742 = vadd.f32 %v709, %v726
        %v743 = vadd.f32 %v710, %v727
        %v744 = vadd.f32 %v711, %v728
        %v745 = vadd.f32 %v712, %v729
        %v746 = vadd.f32 %v713, %v730
        %v747 = vadd.f32 %v714, %v731
        %v748 = vadd.f32 %v715, %v732
        %v749 = vadd.f32 %v716, %v733
        %v750 = vadd.f32 %v717, %v734
        %v751 = vadd.f32 %v718, %v735
        %v752 = vadd.f32 %v719, %v736
        %v753 = vperm.slane %v570, 0
        %v754 = vmul.f32 %v540, %v753
        %v755 = vmul.f32 %v541, %v753
        %v756 = vmul.f32 %v543, %v753
        %v757 = vmul.f32 %v544, %v753
        %v758 = vmul.f32 %v546, %v753
        %v759 = vmul.f32 %v547, %v753
        %v760 = vmul.f32 %v549, %v753
        %v761 = vmul.f32 %v550, %v753
        %v762 = vmul.f32 %v552, %v753
        %v763 = vmul.f32 %v553, %v753
        %v764 = vmul.f32 %v555, %v753
        %v765 = vmul.f32 %v556, %v753
        %v766 = vmul.f32 %v558, %v753
        %v767 = vmul.f32 %v559, %v753
        %v768 = vmul.f32 %v561, %v753
        %v769 = vmul.f32 %v562, %v753
        %v770 = vadd.f32 %v737, %v754
        %v771 = vadd.f32 %v738, %v755
        %v772 = vadd.f32 %v739, %v756
        %v773 = vadd.f32 %v740, %v757
        %v774 = vadd.f32 %v741, %v758
        %v775 = vadd.f32 %v742, %v759
        %v776 = vadd.f32 %v743, %v760
        %v777 = vadd.f32 %v744, %v761
        %v778 = vadd.f32 %v745, %v762
        %v779 = vadd.f32 %v746, %v763
        %v780 = vadd.f32 %v747, %v764
        %v781 = vadd.f32 %v748, %v765
        %v782 = vadd.f32 %v749, %v766
        %v783 = vadd.f32 %v750, %v767
        %v784 = vadd.f32 %v751, %v768
        %v785 = vadd.f32 %v752, %v769
        %v786 = vperm.slane %v564, 1
        %v787 = vmul.f32 %v522, %v786
        %v788 = vmul.f32 %v523, %v786
        %v789 = vmul.f32 %v524, %v786
        %v790 = vmul.f32 %v525, %v786
        %v791 = vmul.f32 %v526, %v786
        %v792 = vmul.f32 %v527, %v786
        %v793 = vmul.f32 %v528, %v786
        %v794 = vmul.f32 %v529, %v786
        %v795 = vmul.f32 %v530, %v786
        %v796 = vmul.f32 %v531, %v786
        %v797 = vmul.f32 %v532, %v786
        %v798 = vmul.f32 %v533, %v786
        %v799 = vmul.f32 %v534, %v786
        %v800 = vmul.f32 %v535, %v786
        %v801 = vmul.f32 %v536, %v786
        %v802 = vmul.f32 %v537, %v786
        %v803 = vmul.f32 %v538, %v786
        %v804 = vmul.f32 %v539, %v786
        %v805 = vmul.f32 %v540, %v786
        %v806 = vmul.f32 %v541, %v786
        %v807 = vmul.f32 %v542, %v786
        %v808 = vmul.f32 %v543, %v786
        %v809 = vmul.f32 %v544, %v786
        %v810 = vmul.f32 %v545, %v786
        %v811 = vperm.slane %v565, 1
        %v812 = vmul.f32 %v525, %v811
        %v813 = vmul.f32 %v526, %v811
        %v814 = vmul.f32 %v527, %v811
        %v815 = vmul.f32 %v528, %v811
        %v816 = vmul.f32 %v529, %v811
        %v817 = vmul.f32 %v530, %v811
        %v818 = vmul.f32 %v531, %v811
        %v819 = vmul.f32 %v532, %v811
        %v820 = vmul.f32 %v533, %v811
        %v821 = vmul.f32 %v534, %v811
        %v822 = vmul.f32 %v535, %v811
        %v823 = vmul.f32 %v536, %v811
        %v824 = vmul.f32 %v537, %v811
        %v825 = vmul.f32 %v538, %v811
        %v826 = vmul.f32 %v539, %v811
        %v827 = vmul.f32 %v540, %v811
        %v828 = vmul.f32 %v541, %v811
        %v829 = vmul.f32 %v542, %v811
        %v830 = vmul.f32 %v543, %v811
        %v831 = vmul.f32 %v544, %v811
        %v832 = vmul.f32 %v545, %v811
        %v833 = vmul.f32 %v546, %v811
        %v834 = vmul.f32 %v547, %v811
        %v835 = vmul.f32 %v548, %v811
        %v836 = vadd.f32 %v787, %v812
        %v837 = vadd.f32 %v788, %v813
        %v838 = vadd.f32 %v789, %v814
        %v839 = vadd.f32 %v790, %v815
        %v840 = vadd.f32 %v791, %v816
        %v841 = vadd.f32 %v792, %v817
        %v842 = vadd.f32 %v793, %v818
        %v843 = vadd.f32 %v794, %v819
        %v844 = vadd.f32 %v795, %v820
        %v845 = vadd.f32 %v796, %v821
        %v846 = vadd.f32 %v797, %v822
        %v847 = vadd.f32 %v798, %v823
        %v848 = vadd.f32 %v799, %v824
        %v849 = vadd.f32 %v800, %v825
        %v850 = vadd.f32 %v801, %v826
        %v851 = vadd.f32 %v802, %v827
        %v852 = vadd.f32 %v803, %v828
        %v853 = vadd.f32 %v804, %v829
        %v854 = vadd.f32 %v805, %v830
        %v855 = vadd.f32 %v806, %v831
        %v856 = vadd.f32 %v807, %v832
        %v857 = vadd.f32 %v808, %v833
        %v858 = vadd.f32 %v809, %v834
        %v859 = vadd.f32 %v810, %v835
        %v860 = vperm.slane %v566, 1
        %v861 = vmul.f32 %v528, %v860
        %v862 = vmul.f32 %v529, %v860
        %v863 = vmul.f32 %v530, %v860
        %v864 = vmul.f32 %v531, %v860
        %v865 = vmul.f32 %v532, %v860
        %v866 = vmul.f32 %v533, %v860
        %v867 = vmul.f32 %v534, %v860
        %v868 = vmul.f32 %v535, %v860
        %v869 = vmul.f32 %v536, %v860
        %v870 = vmul.f32 %v537, %v860
        %v871 = vmul.f32 %v538, %v860
        %v872 = vmul.f32 %v539, %v860
        %v873 = vmul.f32 %v540, %v860
        %v874 = vmul.f32 %v541, %v860
        %v875 = vmul.f32 %v542, %v860
        %v876 = vmul.f32 %v543, %v860
        %v877 = vmul.f32 %v544, %v860
        %v878 = vmul.f32 %v545, %v860
        %v879 = vmul.f32 %v546, %v860
        %v880 = vmul.f32 %v547, %v860
        %v881 = vmul.f32 %v548, %v860
        %v882 = vmul.f32 %v549, %v860
        %v883 = vmul.f32 %v550, %v860
        %v884 = vmul.f32 %v551, %v860
        %v885 = vadd.f32 %v836, %v861
        %v886 = vadd.f32 %v837, %v862
        %v887 = vadd.f32 %v838, %v863
        %v888 = vadd.f32 %v839, %v864
        %v889 = vadd.f32 %v840, %v865
        %v890 = vadd.f32 %v841, %v866
        %v891 = vadd.f32 %v842, %v867
        %v892 = vadd.f32 %v843, %v868
        %v893 = vadd.f32 %v844, %v869
        %v894 = vadd.f32 %v845, %v870
        %v895 = vadd.f32 %v846, %v871
        %v896 = vadd.f32 %v847, %v872
        %v897 = vadd.f32 %v848, %v873
        %v898 = vadd.f32 %v849, %v874
        %v899 = vadd.f32 %v850, %v875
        %v900 = vadd.f32 %v851, %v876
        %v901 = vadd.f32 %v852, %v877
        %v902 = vadd.f32 %v853, %v878
        %v903 = vadd.f32 %v854, %v879
        %v904 = vadd.f32 %v855, %v880
        %v905 = vadd.f32 %v856, %v881
        %v906 = vadd.f32 %v857, %v882
        %v907 = vadd.f32 %v858, %v883
        %v908 = vadd.f32 %v859, %v884
        %v909 = vperm.slane %v567, 1
        %v910 = vmul.f32 %v531, %v909
        %v911 = vmul.f32 %v532, %v909
        %v912 = vmul.f32 %v533, %v909
        %v913 = vmul.f32 %v534, %v909
        %v914 = vmul.f32 %v535, %v909
        %v915 = vmul.f32 %v536, %v909
        %v916 = vmul.f32 %v537, %v909
        %v917 = vmul.f32 %v538, %v909
        %v918 = vmul.f32 %v539, %v909
        %v919 = vmul.f32 %v540, %v909
        %v920 = vmul.f32 %v541, %v909
        %v921 = vmul.f32 %v542, %v909
        %v922 = vmul.f32 %v543, %v909
        %v923 = vmul.f32 %v544, %v909
        %v924 = vmul.f32 %v545, %v909
        %v925 = vmul.f32 %v546, %v909
        %v926 = vmul.f32 %v547, %v909
        %v927 = vmul.f32 %v548, %v909
        %v928 = vmul.f32 %v549, %v909
        %v929 = vmul.f32 %v550, %v909
        %v930 = vmul.f32 %v551, %v909
        %v931 = vmul.f32 %v552, %v909
        %v932 = vmul.f32 %v553, %v909
        %v933 = vmul.f32 %v554, %v909
        %v934 = vadd.f32 %v885, %v910
        %v935 = vadd.f32 %v886, %v911
        %v936 = vadd.f32 %v887, %v912
        %v937 = vadd.f32 %v888, %v913
        %v938 = vadd.f32 %v889, %v914
        %v939 = vadd.f32 %v890, %v915
        %v940 = vadd.f32 %v891, %v916
        %v941 = vadd.f32 %v892, %v917
        %v942 = vadd.f32 %v893, %v918
        %v943 = vadd.f32 %v894, %v919
        %v944 = vadd.f32 %v895, %v920
        %v945 = vadd.f32 %v896, %v921
        %v946 = vadd.f32 %v897, %v922
        %v947 = vadd.f32 %v898, %v923
        %v948 = vadd.f32 %v899, %v924
        %v949 = vadd.f32 %v900, %v925
        %v950 = vadd.f32 %v901, %v926
        %v951 = vadd.f32 %v902, %v927
        %v952 = vadd.f32 %v903, %v928
        %v953 = vadd.f32 %v904, %v929
        %v954 = vadd.f32 %v905, %v930
        %v955 = vadd.f32 %v906, %v931
        %v956 = vadd.f32 %v907, %v932
        %v957 = vadd.f32 %v908, %v933
        %v958 = vperm.slane %v568, 1
        %v959 = vmul.f32 %v534, %v958
        %v960 = vmul.f32 %v535, %v958
        %v961 = vmul.f32 %v536, %v958
        %v962 = vmul.f32 %v537, %v958
        %v963 = vmul.f32 %v538, %v958
        %v964 = vmul.f32 %v539, %v958
        %v965 = vmul.f32 %v540, %v958
        %v966 = vmul.f32 %v541, %v958
        %v967 = vmul.f32 %v542, %v958
        %v968 = vmul.f32 %v543, %v958
        %v969 = vmul.f32 %v544, %v958
        %v970 = vmul.f32 %v545, %v958
        %v971 = vmul.f32 %v546, %v958
        %v972 = vmul.f32 %v547, %v958
        %v973 = vmul.f32 %v548, %v958
        %v974 = vmul.f32 %v549, %v958
        %v975 = vmul.f32 %v550, %v958
        %v976 = vmul.f32 %v551, %v958
        %v977 = vmul.f32 %v552, %v958
        %v978 = vmul.f32 %v553, %v958
        %v979 = vmul.f32 %v554, %v958
        %v980 = vmul.f32 %v555, %v958
        %v981 = vmul.f32 %v556, %v958
        %v982 = vmul.f32 %v557, %v958
        %v983 = vadd.f32 %v934, %v959
        %v984 = vadd.f32 %v935, %v960
        %v985 = vadd.f32 %v936, %v961
        %v986 = vadd.f32 %v937, %v962
        %v987 = vadd.f32 %v938, %v963
        %v988 = vadd.f32 %v939, %v964
        %v989 = vadd.f32 %v940, %v965
        %v990 = vadd.f32 %v941, %v966
        %v991 = vadd.f32 %v942, %v967
        %v992 = vadd.f32 %v943, %v968
        %v993 = vadd.f32 %v944, %v969
        %v994 = vadd.f32 %v945, %v970
        %v995 = vadd.f32 %v946, %v971
        %v996 = vadd.f32 %v947, %v972
        %v997 = vadd.f32 %v948, %v973
        %v998 = vadd.f32 %v949, %v974
        %v999 = vadd.f32 %v950, %v975
        %v1000 = vadd.f32 %v951, %v976
        %v1001 = vadd.f32 %v952, %v977
        %v1002 = vadd.f32 %v953, %v978
        %v1003 = vadd.f32 %v954, %v979
        %v1004 = vadd.f32 %v955, %v980
        %v1005 = vadd.f32 %v956, %v981
        %v1006 = vadd.f32 %v957, %v982
        %v1007 = vperm.slane %v569, 1
        %v1008 = vmul.f32 %v537, %v1007
        %v1009 = vmul.f32 %v538, %v1007
        %v1010 = vmul.f32 %v539, %v1007
        %v1011 = vmul.f32 %v540, %v1007
        %v1012 = vmul.f32 %v541, %v1007
        %v1013 = vmul.f32 %v542, %v1007
        %v1014 = vmul.f32 %v543, %v1007
        %v1015 = vmul.f32 %v544, %v1007
        %v1016 = vmul.f32 %v545, %v1007
        %v1017 = vmul.f32 %v546, %v1007
        %v1018 = vmul.f32 %v547, %v1007
        %v1019 = vmul.f32 %v548, %v1007
        %v1020 = vmul.f32 %v549, %v1007
        %v1021 = vmul.f32 %v550, %v1007
        %v1022 = vmul.f32 %v551, %v1007
        %v1023 = vmul.f32 %v552, %v1007
        %v1024 = vmul.f32 %v553, %v1007
        %v1025 = vmul.f32 %v554, %v1007
        %v1026 = vmul.f32 %v555, %v1007
        %v1027 = vmul.f32 %v556, %v1007
        %v1028 = vmul.f32 %v557, %v1007
        %v1029 = vmul.f32 %v558, %v1007
        %v1030 = vmul.f32 %v559, %v1007
        %v1031 = vmul.f32 %v560, %v1007
        %v1032 = vadd.f32 %v983, %v1008
        %v1033 = vadd.f32 %v984, %v1009
        %v1034 = vadd.f32 %v985, %v1010
        %v1035 = vadd.f32 %v986, %v1011
        %v1036 = vadd.f32 %v987, %v1012
        %v1037 = vadd.f32 %v988, %v1013
        %v1038 = vadd.f32 %v989, %v1014
        %v1039 = vadd.f32 %v990, %v1015
        %v1040 = vadd.f32 %v991, %v1016
        %v1041 = vadd.f32 %v992, %v1017
        %v1042 = vadd.f32 %v993, %v1018
        %v1043 = vadd.f32 %v994, %v1019
        %v1044 = vadd.f32 %v995, %v1020
        %v1045 = vadd.f32 %v996, %v1021
        %v1046 = vadd.f32 %v997, %v1022
        %v1047 = vadd.f32 %v998, %v1023
        %v1048 = vadd.f32 %v999, %v1024
        %v1049 = vadd.f32 %v1000, %v1025
        %v1050 = vadd.f32 %v1001, %v1026
        %v1051 = vadd.f32 %v1002, %v1027
        %v1052 = vadd.f32 %v1003, %v1028
        %v1053 = vadd.f32 %v1004, %v1029
        %v1054 = vadd.f32 %v1005, %v1030
        %v1055 = vadd.f32 %v1006, %v1031
        %v1056 = vperm.slane %v570, 1
        %v1057 = vmul.f32 %v540, %v1056
        %v1058 = vmul.f32 %v541, %v1056
        %v1059 = vmul.f32 %v542, %v1056
        %v1060 = vmul.f32 %v543, %v1056
        %v1061 = vmul.f32 %v544, %v1056
        %v1062 = vmul.f32 %v545, %v1056
        %v1063 = vmul.f32 %v546, %v1056
        %v1064 = vmul.f32 %v547, %v1056
        %v1065 = vmul.f32 %v548, %v1056
        %v1066 = vmul.f32 %v549, %v1056
        %v1067 = vmul.f32 %v550, %v1056
        %v1068 = vmul.f32 %v551, %v1056
        %v1069 = vmul.f32 %v552, %v1056
        %v1070 = vmul.f32 %v553, %v1056
        %v1071 = vmul.f32 %v554, %v1056
        %v1072 = vmul.f32 %v555, %v1056
        %v1073 = vmul.f32 %v556, %v1056
        %v1074 = vmul.f32 %v557, %v1056
        %v1075 = vmul.f32 %v558, %v1056
        %v1076 = vmul.f32 %v559, %v1056
        %v1077 = vmul.f32 %v560, %v1056
        %v1078 = vmul.f32 %v561, %v1056
        %v1079 = vmul.f32 %v562, %v1056
        %v1080 = vmul.f32 %v563, %v1056
        %v1081 = vadd.f32 %v1032, %v1057
        %v1082 = vadd.f32 %v1033, %v1058
        %v1083 = vadd.f32 %v1034, %v1059
        %v1084 = vadd.f32 %v1035, %v1060
        %v1085 = vadd.f32 %v1036, %v1061
        %v1086 = vadd.f32 %v1037, %v1062
        %v1087 = vadd.f32 %v1038, %v1063
        %v1088 = vadd.f32 %v1039, %v1064
        %v1089 = vadd.f32 %v1040, %v1065
        %v1090 = vadd.f32 %v1041, %v1066
        %v1091 = vadd.f32 %v1042, %v1067
        %v1092 = vadd.f32 %v1043, %v1068
        %v1093 = vadd.f32 %v1044, %v1069
        %v1094 = vadd.f32 %v1045, %v1070
        %v1095 = vadd.f32 %v1046, %v1071
        %v1096 = vadd.f32 %v1047, %v1072
        %v1097 = vadd.f32 %v1048, %v1073
        %v1098 = vadd.f32 %v1049, %v1074
        %v1099 = vadd.f32 %v1050, %v1075
        %v1100 = vadd.f32 %v1051, %v1076
        %v1101 = vadd.f32 %v1052, %v1077
        %v1102 = vadd.f32 %v1053, %v1078
        %v1103 = vadd.f32 %v1054, %v1079
        %v1104 = vadd.f32 %v1055, %v1080
        %v1105 = vperm.slane %v564, 2
        %v1106 = vmul.f32 %v522, %v1105
        %v1107 = vmul.f32 %v523, %v1105
        %v1108 = vmul.f32 %v524, %v1105
        %v1109 = vmul.f32 %v525, %v1105
        %v1110 = vmul.f32 %v526, %v1105
        %v1111 = vmul.f32 %v527, %v1105
        %v1112 = vmul.f32 %v528, %v1105
        %v1113 = vmul.f32 %v529, %v1105
        %v1114 = vmul.f32 %v530, %v1105
        %v1115 = vmul.f32 %v531, %v1105
        %v1116 = vmul.f32 %v532, %v1105
        %v1117 = vmul.f32 %v533, %v1105
        %v1118 = vmul.f32 %v534, %v1105
        %v1119 = vmul.f32 %v535, %v1105
        %v1120 = vmul.f32 %v536, %v1105
        %v1121 = vmul.f32 %v537, %v1105
        %v1122 = vmul.f32 %v538, %v1105
        %v1123 = vmul.f32 %v539, %v1105
        %v1124 = vmul.f32 %v540, %v1105
        %v1125 = vmul.f32 %v541, %v1105
        %v1126 = vmul.f32 %v542, %v1105
        %v1127 = vmul.f32 %v543, %v1105
        %v1128 = vmul.f32 %v544, %v1105
        %v1129 = vmul.f32 %v545, %v1105
        %v1130 = vperm.slane %v565, 2
        %v1131 = vmul.f32 %v525, %v1130
        %v1132 = vmul.f32 %v526, %v1130
        %v1133 = vmul.f32 %v527, %v1130
        %v1134 = vmul.f32 %v528, %v1130
        %v1135 = vmul.f32 %v529, %v1130
        %v1136 = vmul.f32 %v530, %v1130
        %v1137 = vmul.f32 %v531, %v1130
        %v1138 = vmul.f32 %v532, %v1130
        %v1139 = vmul.f32 %v533, %v1130
        %v1140 = vmul.f32 %v534, %v1130
        %v1141 = vmul.f32 %v535, %v1130
        %v1142 = vmul.f32 %v536, %v1130
        %v1143 = vmul.f32 %v537, %v1130
        %v1144 = vmul.f32 %v538, %v1130
        %v1145 = vmul.f32 %v539, %v1130
        %v1146 = vmul.f32 %v540, %v1130
        %v1147 = vmul.f32 %v541, %v1130
        %v1148 = vmul.f32 %v542, %v1130
        %v1149 = vmul.f32 %v543, %v1130
        %v1150 = vmul.f32 %v544, %v1130
        %v1151 = vmul.f32 %v545, %v1130
        %v1152 = vmul.f32 %v546, %v1130
        %v1153 = vmul.f32 %v547, %v1130
        %v1154 = vmul.f32 %v548, %v1130
        %v1155 = vadd.f32 %v1106, %v1131
        %v1156 = vadd.f32 %v1107, %v1132
        %v1157 = vadd.f32 %v1108, %v1133
        %v1158 = vadd.f32 %v1109, %v1134
        %v1159 = vadd.f32 %v1110, %v1135
        %v1160 = vadd.f32 %v1111, %v1136
        %v1161 = vadd.f32 %v1112, %v1137
        %v1162 = vadd.f32 %v1113, %v1138
        %v1163 = vadd.f32 %v1114, %v1139
        %v1164 = vadd.f32 %v1115, %v1140
        %v1165 = vadd.f32 %v1116, %v1141
        %v1166 = vadd.f32 %v1117, %v1142
        %v1167 = vadd.f32 %v1118, %v1143
        %v1168 = vadd.f32 %v1119, %v1144
        %v1169 = vadd.f32 %v1120, %v1145
        %v1170 = vadd.f32 %v1121, %v1146
        %v1171 = vadd.f32 %v1122, %v1147
        %v1172 = vadd.f32 %v1123, %v1148
        %v1173 = vadd.f32 %v1124, %v1149
        %v1174 = vadd.f32 %v1125, %v1150
        %v1175 = vadd.f32 %v1126, %v1151
        %v1176 = vadd.f32 %v1127, %v1152
        %v1177 = vadd.f32 %v1128, %v1153
        %v1178 = vadd.f32 %v1129, %v1154
        %v1179 = vperm.slane %v566, 2
        %v1180 = vmul.f32 %v528, %v1179
        %v1181 = vmul.f32 %v529, %v1179
        %v1182 = vmul.f32 %v530, %v1179
        %v1183 = vmul.f32 %v531, %v1179
        %v1184 = vmul.f32 %v532, %v1179
        %v1185 = vmul.f32 %v533, %v1179
        %v1186 = vmul.f32 %v534, %v1179
        %v1187 = vmul.f32 %v535, %v1179
        %v1188 = vmul.f32 %v536, %v1179
        %v1189 = vmul.f32 %v537, %v1179
        %v1190 = vmul.f32 %v538, %v1179
        %v1191 = vmul.f32 %v539, %v1179
        %v1192 = vmul.f32 %v540, %v1179
        %v1193 = vmul.f32 %v541, %v1179
        %v1194 = vmul.f32 %v542, %v1179
        %v1195 = vmul.f32 %v543, %v1179
        %v1196 = vmul.f32 %v544, %v1179
        %v1197 = vmul.f32 %v545, %v1179
        %v1198 = vmul.f32 %v546, %v1179
        %v1199 = vmul.f32 %v547, %v1179
        %v1200 = vmul.f32 %v548, %v1179
        %v1201 = vmul.f32 %v549, %v1179
        %v1202 = vmul.f32 %v550, %v1179
        %v1203 = vmul.f32 %v551, %v1179
        %v1204 = vadd.f32 %v1155, %v1180
        %v1205 = vadd.f32 %v1156, %v1181
        %v1206 = vadd.f32 %v1157, %v1182
        %v1207 = vadd.f32 %v1158, %v1183
        %v1208 = vadd.f32 %v1159, %v1184
        %v1209 = vadd.f32 %v1160, %v1185
        %v1210 = vadd.f32 %v1161, %v1186
        %v1211 = vadd.f32 %v1162, %v1187
        %v1212 = vadd.f32 %v1163, %v1188
        %v1213 = vadd.f32 %v1164, %v1189
        %v1214 = vadd.f32 %v1165, %v1190
        %v1215 = vadd.f32 %v1166, %v1191
        %v1216 = vadd.f32 %v1167, %v1192
        %v1217 = vadd.f32 %v1168, %v1193
        %v1218 = vadd.f32 %v1169, %v1194
        %v1219 = vadd.f32 %v1170, %v1195
        %v1220 = vadd.f32 %v1171, %v1196
        %v1221 = vadd.f32 %v1172, %v1197
        %v1222 = vadd.f32 %v1173, %v1198
        %v1223 = vadd.f32 %v1174, %v1199
        %v1224 = vadd.f32 %v1175, %v1200
        %v1225 = vadd.f32 %v1176, %v1201
        %v1226 = vadd.f32 %v1177, %v1202
        %v1227 = vadd.f32 %v1178, %v1203
        %v1228 = vperm.slane %v567, 2
        %v1229 = vmul.f32 %v531, %v1228
        %v1230 = vmul.f32 %v532, %v1228
        %v1231 = vmul.f32 %v533, %v1228
        %v1232 = vmul.f32 %v534, %v1228
        %v1233 = vmul.f32 %v535, %v1228
        %v1234 = vmul.f32 %v536, %v1228
        %v1235 = vmul.f32 %v537, %v1228
        %v1236 = vmul.f32 %v538, %v1228
        %v1237 = vmul.f32 %v539, %v1228
        %v1238 = vmul.f32 %v540, %v1228
        %v1239 = vmul.f32 %v541, %v1228
        %v1240 = vmul.f32 %v542, %v1228
        %v1241 = vmul.f32 %v543, %v1228
        %v1242 = vmul.f32 %v544, %v1228
        %v1243 = vmul.f32 %v545, %v1228
        %v1244 = vmul.f32 %v546, %v1228
        %v1245 = vmul.f32 %v547, %v1228
        %v1246 = vmul.f32 %v548, %v1228
        %v1247 = vmul.f32 %v549, %v1228
        %v1248 = vmul.f32 %v550, %v1228
        %v1249 = vmul.f32 %v551, %v1228
        %v1250 = vmul.f32 %v552, %v1228
        %v1251 = vmul.f32 %v553, %v1228
        %v1252 = vmul.f32 %v554, %v1228
        %v1253 = vadd.f32 %v1204, %v1229
        %v1254 = vadd.f32 %v1205, %v1230
        %v1255 = vadd.f32 %v1206, %v1231
        %v1256 = vadd.f32 %v1207, %v1232
        %v1257 = vadd.f32 %v1208, %v1233
        %v1258 = vadd.f32 %v1209, %v1234
        %v1259 = vadd.f32 %v1210, %v1235
        %v1260 = vadd.f32 %v1211, %v1236
        %v1261 = vadd.f32 %v1212, %v1237
        %v1262 = vadd.f32 %v1213, %v1238
        %v1263 = vadd.f32 %v1214, %v1239
        %v1264 = vadd.f32 %v1215, %v1240
        %v1265 = vadd.f32 %v1216, %v1241
        %v1266 = vadd.f32 %v1217, %v1242
        %v1267 = vadd.f32 %v1218, %v1243
        %v1268 = vadd.f32 %v1219, %v1244
        %v1269 = vadd.f32 %v1220, %v1245
        %v1270 = vadd.f32 %v1221, %v1246
        %v1271 = vadd.f32 %v1222, %v1247
        %v1272 = vadd.f32 %v1223, %v1248
        %v1273 = vadd.f32 %v1224, %v1249
        %v1274 = vadd.f32 %v1225, %v1250
        %v1275 = vadd.f32 %v1226, %v1251
        %v1276 = vadd.f32 %v1227, %v1252
        %v1277 = vperm.slane %v568, 2
        %v1278 = vmul.f32 %v534, %v1277
        %v1279 = vmul.f32 %v535, %v1277
        %v1280 = vmul.f32 %v536, %v1277
        %v1281 = vmul.f32 %v537, %v1277
        %v1282 = vmul.f32 %v538, %v1277
        %v1283 = vmul.f32 %v539, %v1277
        %v1284 = vmul.f32 %v540, %v1277
        %v1285 = vmul.f32 %v541, %v1277
        %v1286 = vmul.f32 %v542, %v1277
        %v1287 = vmul.f32 %v543, %v1277
        %v1288 = vmul.f32 %v544, %v1277
        %v1289 = vmul.f32 %v545, %v1277
        %v1290 = vmul.f32 %v546, %v1277
        %v1291 = vmul.f32 %v547, %v1277
        %v1292 = vmul.f32 %v548, %v1277
        %v1293 = vmul.f32 %v549, %v1277
        %v1294 = vmul.f32 %v550, %v1277
        %v1295 = vmul.f32 %v551, %v1277
        %v1296 = vmul.f32 %v552, %v1277
        %v1297 = vmul.f32 %v553, %v1277
        %v1298 = vmul.f32 %v554, %v1277
        %v1299 = vmul.f32 %v555, %v1277
        %v1300 = vmul.f32 %v556, %v1277
        %v1301 = vmul.f32 %v557, %v1277
        %v1302 = vadd.f32 %v1253, %v1278
        %v1303 = vadd.f32 %v1254, %v1279
        %v1304 = vadd.f32 %v1255, %v1280
        %v1305 = vadd.f32 %v1256, %v1281
        %v1306 = vadd.f32 %v1257, %v1282
        %v1307 = vadd.f32 %v1258, %v1283
        %v1308 = vadd.f32 %v1259, %v1284
        %v1309 = vadd.f32 %v1260, %v1285
        %v1310 = vadd.f32 %v1261, %v1286
        %v1311 = vadd.f32 %v1262, %v1287
        %v1312 = vadd.f32 %v1263, %v1288
        %v1313 = vadd.f32 %v1264, %v1289
        %v1314 = vadd.f32 %v1265, %v1290
        %v1315 = vadd.f32 %v1266, %v1291
        %v1316 = vadd.f32 %v1267, %v1292
        %v1317 = vadd.f32 %v1268, %v1293
        %v1318 = vadd.f32 %v1269, %v1294
        %v1319 = vadd.f32 %v1270, %v1295
        %v1320 = vadd.f32 %v1271, %v1296
        %v1321 = vadd.f32 %v1272, %v1297
        %v1322 = vadd.f32 %v1273, %v1298
        %v1323 = vadd.f32 %v1274, %v1299
        %v1324 = vadd.f32 %v1275, %v1300
        %v1325 = vadd.f32 %v1276, %v1301
        %v1326 = vperm.slane %v569, 2
        %v1327 = vmul.f32 %v537, %v1326
        %v1328 = vmul.f32 %v538, %v1326
        %v1329 = vmul.f32 %v539, %v1326
        %v1330 = vmul.f32 %v540, %v1326
        %v1331 = vmul.f32 %v541, %v1326
        %v1332 = vmul.f32 %v542, %v1326
        %v1333 = vmul.f32 %v543, %v1326
        %v1334 = vmul.f32 %v544, %v1326
        %v1335 = vmul.f32 %v545, %v1326
        %v1336 = vmul.f32 %v546, %v1326
        %v1337 = vmul.f32 %v547, %v1326
        %v1338 = vmul.f32 %v548, %v1326
        %v1339 = vmul.f32 %v549, %v1326
        %v1340 = vmul.f32 %v550, %v1326
        %v1341 = vmul.f32 %v551, %v1326
        %v1342 = vmul.f32 %v552, %v1326
        %v1343 = vmul.f32 %v553, %v1326
        %v1344 = vmul.f32 %v554, %v1326
        %v1345 = vmul.f32 %v555, %v1326
        %v1346 = vmul.f32 %v556, %v1326
        %v1347 = vmul.f32 %v557, %v1326
        %v1348 = vmul.f32 %v558, %v1326
        %v1349 = vmul.f32 %v559, %v1326
        %v1350 = vmul.f32 %v560, %v1326
        %v1351 = vadd.f32 %v1302, %v1327
        %v1352 = vadd.f32 %v1303, %v1328
        %v1353 = vadd.f32 %v1304, %v1329
        %v1354 = vadd.f32 %v1305, %v1330
        %v1355 = vadd.f32 %v1306, %v1331
        %v1356 = vadd.f32 %v1307, %v1332
        %v1357 = vadd.f32 %v1308, %v1333
        %v1358 = vadd.f32 %v1309, %v1334
        %v1359 = vadd.f32 %v1310, %v1335
        %v1360 = vadd.f32 %v1311, %v1336
        %v1361 = vadd.f32 %v1312, %v1337
        %v1362 = vadd.f32 %v1313, %v1338
        %v1363 = vadd.f32 %v1314, %v1339
        %v1364 = vadd.f32 %v1315, %v1340
        %v1365 = vadd.f32 %v1316, %v1341
        %v1366 = vadd.f32 %v1317, %v1342
        %v1367 = vadd.f32 %v1318, %v1343
        %v1368 = vadd.f32 %v1319, %v1344
        %v1369 = vadd.f32 %v1320, %v1345
        %v1370 = vadd.f32 %v1321, %v1346
        %v1371 = vadd.f32 %v1322, %v1347
        %v1372 = vadd.f32 %v1323, %v1348
        %v1373 = vadd.f32 %v1324, %v1349
        %v1374 = vadd.f32 %v1325, %v1350
        %v1375 = vperm.slane %v570, 2
        %v1376 = vmul.f32 %v540, %v1375
        %v1377 = vmul.f32 %v541, %v1375
        %v1378 = vmul.f32 %v542, %v1375
        %v1379 = vmul.f32 %v543, %v1375
        %v1380 = vmul.f32 %v544, %v1375
        %v1381 = vmul.f32 %v545, %v1375
        %v1382 = vmul.f32 %v546, %v1375
        %v1383 = vmul.f32 %v547, %v1375
        %v1384 = vmul.f32 %v548, %v1375
        %v1385 = vmul.f32 %v549, %v1375
        %v1386 = vmul.f32 %v550, %v1375
        %v1387 = vmul.f32 %v551, %v1375
        %v1388 = vmul.f32 %v552, %v1375
        %v1389 = vmul.f32 %v553, %v1375
        %v1390 = vmul.f32 %v554, %v1375
        %v1391 = vmul.f32 %v555, %v1375
        %v1392 = vmul.f32 %v556, %v1375
        %v1393 = vmul.f32 %v557, %v1375
        %v1394 = vmul.f32 %v558, %v1375
        %v1395 = vmul.f32 %v559, %v1375
        %v1396 = vmul.f32 %v560, %v1375
        %v1397 = vmul.f32 %v561, %v1375
        %v1398 = vmul.f32 %v562, %v1375
        %v1399 = vmul.f32 %v563, %v1375
        %v1400 = vadd.f32 %v1351, %v1376
        %v1401 = vadd.f32 %v1352, %v1377
        %v1402 = vadd.f32 %v1353, %v1378
        %v1403 = vadd.f32 %v1354, %v1379
        %v1404 = vadd.f32 %v1355, %v1380
        %v1405 = vadd.f32 %v1356, %v1381
        %v1406 = vadd.f32 %v1357, %v1382
        %v1407 = vadd.f32 %v1358, %v1383
        %v1408 = vadd.f32 %v1359, %v1384
        %v1409 = vadd.f32 %v1360, %v1385
        %v1410 = vadd.f32 %v1361, %v1386
        %v1411 = vadd.f32 %v1362, %v1387
        %v1412 = vadd.f32 %v1363, %v1388
        %v1413 = vadd.f32 %v1364, %v1389
        %v1414 = vadd.f32 %v1365, %v1390
        %v1415 = vadd.f32 %v1366, %v1391
        %v1416 = vadd.f32 %v1367, %v1392
        %v1417 = vadd.f32 %v1368, %v1393
        %v1418 = vadd.f32 %v1369, %v1394
        %v1419 = vadd.f32 %v1370, %v1395
        %v1420 = vadd.f32 %v1371, %v1396
        %v1421 = vadd.f32 %v1372, %v1397
        %v1422 = vadd.f32 %v1373, %v1398
        %v1423 = vadd.f32 %v1374, %v1399
        %v1424 = vperm.slane %v564, 3
        %v1425 = vmul.f32 %v522, %v1424
        %v1426 = vmul.f32 %v523, %v1424
        %v1427 = vmul.f32 %v524, %v1424
        %v1428 = vmul.f32 %v525, %v1424
        %v1429 = vmul.f32 %v526, %v1424
        %v1430 = vmul.f32 %v527, %v1424
        %v1431 = vmul.f32 %v528, %v1424
        %v1432 = vmul.f32 %v529, %v1424
        %v1433 = vmul.f32 %v530, %v1424
        %v1434 = vmul.f32 %v531, %v1424
        %v1435 = vmul.f32 %v532, %v1424
        %v1436 = vmul.f32 %v533, %v1424
        %v1437 = vmul.f32 %v534, %v1424
        %v1438 = vmul.f32 %v535, %v1424
        %v1439 = vmul.f32 %v536, %v1424
        %v1440 = vmul.f32 %v537, %v1424
        %v1441 = vmul.f32 %v538, %v1424
        %v1442 = vmul.f32 %v539, %v1424
        %v1443 = vmul.f32 %v540, %v1424
        %v1444 = vmul.f32 %v541, %v1424
        %v1445 = vmul.f32 %v542, %v1424
        %v1446 = vmul.f32 %v543, %v1424
        %v1447 = vmul.f32 %v544, %v1424
        %v1448 = vmul.f32 %v545, %v1424
        %v1449 = vperm.slane %v565, 3
        %v1450 = vmul.f32 %v525, %v1449
        %v1451 = vmul.f32 %v526, %v1449
        %v1452 = vmul.f32 %v527, %v1449
        %v1453 = vmul.f32 %v528, %v1449
        %v1454 = vmul.f32 %v529, %v1449
        %v1455 = vmul.f32 %v530, %v1449
        %v1456 = vmul.f32 %v531, %v1449
        %v1457 = vmul.f32 %v532, %v1449
        %v1458 = vmul.f32 %v533, %v1449
        %v1459 = vmul.f32 %v534, %v1449
        %v1460 = vmul.f32 %v535, %v1449
        %v1461 = vmul.f32 %v536, %v1449
        %v1462 = vmul.f32 %v537, %v1449
        %v1463 = vmul.f32 %v538, %v1449
        %v1464 = vmul.f32 %v539, %v1449
        %v1465 = vmul.f32 %v540, %v1449
        %v1466 = vmul.f32 %v541, %v1449
        %v1467 = vmul.f32 %v542, %v1449
        %v1468 = vmul.f32 %v543, %v1449
        %v1469 = vmul.f32 %v544, %v1449
        %v1470 = vmul.f32 %v545, %v1449
        %v1471 = vmul.f32 %v546, %v1449
        %v1472 = vmul.f32 %v547, %v1449
        %v1473 = vmul.f32 %v548, %v1449
        %v1474 = vadd.f32 %v1425, %v1450
        %v1475 = vadd.f32 %v1426, %v1451
        %v1476 = vadd.f32 %v1427, %v1452
        %v1477 = vadd.f32 %v1428, %v1453
        %v1478 = vadd.f32 %v1429, %v1454
        %v1479 = vadd.f32 %v1430, %v1455
        %v1480 = vadd.f32 %v1431, %v1456
        %v1481 = vadd.f32 %v1432, %v1457
        %v1482 = vadd.f32 %v1433, %v1458
        %v1483 = vadd.f32 %v1434, %v1459
        %v1484 = vadd.f32 %v1435, %v1460
        %v1485 = vadd.f32 %v1436, %v1461
        %v1486 = vadd.f32 %v1437, %v1462
        %v1487 = vadd.f32 %v1438, %v1463
        %v1488 = vadd.f32 %v1439, %v1464
        %v1489 = vadd.f32 %v1440, %v1465
        %v1490 = vadd.f32 %v1441, %v1466
        %v1491 = vadd.f32 %v1442, %v1467
        %v1492 = vadd.f32 %v1443, %v1468
        %v1493 = vadd.f32 %v1444, %v1469
        %v1494 = vadd.f32 %v1445, %v1470
        %v1495 = vadd.f32 %v1446, %v1471
        %v1496 = vadd.f32 %v1447, %v1472
        %v1497 = vadd.f32 %v1448, %v1473
        %v1498 = vperm.slane %v566, 3
        %v1499 = vmul.f32 %v528, %v1498
        %v1500 = vmul.f32 %v529, %v1498
        %v1501 = vmul.f32 %v530, %v1498
        %v1502 = vmul.f32 %v531, %v1498
        %v1503 = vmul.f32 %v532, %v1498
        %v1504 = vmul.f32 %v533, %v1498
        %v1505 = vmul.f32 %v534, %v1498
        %v1506 = vmul.f32 %v535, %v1498
        %v1507 = vmul.f32 %v536, %v1498
        %v1508 = vmul.f32 %v537, %v1498
        %v1509 = vmul.f32 %v538, %v1498
        %v1510 = vmul.f32 %v539, %v1498
        %v1511 = vmul.f32 %v540, %v1498
        %v1512 = vmul.f32 %v541, %v1498
        %v1513 = vmul.f32 %v542, %v1498
        %v1514 = vmul.f32 %v543, %v1498
        %v1515 = vmul.f32 %v544, %v1498
        %v1516 = vmul.f32 %v545, %v1498
        %v1517 = vmul.f32 %v546, %v1498
        %v1518 = vmul.f32 %v547, %v1498
        %v1519 = vmul.f32 %v548, %v1498
        %v1520 = vmul.f32 %v549, %v1498
        %v1521 = vmul.f32 %v550, %v1498
        %v1522 = vmul.f32 %v551, %v1498
        %v1523 = vadd.f32 %v1474, %v1499
        %v1524 = vadd.f32 %v1475, %v1500
        %v1525 = vadd.f32 %v1476, %v1501
        %v1526 = vadd.f32 %v1477, %v1502
        %v1527 = vadd.f32 %v1478, %v1503
        %v1528 = vadd.f32 %v1479, %v1504
        %v1529 = vadd.f32 %v1480, %v1505
        %v1530 = vadd.f32 %v1481, %v1506
        %v1531 = vadd.f32 %v1482, %v1507
        %v1532 = vadd.f32 %v1483, %v1508
        %v1533 = vadd.f32 %v1484, %v1509
        %v1534 = vadd.f32 %v1485, %v1510
        %v1535 = vadd.f32 %v1486, %v1511
        %v1536 = vadd.f32 %v1487, %v1512
        %v1537 = vadd.f32 %v1488, %v1513
        %v1538 = vadd.f32 %v1489, %v1514
        %v1539 = vadd.f32 %v1490, %v1515
        %v1540 = vadd.f32 %v1491, %v1516
        %v1541 = vadd.f32 %v1492, %v1517
        %v1542 = vadd.f32 %v1493, %v1518
        %v1543 = vadd.f32 %v1494, %v1519
        %v1544 = vadd.f32 %v1495, %v1520
        %v1545 = vadd.f32 %v1496, %v1521
        %v1546 = vadd.f32 %v1497, %v1522
        %v1547 = vperm.slane %v567, 3
        %v1548 = vmul.f32 %v531, %v1547
        %v1549 = vmul.f32 %v532, %v1547
        %v1550 = vmul.f32 %v533, %v1547
        %v1551 = vmul.f32 %v534, %v1547
        %v1552 = vmul.f32 %v535, %v1547
        %v1553 = vmul.f32 %v536, %v1547
        %v1554 = vmul.f32 %v537, %v1547
        %v1555 = vmul.f32 %v538, %v1547
        %v1556 = vmul.f32 %v539, %v1547
        %v1557 = vmul.f32 %v540, %v1547
        %v1558 = vmul.f32 %v541, %v1547
        %v1559 = vmul.f32 %v542, %v1547
        %v1560 = vmul.f32 %v543, %v1547
        %v1561 = vmul.f32 %v544, %v1547
        %v1562 = vmul.f32 %v545, %v1547
        %v1563 = vmul.f32 %v546, %v1547
        %v1564 = vmul.f32 %v547, %v1547
        %v1565 = vmul.f32 %v548, %v1547
        %v1566 = vmul.f32 %v549, %v1547
        %v1567 = vmul.f32 %v550, %v1547
        %v1568 = vmul.f32 %v551, %v1547
        %v1569 = vmul.f32 %v552, %v1547
        %v1570 = vmul.f32 %v553, %v1547
        %v1571 = vmul.f32 %v554, %v1547
        %v1572 = vadd.f32 %v1523, %v1548
        %v1573 = vadd.f32 %v1524, %v1549
        %v1574 = vadd.f32 %v1525, %v1550
        %v1575 = vadd.f32 %v1526, %v1551
        %v1576 = vadd.f32 %v1527, %v1552
        %v1577 = vadd.f32 %v1528, %v1553
        %v1578 = vadd.f32 %v1529, %v1554
        %v1579 = vadd.f32 %v1530, %v1555
        %v1580 = vadd.f32 %v1531, %v1556
        %v1581 = vadd.f32 %v1532, %v1557
        %v1582 = vadd.f32 %v1533, %v1558
        %v1583 = vadd.f32 %v1534, %v1559
        %v1584 = vadd.f32 %v1535, %v1560
        %v1585 = vadd.f32 %v1536, %v1561
        %v1586 = vadd.f32 %v1537, %v1562
        %v1587 = vadd.f32 %v1538, %v1563
        %v1588 = vadd.f32 %v1539, %v1564
        %v1589 = vadd.f32 %v1540, %v1565
        %v1590 = vadd.f32 %v1541, %v1566
        %v1591 = vadd.f32 %v1542, %v1567
        %v1592 = vadd.f32 %v1543, %v1568
        %v1593 = vadd.f32 %v1544, %v1569
        %v1594 = vadd.f32 %v1545, %v1570
        %v1595 = vadd.f32 %v1546, %v1571
        %v1596 = vperm.slane %v568, 3
        %v1597 = vmul.f32 %v534, %v1596
        %v1598 = vmul.f32 %v535, %v1596
        %v1599 = vmul.f32 %v536, %v1596
        %v1600 = vmul.f32 %v537, %v1596
        %v1601 = vmul.f32 %v538, %v1596
        %v1602 = vmul.f32 %v539, %v1596
        %v1603 = vmul.f32 %v540, %v1596
        %v1604 = vmul.f32 %v541, %v1596
        %v1605 = vmul.f32 %v542, %v1596
        %v1606 = vmul.f32 %v543, %v1596
        %v1607 = vmul.f32 %v544, %v1596
        %v1608 = vmul.f32 %v545, %v1596
        %v1609 = vmul.f32 %v546, %v1596
        %v1610 = vmul.f32 %v547, %v1596
        %v1611 = vmul.f32 %v548, %v1596
        %v1612 = vmul.f32 %v549, %v1596
        %v1613 = vmul.f32 %v550, %v1596
        %v1614 = vmul.f32 %v551, %v1596
        %v1615 = vmul.f32 %v552, %v1596
        %v1616 = vmul.f32 %v553, %v1596
        %v1617 = vmul.f32 %v554, %v1596
        %v1618 = vmul.f32 %v555, %v1596
        %v1619 = vmul.f32 %v556, %v1596
        %v1620 = vmul.f32 %v557, %v1596
        %v1621 = vadd.f32 %v1572, %v1597
        %v1622 = vadd.f32 %v1573, %v1598
        %v1623 = vadd.f32 %v1574, %v1599
        %v1624 = vadd.f32 %v1575, %v1600
        %v1625 = vadd.f32 %v1576, %v1601
        %v1626 = vadd.f32 %v1577, %v1602
        %v1627 = vadd.f32 %v1578, %v1603
        %v1628 = vadd.f32 %v1579, %v1604
        %v1629 = vadd.f32 %v1580, %v1605
        %v1630 = vadd.f32 %v1581, %v1606
        %v1631 = vadd.f32 %v1582, %v1607
        %v1632 = vadd.f32 %v1583, %v1608
        %v1633 = vadd.f32 %v1584, %v1609
        %v1634 = vadd.f32 %v1585, %v1610
        %v1635 = vadd.f32 %v1586, %v1611
        %v1636 = vadd.f32 %v1587, %v1612
        %v1637 = vadd.f32 %v1588, %v1613
        %v1638 = vadd.f32 %v1589, %v1614
        %v1639 = vadd.f32 %v1590, %v1615
        %v1640 = vadd.f32 %v1591, %v1616
        %v1641 = vadd.f32 %v1592, %v1617
        %v1642 = vadd.f32 %v1593, %v1618
        %v1643 = vadd.f32 %v1594, %v1619
        %v1644 = vadd.f32 %v1595, %v1620
        %v1645 = vperm.slane %v569, 3
        %v1646 = vmul.f32 %v537, %v1645
        %v1647 = vmul.f32 %v538, %v1645
        %v1648 = vmul.f32 %v539, %v1645
        %v1649 = vmul.f32 %v540, %v1645
        %v1650 = vmul.f32 %v541, %v1645
        %v1651 = vmul.f32 %v542, %v1645
        %v1652 = vmul.f32 %v543, %v1645
        %v1653 = vmul.f32 %v544, %v1645
        %v1654 = vmul.f32 %v545, %v1645
        %v1655 = vmul.f32 %v546, %v1645
        %v1656 = vmul.f32 %v547, %v1645
        %v1657 = vmul.f32 %v548, %v1645
        %v1658 = vmul.f32 %v549, %v1645
        %v1659 = vmul.f32 %v550, %v1645
        %v1660 = vmul.f32 %v551, %v1645
        %v1661 = vmul.f32 %v552, %v1645
        %v1662 = vmul.f32 %v553, %v1645
        %v1663 = vmul.f32 %v554, %v1645
        %v1664 = vmul.f32 %v555, %v1645
        %v1665 = vmul.f32 %v556, %v1645
        %v1666 = vmul.f32 %v557, %v1645
        %v1667 = vmul.f32 %v558, %v1645
        %v1668 = vmul.f32 %v559, %v1645
        %v1669 = vmul.f32 %v560, %v1645
        %v1670 = vadd.f32 %v1621, %v1646
        %v1671 = vadd.f32 %v1622, %v1647
        %v1672 = vadd.f32 %v1623, %v1648
        %v1673 = vadd.f32 %v1624, %v1649
        %v1674 = vadd.f32 %v1625, %v1650
        %v1675 = vadd.f32 %v1626, %v1651
        %v1676 = vadd.f32 %v1627, %v1652
        %v1677 = vadd.f32 %v1628, %v1653
        %v1678 = vadd.f32 %v1629, %v1654
        %v1679 = vadd.f32 %v1630, %v1655
        %v1680 = vadd.f32 %v1631, %v1656
        %v1681 = vadd.f32 %v1632, %v1657
        %v1682 = vadd.f32 %v1633, %v1658
        %v1683 = vadd.f32 %v1634, %v1659
        %v1684 = vadd.f32 %v1635, %v1660
        %v1685 = vadd.f32 %v1636, %v1661
        %v1686 = vadd.f32 %v1637, %v1662
        %v1687 = vadd.f32 %v1638, %v1663
        %v1688 = vadd.f32 %v1639, %v1664
        %v1689 = vadd.f32 %v1640, %v1665
        %v1690 = vadd.f32 %v1641, %v1666
        %v1691 = vadd.f32 %v1642, %v1667
        %v1692 = vadd.f32 %v1643, %v1668
        %v1693 = vadd.f32 %v1644, %v1669
        %v1694 = vperm.slane %v570, 3
        %v1695 = vmul.f32 %v540, %v1694
        %v1696 = vmul.f32 %v541, %v1694
        %v1697 = vmul.f32 %v542, %v1694
        %v1698 = vmul.f32 %v543, %v1694
        %v1699 = vmul.f32 %v544, %v1694
        %v1700 = vmul.f32 %v545, %v1694
        %v1701 = vmul.f32 %v546, %v1694
        %v1702 = vmul.f32 %v547, %v1694
        %v1703 = vmul.f32 %v548, %v1694
        %v1704 = vmul.f32 %v549, %v1694
        %v1705 = vmul.f32 %v550, %v1694
        %v1706 = vmul.f32 %v551, %v1694
        %v1707 = vmul.f32 %v552, %v1694
        %v1708 = vmul.f32 %v553, %v1694
        %v1709 = vmul.f32 %v554, %v1694
        %v1710 = vmul.f32 %v555, %v1694
        %v1711 = vmul.f32 %v556, %v1694
        %v1712 = vmul.f32 %v557, %v1694
        %v1713 = vmul.f32 %v558, %v1694
        %v1714 = vmul.f32 %v559, %v1694
        %v1715 = vmul.f32 %v560, %v1694
        %v1716 = vmul.f32 %v561, %v1694
        %v1717 = vmul.f32 %v562, %v1694
        %v1718 = vmul.f32 %v563, %v1694
        %v1719 = vadd.f32 %v1670, %v1695
        %v1720 = vadd.f32 %v1671, %v1696
        %v1721 = vadd.f32 %v1672, %v1697
        %v1722 = vadd.f32 %v1673, %v1698
        %v1723 = vadd.f32 %v1674, %v1699
        %v1724 = vadd.f32 %v1675, %v1700
        %v1725 = vadd.f32 %v1676, %v1701
        %v1726 = vadd.f32 %v1677, %v1702
        %v1727 = vadd.f32 %v1678, %v1703
        %v1728 = vadd.f32 %v1679, %v1704
        %v1729 = vadd.f32 %v1680, %v1705
        %v1730 = vadd.f32 %v1681, %v1706
        %v1731 = vadd.f32 %v1682, %v1707
        %v1732 = vadd.f32 %v1683, %v1708
        %v1733 = vadd.f32 %v1684, %v1709
        %v1734 = vadd.f32 %v1685, %v1710
        %v1735 = vadd.f32 %v1686, %v1711
        %v1736 = vadd.f32 %v1687, %v1712
        %v1737 = vadd.f32 %v1688, %v1713
        %v1738 = vadd.f32 %v1689, %v1714
        %v1739 = vadd.f32 %v1690, %v1715
        %v1740 = vadd.f32 %v1691, %v1716
        %v1741 = vadd.f32 %v1692, %v1717
        %v1742 = vadd.f32 %v1693, %v1718
        %v1743 = vperm.slane %v564, 4
        %v1744 = vmul.f32 %v522, %v1743
        %v1745 = vmul.f32 %v523, %v1743
        %v1746 = vmul.f32 %v524, %v1743
        %v1747 = vmul.f32 %v525, %v1743
        %v1748 = vmul.f32 %v526, %v1743
        %v1749 = vmul.f32 %v527, %v1743
        %v1750 = vmul.f32 %v528, %v1743
        %v1751 = vmul.f32 %v529, %v1743
        %v1752 = vmul.f32 %v530, %v1743
        %v1753 = vmul.f32 %v531, %v1743
        %v1754 = vmul.f32 %v532, %v1743
        %v1755 = vmul.f32 %v533, %v1743
        %v1756 = vmul.f32 %v534, %v1743
        %v1757 = vmul.f32 %v535, %v1743
        %v1758 = vmul.f32 %v536, %v1743
        %v1759 = vmul.f32 %v537, %v1743
        %v1760 = vmul.f32 %v538, %v1743
        %v1761 = vmul.f32 %v539, %v1743
        %v1762 = vmul.f32 %v540, %v1743
        %v1763 = vmul.f32 %v541, %v1743
        %v1764 = vmul.f32 %v542, %v1743
        %v1765 = vmul.f32 %v543, %v1743
        %v1766 = vmul.f32 %v544, %v1743
        %v1767 = vmul.f32 %v545, %v1743
        %v1768 = vperm.slane %v565, 4
        %v1769 = vmul.f32 %v525, %v1768
        %v1770 = vmul.f32 %v526, %v1768
        %v1771 = vmul.f32 %v527, %v1768
        %v1772 = vmul.f32 %v528, %v1768
        %v1773 = vmul.f32 %v529, %v1768
        %v1774 = vmul.f32 %v530, %v1768
        %v1775 = vmul.f32 %v531, %v1768
        %v1776 = vmul.f32 %v532, %v1768
        %v1777 = vmul.f32 %v533, %v1768
        %v1778 = vmul.f32 %v534, %v1768
        %v1779 = vmul.f32 %v535, %v1768
        %v1780 = vmul.f32 %v536, %v1768
        %v1781 = vmul.f32 %v537, %v1768
        %v1782 = vmul.f32 %v538, %v1768
        %v1783 = vmul.f32 %v539, %v1768
        %v1784 = vmul.f32 %v540, %v1768
        %v1785 = vmul.f32 %v541, %v1768
        %v1786 = vmul.f32 %v542, %v1768
        %v1787 = vmul.f32 %v543, %v1768
        %v1788 = vmul.f32 %v544, %v1768
        %v1789 = vmul.f32 %v545, %v1768
        %v1790 = vmul.f32 %v546, %v1768
        %v1791 = vmul.f32 %v547, %v1768
        %v1792 = vmul.f32 %v548, %v1768
        %v1793 = vadd.f32 %v1744, %v1769
        %v1794 = vadd.f32 %v1745, %v1770
        %v1795 = vadd.f32 %v1746, %v1771
        %v1796 = vadd.f32 %v1747, %v1772
        %v1797 = vadd.f32 %v1748, %v1773
        %v1798 = vadd.f32 %v1749, %v1774
        %v1799 = vadd.f32 %v1750, %v1775
        %v1800 = vadd.f32 %v1751, %v1776
        %v1801 = vadd.f32 %v1752, %v1777
        %v1802 = vadd.f32 %v1753, %v1778
        %v1803 = vadd.f32 %v1754, %v1779
        %v1804 = vadd.f32 %v1755, %v1780
        %v1805 = vadd.f32 %v1756, %v1781
        %v1806 = vadd.f32 %v1757, %v1782
        %v1807 = vadd.f32 %v1758, %v1783
        %v1808 = vadd.f32 %v1759, %v1784
        %v1809 = vadd.f32 %v1760, %v1785
        %v1810 = vadd.f32 %v1761, %v1786
        %v1811 = vadd.f32 %v1762, %v1787
        %v1812 = vadd.f32 %v1763, %v1788
        %v1813 = vadd.f32 %v1764, %v1789
        %v1814 = vadd.f32 %v1765, %v1790
        %v1815 = vadd.f32 %v1766, %v1791
        %v1816 = vadd.f32 %v1767, %v1792
        %v1817 = vperm.slane %v566, 4
        %v1818 = vmul.f32 %v528, %v1817
        %v1819 = vmul.f32 %v529, %v1817
        %v1820 = vmul.f32 %v530, %v1817
        %v1821 = vmul.f32 %v531, %v1817
        %v1822 = vmul.f32 %v532, %v1817
        %v1823 = vmul.f32 %v533, %v1817
        %v1824 = vmul.f32 %v534, %v1817
        %v1825 = vmul.f32 %v535, %v1817
        %v1826 = vmul.f32 %v536, %v1817
        %v1827 = vmul.f32 %v537, %v1817
        %v1828 = vmul.f32 %v538, %v1817
        %v1829 = vmul.f32 %v539, %v1817
        %v1830 = vmul.f32 %v540, %v1817
        %v1831 = vmul.f32 %v541, %v1817
        %v1832 = vmul.f32 %v542, %v1817
        %v1833 = vmul.f32 %v543, %v1817
        %v1834 = vmul.f32 %v544, %v1817
        %v1835 = vmul.f32 %v545, %v1817
        %v1836 = vmul.f32 %v546, %v1817
        %v1837 = vmul.f32 %v547, %v1817
        %v1838 = vmul.f32 %v548, %v1817
        %v1839 = vmul.f32 %v549, %v1817
        %v1840 = vmul.f32 %v550, %v1817
        %v1841 = vmul.f32 %v551, %v1817
        %v1842 = vadd.f32 %v1793, %v1818
        %v1843 = vadd.f32 %v1794, %v1819
        %v1844 = vadd.f32 %v1795, %v1820
        %v1845 = vadd.f32 %v1796, %v1821
        %v1846 = vadd.f32 %v1797, %v1822
        %v1847 = vadd.f32 %v1798, %v1823
        %v1848 = vadd.f32 %v1799, %v1824
        %v1849 = vadd.f32 %v1800, %v1825
        %v1850 = vadd.f32 %v1801, %v1826
        %v1851 = vadd.f32 %v1802, %v1827
        %v1852 = vadd.f32 %v1803, %v1828
        %v1853 = vadd.f32 %v1804, %v1829
        %v1854 = vadd.f32 %v1805, %v1830
        %v1855 = vadd.f32 %v1806, %v1831
        %v1856 = vadd.f32 %v1807, %v1832
        %v1857 = vadd.f32 %v1808, %v1833
        %v1858 = vadd.f32 %v1809, %v1834
        %v1859 = vadd.f32 %v1810, %v1835
        %v1860 = vadd.f32 %v1811, %v1836
        %v1861 = vadd.f32 %v1812, %v1837
        %v1862 = vadd.f32 %v1813, %v1838
        %v1863 = vadd.f32 %v1814, %v1839
        %v1864 = vadd.f32 %v1815, %v1840
        %v1865 = vadd.f32 %v1816, %v1841
        %v1866 = vperm.slane %v567, 4
        %v1867 = vmul.f32 %v531, %v1866
        %v1868 = vmul.f32 %v532, %v1866
        %v1869 = vmul.f32 %v533, %v1866
        %v1870 = vmul.f32 %v534, %v1866
        %v1871 = vmul.f32 %v535, %v1866
        %v1872 = vmul.f32 %v536, %v1866
        %v1873 = vmul.f32 %v537, %v1866
        %v1874 = vmul.f32 %v538, %v1866
        %v1875 = vmul.f32 %v539, %v1866
        %v1876 = vmul.f32 %v540, %v1866
        %v1877 = vmul.f32 %v541, %v1866
        %v1878 = vmul.f32 %v542, %v1866
        %v1879 = vmul.f32 %v543, %v1866
        %v1880 = vmul.f32 %v544, %v1866
        %v1881 = vmul.f32 %v545, %v1866
        %v1882 = vmul.f32 %v546, %v1866
        %v1883 = vmul.f32 %v547, %v1866
        %v1884 = vmul.f32 %v548, %v1866
        %v1885 = vmul.f32 %v549, %v1866
        %v1886 = vmul.f32 %v550, %v1866
        %v1887 = vmul.f32 %v551, %v1866
        %v1888 = vmul.f32 %v552, %v1866
        %v1889 = vmul.f32 %v553, %v1866
        %v1890 = vmul.f32 %v554, %v1866
        %v1891 = vadd.f32 %v1842, %v1867
        %v1892 = vadd.f32 %v1843, %v1868
        %v1893 = vadd.f32 %v1844, %v1869
        %v1894 = vadd.f32 %v1845, %v1870
        %v1895 = vadd.f32 %v1846, %v1871
        %v1896 = vadd.f32 %v1847, %v1872
        %v1897 = vadd.f32 %v1848, %v1873
        %v1898 = vadd.f32 %v1849, %v1874
        %v1899 = vadd.f32 %v1850, %v1875
        %v1900 = vadd.f32 %v1851, %v1876
        %v1901 = vadd.f32 %v1852, %v1877
        %v1902 = vadd.f32 %v1853, %v1878
        %v1903 = vadd.f32 %v1854, %v1879
        %v1904 = vadd.f32 %v1855, %v1880
        %v1905 = vadd.f32 %v1856, %v1881
        %v1906 = vadd.f32 %v1857, %v1882
        %v1907 = vadd.f32 %v1858, %v1883
        %v1908 = vadd.f32 %v1859, %v1884
        %v1909 = vadd.f32 %v1860, %v1885
        %v1910 = vadd.f32 %v1861, %v1886
        %v1911 = vadd.f32 %v1862, %v1887
        %v1912 = vadd.f32 %v1863, %v1888
        %v1913 = vadd.f32 %v1864, %v1889
        %v1914 = vadd.f32 %v1865, %v1890
        %v1915 = vperm.slane %v568, 4
        %v1916 = vmul.f32 %v534, %v1915
        %v1917 = vmul.f32 %v535, %v1915
        %v1918 = vmul.f32 %v536, %v1915
        %v1919 = vmul.f32 %v537, %v1915
        %v1920 = vmul.f32 %v538, %v1915
        %v1921 = vmul.f32 %v539, %v1915
        %v1922 = vmul.f32 %v540, %v1915
        %v1923 = vmul.f32 %v541, %v1915
        %v1924 = vmul.f32 %v542, %v1915
        %v1925 = vmul.f32 %v543, %v1915
        %v1926 = vmul.f32 %v544, %v1915
        %v1927 = vmul.f32 %v545, %v1915
        %v1928 = vmul.f32 %v546, %v1915
        %v1929 = vmul.f32 %v547, %v1915
        %v1930 = vmul.f32 %v548, %v1915
        %v1931 = vmul.f32 %v549, %v1915
        %v1932 = vmul.f32 %v550, %v1915
        %v1933 = vmul.f32 %v551, %v1915
        %v1934 = vmul.f32 %v552, %v1915
        %v1935 = vmul.f32 %v553, %v1915
        %v1936 = vmul.f32 %v554, %v1915
        %v1937 = vmul.f32 %v555, %v1915
        %v1938 = vmul.f32 %v556, %v1915
        %v1939 = vmul.f32 %v557, %v1915
        %v1940 = vadd.f32 %v1891, %v1916
        %v1941 = vadd.f32 %v1892, %v1917
        %v1942 = vadd.f32 %v1893, %v1918
        %v1943 = vadd.f32 %v1894, %v1919
        %v1944 = vadd.f32 %v1895, %v1920
        %v1945 = vadd.f32 %v1896, %v1921
        %v1946 = vadd.f32 %v1897, %v1922
        %v1947 = vadd.f32 %v1898, %v1923
        %v1948 = vadd.f32 %v1899, %v1924
        %v1949 = vadd.f32 %v1900, %v1925
        %v1950 = vadd.f32 %v1901, %v1926
        %v1951 = vadd.f32 %v1902, %v1927
        %v1952 = vadd.f32 %v1903, %v1928
        %v1953 = vadd.f32 %v1904, %v1929
        %v1954 = vadd.f32 %v1905, %v1930
        %v1955 = vadd.f32 %v1906, %v1931
        %v1956 = vadd.f32 %v1907, %v1932
        %v1957 = vadd.f32 %v1908, %v1933
        %v1958 = vadd.f32 %v1909, %v1934
        %v1959 = vadd.f32 %v1910, %v1935
        %v1960 = vadd.f32 %v1911, %v1936
        %v1961 = vadd.f32 %v1912, %v1937
        %v1962 = vadd.f32 %v1913, %v1938
        %v1963 = vadd.f32 %v1914, %v1939
        %v1964 = vperm.slane %v569, 4
        %v1965 = vmul.f32 %v537, %v1964
        %v1966 = vmul.f32 %v538, %v1964
        %v1967 = vmul.f32 %v539, %v1964
        %v1968 = vmul.f32 %v540, %v1964
        %v1969 = vmul.f32 %v541, %v1964
        %v1970 = vmul.f32 %v542, %v1964
        %v1971 = vmul.f32 %v543, %v1964
        %v1972 = vmul.f32 %v544, %v1964
        %v1973 = vmul.f32 %v545, %v1964
        %v1974 = vmul.f32 %v546, %v1964
        %v1975 = vmul.f32 %v547, %v1964
        %v1976 = vmul.f32 %v548, %v1964
        %v1977 = vmul.f32 %v549, %v1964
        %v1978 = vmul.f32 %v550, %v1964
        %v1979 = vmul.f32 %v551, %v1964
        %v1980 = vmul.f32 %v552, %v1964
        %v1981 = vmul.f32 %v553, %v1964
        %v1982 = vmul.f32 %v554, %v1964
        %v1983 = vmul.f32 %v555, %v1964
        %v1984 = vmul.f32 %v556, %v1964
        %v1985 = vmul.f32 %v557, %v1964
        %v1986 = vmul.f32 %v558, %v1964
        %v1987 = vmul.f32 %v559, %v1964
        %v1988 = vmul.f32 %v560, %v1964
        %v1989 = vadd.f32 %v1940, %v1965
        %v1990 = vadd.f32 %v1941, %v1966
        %v1991 = vadd.f32 %v1942, %v1967
        %v1992 = vadd.f32 %v1943, %v1968
        %v1993 = vadd.f32 %v1944, %v1969
        %v1994 = vadd.f32 %v1945, %v1970
        %v1995 = vadd.f32 %v1946, %v1971
        %v1996 = vadd.f32 %v1947, %v1972
        %v1997 = vadd.f32 %v1948, %v1973
        %v1998 = vadd.f32 %v1949, %v1974
        %v1999 = vadd.f32 %v1950, %v1975
        %v2000 = vadd.f32 %v1951, %v1976
        %v2001 = vadd.f32 %v1952, %v1977
        %v2002 = vadd.f32 %v1953, %v1978
        %v2003 = vadd.f32 %v1954, %v1979
        %v2004 = vadd.f32 %v1955, %v1980
        %v2005 = vadd.f32 %v1956, %v1981
        %v2006 = vadd.f32 %v1957, %v1982
        %v2007 = vadd.f32 %v1958, %v1983
        %v2008 = vadd.f32 %v1959, %v1984
        %v2009 = vadd.f32 %v1960, %v1985
        %v2010 = vadd.f32 %v1961, %v1986
        %v2011 = vadd.f32 %v1962, %v1987
        %v2012 = vadd.f32 %v1963, %v1988
        %v2013 = vperm.slane %v570, 4
        %v2014 = vmul.f32 %v540, %v2013
        %v2015 = vmul.f32 %v541, %v2013
        %v2016 = vmul.f32 %v542, %v2013
        %v2017 = vmul.f32 %v543, %v2013
        %v2018 = vmul.f32 %v544, %v2013
        %v2019 = vmul.f32 %v545, %v2013
        %v2020 = vmul.f32 %v546, %v2013
        %v2021 = vmul.f32 %v547, %v2013
        %v2022 = vmul.f32 %v548, %v2013
        %v2023 = vmul.f32 %v549, %v2013
        %v2024 = vmul.f32 %v550, %v2013
        %v2025 = vmul.f32 %v551, %v2013
        %v2026 = vmul.f32 %v552, %v2013
        %v2027 = vmul.f32 %v553, %v2013
        %v2028 = vmul.f32 %v554, %v2013
        %v2029 = vmul.f32 %v555, %v2013
        %v2030 = vmul.f32 %v556, %v2013
        %v2031 = vmul.f32 %v557, %v2013
        %v2032 = vmul.f32 %v558, %v2013
        %v2033 = vmul.f32 %v559, %v2013
        %v2034 = vmul.f32 %v560, %v2013
        %v2035 = vmul.f32 %v561, %v2013
        %v2036 = vmul.f32 %v562, %v2013
        %v2037 = vmul.f32 %v563, %v2013
        %v2038 = vadd.f32 %v1989, %v2014
        %v2039 = vadd.f32 %v1990, %v2015
        %v2040 = vadd.f32 %v1991, %v2016
        %v2041 = vadd.f32 %v1992, %v2017
        %v2042 = vadd.f32 %v1993, %v2018
        %v2043 = vadd.f32 %v1994, %v2019
        %v2044 = vadd.f32 %v1995, %v2020
        %v2045 = vadd.f32 %v1996, %v2021
        %v2046 = vadd.f32 %v1997, %v2022
        %v2047 = vadd.f32 %v1998, %v2023
        %v2048 = vadd.f32 %v1999, %v2024
        %v2049 = vadd.f32 %v2000, %v2025
        %v2050 = vadd.f32 %v2001, %v2026
        %v2051 = vadd.f32 %v2002, %v2027
        %v2052 = vadd.f32 %v2003, %v2028
        %v2053 = vadd.f32 %v2004, %v2029
        %v2054 = vadd.f32 %v2005, %v2030
        %v2055 = vadd.f32 %v2006, %v2031
        %v2056 = vadd.f32 %v2007, %v2032
        %v2057 = vadd.f32 %v2008, %v2033
        %v2058 = vadd.f32 %v2009, %v2034
        %v2059 = vadd.f32 %v2010, %v2035
        %v2060 = vadd.f32 %v2011, %v2036
        %v2061 = vadd.f32 %v2012, %v2037
        %v2062 = vperm.slane %v564, 5
        %v2063 = vmul.f32 %v522, %v2062
        %v2064 = vmul.f32 %v523, %v2062
        %v2065 = vmul.f32 %v524, %v2062
        %v2066 = vmul.f32 %v525, %v2062
        %v2067 = vmul.f32 %v526, %v2062
        %v2068 = vmul.f32 %v527, %v2062
        %v2069 = vmul.f32 %v528, %v2062
        %v2070 = vmul.f32 %v529, %v2062
        %v2071 = vmul.f32 %v530, %v2062
        %v2072 = vmul.f32 %v531, %v2062
        %v2073 = vmul.f32 %v532, %v2062
        %v2074 = vmul.f32 %v533, %v2062
        %v2075 = vmul.f32 %v534, %v2062
        %v2076 = vmul.f32 %v535, %v2062
        %v2077 = vmul.f32 %v536, %v2062
        %v2078 = vmul.f32 %v537, %v2062
        %v2079 = vmul.f32 %v538, %v2062
        %v2080 = vmul.f32 %v539, %v2062
        %v2081 = vmul.f32 %v540, %v2062
        %v2082 = vmul.f32 %v541, %v2062
        %v2083 = vmul.f32 %v542, %v2062
        %v2084 = vmul.f32 %v543, %v2062
        %v2085 = vmul.f32 %v544, %v2062
        %v2086 = vmul.f32 %v545, %v2062
        %v2087 = vperm.slane %v565, 5
        %v2088 = vmul.f32 %v525, %v2087
        %v2089 = vmul.f32 %v526, %v2087
        %v2090 = vmul.f32 %v527, %v2087
        %v2091 = vmul.f32 %v528, %v2087
        %v2092 = vmul.f32 %v529, %v2087
        %v2093 = vmul.f32 %v530, %v2087
        %v2094 = vmul.f32 %v531, %v2087
        %v2095 = vmul.f32 %v532, %v2087
        %v2096 = vmul.f32 %v533, %v2087
        %v2097 = vmul.f32 %v534, %v2087
        %v2098 = vmul.f32 %v535, %v2087
        %v2099 = vmul.f32 %v536, %v2087
        %v2100 = vmul.f32 %v537, %v2087
        %v2101 = vmul.f32 %v538, %v2087
        %v2102 = vmul.f32 %v539, %v2087
        %v2103 = vmul.f32 %v540, %v2087
        %v2104 = vmul.f32 %v541, %v2087
        %v2105 = vmul.f32 %v542, %v2087
        %v2106 = vmul.f32 %v543, %v2087
        %v2107 = vmul.f32 %v544, %v2087
        %v2108 = vmul.f32 %v545, %v2087
        %v2109 = vmul.f32 %v546, %v2087
        %v2110 = vmul.f32 %v547, %v2087
        %v2111 = vmul.f32 %v548, %v2087
        %v2112 = vadd.f32 %v2063, %v2088
        %v2113 = vadd.f32 %v2064, %v2089
        %v2114 = vadd.f32 %v2065, %v2090
        %v2115 = vadd.f32 %v2066, %v2091
        %v2116 = vadd.f32 %v2067, %v2092
        %v2117 = vadd.f32 %v2068, %v2093
        %v2118 = vadd.f32 %v2069, %v2094
        %v2119 = vadd.f32 %v2070, %v2095
        %v2120 = vadd.f32 %v2071, %v2096
        %v2121 = vadd.f32 %v2072, %v2097
        %v2122 = vadd.f32 %v2073, %v2098
        %v2123 = vadd.f32 %v2074, %v2099
        %v2124 = vadd.f32 %v2075, %v2100
        %v2125 = vadd.f32 %v2076, %v2101
        %v2126 = vadd.f32 %v2077, %v2102
        %v2127 = vadd.f32 %v2078, %v2103
        %v2128 = vadd.f32 %v2079, %v2104
        %v2129 = vadd.f32 %v2080, %v2105
        %v2130 = vadd.f32 %v2081, %v2106
        %v2131 = vadd.f32 %v2082, %v2107
        %v2132 = vadd.f32 %v2083, %v2108
        %v2133 = vadd.f32 %v2084, %v2109
        %v2134 = vadd.f32 %v2085, %v2110
        %v2135 = vadd.f32 %v2086, %v2111
        %v2136 = vperm.slane %v566, 5
        %v2137 = vmul.f32 %v528, %v2136
        %v2138 = vmul.f32 %v529, %v2136
        %v2139 = vmul.f32 %v530, %v2136
        %v2140 = vmul.f32 %v531, %v2136
        %v2141 = vmul.f32 %v532, %v2136
        %v2142 = vmul.f32 %v533, %v2136
        %v2143 = vmul.f32 %v534, %v2136
        %v2144 = vmul.f32 %v535, %v2136
        %v2145 = vmul.f32 %v536, %v2136
        %v2146 = vmul.f32 %v537, %v2136
        %v2147 = vmul.f32 %v538, %v2136
        %v2148 = vmul.f32 %v539, %v2136
        %v2149 = vmul.f32 %v540, %v2136
        %v2150 = vmul.f32 %v541, %v2136
        %v2151 = vmul.f32 %v542, %v2136
        %v2152 = vmul.f32 %v543, %v2136
        %v2153 = vmul.f32 %v544, %v2136
        %v2154 = vmul.f32 %v545, %v2136
        %v2155 = vmul.f32 %v546, %v2136
        %v2156 = vmul.f32 %v547, %v2136
        %v2157 = vmul.f32 %v548, %v2136
        %v2158 = vmul.f32 %v549, %v2136
        %v2159 = vmul.f32 %v550, %v2136
        %v2160 = vmul.f32 %v551, %v2136
        %v2161 = vadd.f32 %v2112, %v2137
        %v2162 = vadd.f32 %v2113, %v2138
        %v2163 = vadd.f32 %v2114, %v2139
        %v2164 = vadd.f32 %v2115, %v2140
        %v2165 = vadd.f32 %v2116, %v2141
        %v2166 = vadd.f32 %v2117, %v2142
        %v2167 = vadd.f32 %v2118, %v2143
        %v2168 = vadd.f32 %v2119, %v2144
        %v2169 = vadd.f32 %v2120, %v2145
        %v2170 = vadd.f32 %v2121, %v2146
        %v2171 = vadd.f32 %v2122, %v2147
        %v2172 = vadd.f32 %v2123, %v2148
        %v2173 = vadd.f32 %v2124, %v2149
        %v2174 = vadd.f32 %v2125, %v2150
        %v2175 = vadd.f32 %v2126, %v2151
        %v2176 = vadd.f32 %v2127, %v2152
        %v2177 = vadd.f32 %v2128, %v2153
        %v2178 = vadd.f32 %v2129, %v2154
        %v2179 = vadd.f32 %v2130, %v2155
        %v2180 = vadd.f32 %v2131, %v2156
        %v2181 = vadd.f32 %v2132, %v2157
        %v2182 = vadd.f32 %v2133, %v2158
        %v2183 = vadd.f32 %v2134, %v2159
        %v2184 = vadd.f32 %v2135, %v2160
        %v2185 = vperm.slane %v567, 5
        %v2186 = vmul.f32 %v531, %v2185
        %v2187 = vmul.f32 %v532, %v2185
        %v2188 = vmul.f32 %v533, %v2185
        %v2189 = vmul.f32 %v534, %v2185
        %v2190 = vmul.f32 %v535, %v2185
        %v2191 = vmul.f32 %v536, %v2185
        %v2192 = vmul.f32 %v537, %v2185
        %v2193 = vmul.f32 %v538, %v2185
        %v2194 = vmul.f32 %v539, %v2185
        %v2195 = vmul.f32 %v540, %v2185
        %v2196 = vmul.f32 %v541, %v2185
        %v2197 = vmul.f32 %v542, %v2185
        %v2198 = vmul.f32 %v543, %v2185
        %v2199 = vmul.f32 %v544, %v2185
        %v2200 = vmul.f32 %v545, %v2185
        %v2201 = vmul.f32 %v546, %v2185
        %v2202 = vmul.f32 %v547, %v2185
        %v2203 = vmul.f32 %v548, %v2185
        %v2204 = vmul.f32 %v549, %v2185
        %v2205 = vmul.f32 %v550, %v2185
        %v2206 = vmul.f32 %v551, %v2185
        %v2207 = vmul.f32 %v552, %v2185
        %v2208 = vmul.f32 %v553, %v2185
        %v2209 = vmul.f32 %v554, %v2185
        %v2210 = vadd.f32 %v2161, %v2186
        %v2211 = vadd.f32 %v2162, %v2187
        %v2212 = vadd.f32 %v2163, %v2188
        %v2213 = vadd.f32 %v2164, %v2189
        %v2214 = vadd.f32 %v2165, %v2190
        %v2215 = vadd.f32 %v2166, %v2191
        %v2216 = vadd.f32 %v2167, %v2192
        %v2217 = vadd.f32 %v2168, %v2193
        %v2218 = vadd.f32 %v2169, %v2194
        %v2219 = vadd.f32 %v2170, %v2195
        %v2220 = vadd.f32 %v2171, %v2196
        %v2221 = vadd.f32 %v2172, %v2197
        %v2222 = vadd.f32 %v2173, %v2198
        %v2223 = vadd.f32 %v2174, %v2199
        %v2224 = vadd.f32 %v2175, %v2200
        %v2225 = vadd.f32 %v2176, %v2201
        %v2226 = vadd.f32 %v2177, %v2202
        %v2227 = vadd.f32 %v2178, %v2203
        %v2228 = vadd.f32 %v2179, %v2204
        %v2229 = vadd.f32 %v2180, %v2205
        %v2230 = vadd.f32 %v2181, %v2206
        %v2231 = vadd.f32 %v2182, %v2207
        %v2232 = vadd.f32 %v2183, %v2208
        %v2233 = vadd.f32 %v2184, %v2209
        %v2234 = vperm.slane %v568, 5
        %v2235 = vmul.f32 %v534, %v2234
        %v2236 = vmul.f32 %v535, %v2234
        %v2237 = vmul.f32 %v536, %v2234
        %v2238 = vmul.f32 %v537, %v2234
        %v2239 = vmul.f32 %v538, %v2234
        %v2240 = vmul.f32 %v539, %v2234
        %v2241 = vmul.f32 %v540, %v2234
        %v2242 = vmul.f32 %v541, %v2234
        %v2243 = vmul.f32 %v542, %v2234
        %v2244 = vmul.f32 %v543, %v2234
        %v2245 = vmul.f32 %v544, %v2234
        %v2246 = vmul.f32 %v545, %v2234
        %v2247 = vmul.f32 %v546, %v2234
        %v2248 = vmul.f32 %v547, %v2234
        %v2249 = vmul.f32 %v548, %v2234
        %v2250 = vmul.f32 %v549, %v2234
        %v2251 = vmul.f32 %v550, %v2234
        %v2252 = vmul.f32 %v551, %v2234
        %v2253 = vmul.f32 %v552, %v2234
        %v2254 = vmul.f32 %v553, %v2234
        %v2255 = vmul.f32 %v554, %v2234
        %v2256 = vmul.f32 %v555, %v2234
        %v2257 = vmul.f32 %v556, %v2234
        %v2258 = vmul.f32 %v557, %v2234
        %v2259 = vadd.f32 %v2210, %v2235
        %v2260 = vadd.f32 %v2211, %v2236
        %v2261 = vadd.f32 %v2212, %v2237
        %v2262 = vadd.f32 %v2213, %v2238
        %v2263 = vadd.f32 %v2214, %v2239
        %v2264 = vadd.f32 %v2215, %v2240
        %v2265 = vadd.f32 %v2216, %v2241
        %v2266 = vadd.f32 %v2217, %v2242
        %v2267 = vadd.f32 %v2218, %v2243
        %v2268 = vadd.f32 %v2219, %v2244
        %v2269 = vadd.f32 %v2220, %v2245
        %v2270 = vadd.f32 %v2221, %v2246
        %v2271 = vadd.f32 %v2222, %v2247
        %v2272 = vadd.f32 %v2223, %v2248
        %v2273 = vadd.f32 %v2224, %v2249
        %v2274 = vadd.f32 %v2225, %v2250
        %v2275 = vadd.f32 %v2226, %v2251
        %v2276 = vadd.f32 %v2227, %v2252
        %v2277 = vadd.f32 %v2228, %v2253
        %v2278 = vadd.f32 %v2229, %v2254
        %v2279 = vadd.f32 %v2230, %v2255
        %v2280 = vadd.f32 %v2231, %v2256
        %v2281 = vadd.f32 %v2232, %v2257
        %v2282 = vadd.f32 %v2233, %v2258
        %v2283 = vperm.slane %v569, 5
        %v2284 = vmul.f32 %v537, %v2283
        %v2285 = vmul.f32 %v538, %v2283
        %v2286 = vmul.f32 %v539, %v2283
        %v2287 = vmul.f32 %v540, %v2283
        %v2288 = vmul.f32 %v541, %v2283
        %v2289 = vmul.f32 %v542, %v2283
        %v2290 = vmul.f32 %v543, %v2283
        %v2291 = vmul.f32 %v544, %v2283
        %v2292 = vmul.f32 %v545, %v2283
        %v2293 = vmul.f32 %v546, %v2283
        %v2294 = vmul.f32 %v547, %v2283
        %v2295 = vmul.f32 %v548, %v2283
        %v2296 = vmul.f32 %v549, %v2283
        %v2297 = vmul.f32 %v550, %v2283
        %v2298 = vmul.f32 %v551, %v2283
        %v2299 = vmul.f32 %v552, %v2283
        %v2300 = vmul.f32 %v553, %v2283
        %v2301 = vmul.f32 %v554, %v2283
        %v2302 = vmul.f32 %v555, %v2283
        %v2303 = vmul.f32 %v556, %v2283
        %v2304 = vmul.f32 %v557, %v2283
        %v2305 = vmul.f32 %v558, %v2283
        %v2306 = vmul.f32 %v559, %v2283
        %v2307 = vmul.f32 %v560, %v2283
        %v2308 = vadd.f32 %v2259, %v2284
        %v2309 = vadd.f32 %v2260, %v2285
        %v2310 = vadd.f32 %v2261, %v2286
        %v2311 = vadd.f32 %v2262, %v2287
        %v2312 = vadd.f32 %v2263, %v2288
        %v2313 = vadd.f32 %v2264, %v2289
        %v2314 = vadd.f32 %v2265, %v2290
        %v2315 = vadd.f32 %v2266, %v2291
        %v2316 = vadd.f32 %v2267, %v2292
        %v2317 = vadd.f32 %v2268, %v2293
        %v2318 = vadd.f32 %v2269, %v2294
        %v2319 = vadd.f32 %v2270, %v2295
        %v2320 = vadd.f32 %v2271, %v2296
        %v2321 = vadd.f32 %v2272, %v2297
        %v2322 = vadd.f32 %v2273, %v2298
        %v2323 = vadd.f32 %v2274, %v2299
        %v2324 = vadd.f32 %v2275, %v2300
        %v2325 = vadd.f32 %v2276, %v2301
        %v2326 = vadd.f32 %v2277, %v2302
        %v2327 = vadd.f32 %v2278, %v2303
        %v2328 = vadd.f32 %v2279, %v2304
        %v2329 = vadd.f32 %v2280, %v2305
        %v2330 = vadd.f32 %v2281, %v2306
        %v2331 = vadd.f32 %v2282, %v2307
        %v2332 = vperm.slane %v570, 5
        %v2333 = vmul.f32 %v540, %v2332
        %v2334 = vmul.f32 %v541, %v2332
        %v2335 = vmul.f32 %v542, %v2332
        %v2336 = vmul.f32 %v543, %v2332
        %v2337 = vmul.f32 %v544, %v2332
        %v2338 = vmul.f32 %v545, %v2332
        %v2339 = vmul.f32 %v546, %v2332
        %v2340 = vmul.f32 %v547, %v2332
        %v2341 = vmul.f32 %v548, %v2332
        %v2342 = vmul.f32 %v549, %v2332
        %v2343 = vmul.f32 %v550, %v2332
        %v2344 = vmul.f32 %v551, %v2332
        %v2345 = vmul.f32 %v552, %v2332
        %v2346 = vmul.f32 %v553, %v2332
        %v2347 = vmul.f32 %v554, %v2332
        %v2348 = vmul.f32 %v555, %v2332
        %v2349 = vmul.f32 %v556, %v2332
        %v2350 = vmul.f32 %v557, %v2332
        %v2351 = vmul.f32 %v558, %v2332
        %v2352 = vmul.f32 %v559, %v2332
        %v2353 = vmul.f32 %v560, %v2332
        %v2354 = vmul.f32 %v561, %v2332
        %v2355 = vmul.f32 %v562, %v2332
        %v2356 = vmul.f32 %v563, %v2332
        %v2357 = vadd.f32 %v2308, %v2333
        %v2358 = vadd.f32 %v2309, %v2334
        %v2359 = vadd.f32 %v2310, %v2335
        %v2360 = vadd.f32 %v2311, %v2336
        %v2361 = vadd.f32 %v2312, %v2337
        %v2362 = vadd.f32 %v2313, %v2338
        %v2363 = vadd.f32 %v2314, %v2339
        %v2364 = vadd.f32 %v2315, %v2340
        %v2365 = vadd.f32 %v2316, %v2341
        %v2366 = vadd.f32 %v2317, %v2342
        %v2367 = vadd.f32 %v2318, %v2343
        %v2368 = vadd.f32 %v2319, %v2344
        %v2369 = vadd.f32 %v2320, %v2345
        %v2370 = vadd.f32 %v2321, %v2346
        %v2371 = vadd.f32 %v2322, %v2347
        %v2372 = vadd.f32 %v2323, %v2348
        %v2373 = vadd.f32 %v2324, %v2349
        %v2374 = vadd.f32 %v2325, %v2350
        %v2375 = vadd.f32 %v2326, %v2351
        %v2376 = vadd.f32 %v2327, %v2352
        %v2377 = vadd.f32 %v2328, %v2353
        %v2378 = vadd.f32 %v2329, %v2354
        %v2379 = vadd.f32 %v2330, %v2355
        %v2380 = vadd.f32 %v2331, %v2356
        %v2381 = vperm.slane %v564, 6
        %v2382 = vmul.f32 %v522, %v2381
        %v2383 = vmul.f32 %v523, %v2381
        %v2384 = vmul.f32 %v524, %v2381
        %v2385 = vmul.f32 %v525, %v2381
        %v2386 = vmul.f32 %v526, %v2381
        %v2387 = vmul.f32 %v527, %v2381
        %v2388 = vmul.f32 %v528, %v2381
        %v2389 = vmul.f32 %v529, %v2381
        %v2390 = vmul.f32 %v530, %v2381
        %v2391 = vmul.f32 %v531, %v2381
        %v2392 = vmul.f32 %v532, %v2381
        %v2393 = vmul.f32 %v533, %v2381
        %v2394 = vmul.f32 %v534, %v2381
        %v2395 = vmul.f32 %v535, %v2381
        %v2396 = vmul.f32 %v536, %v2381
        %v2397 = vmul.f32 %v537, %v2381
        %v2398 = vmul.f32 %v538, %v2381
        %v2399 = vmul.f32 %v539, %v2381
        %v2400 = vmul.f32 %v540, %v2381
        %v2401 = vmul.f32 %v541, %v2381
        %v2402 = vmul.f32 %v542, %v2381
        %v2403 = vmul.f32 %v543, %v2381
        %v2404 = vmul.f32 %v544, %v2381
        %v2405 = vmul.f32 %v545, %v2381
        %v2406 = vperm.slane %v565, 6
        %v2407 = vmul.f32 %v525, %v2406
        %v2408 = vmul.f32 %v526, %v2406
        %v2409 = vmul.f32 %v527, %v2406
        %v2410 = vmul.f32 %v528, %v2406
        %v2411 = vmul.f32 %v529, %v2406
        %v2412 = vmul.f32 %v530, %v2406
        %v2413 = vmul.f32 %v531, %v2406
        %v2414 = vmul.f32 %v532, %v2406
        %v2415 = vmul.f32 %v533, %v2406
        %v2416 = vmul.f32 %v534, %v2406
        %v2417 = vmul.f32 %v535, %v2406
        %v2418 = vmul.f32 %v536, %v2406
        %v2419 = vmul.f32 %v537, %v2406
        %v2420 = vmul.f32 %v538, %v2406
        %v2421 = vmul.f32 %v539, %v2406
        %v2422 = vmul.f32 %v540, %v2406
        %v2423 = vmul.f32 %v541, %v2406
        %v2424 = vmul.f32 %v542, %v2406
        %v2425 = vmul.f32 %v543, %v2406
        %v2426 = vmul.f32 %v544, %v2406
        %v2427 = vmul.f32 %v545, %v2406
        %v2428 = vmul.f32 %v546, %v2406
        %v2429 = vmul.f32 %v547, %v2406
        %v2430 = vmul.f32 %v548, %v2406
        %v2431 = vadd.f32 %v2382, %v2407
        %v2432 = vadd.f32 %v2383, %v2408
        %v2433 = vadd.f32 %v2384, %v2409
        %v2434 = vadd.f32 %v2385, %v2410
        %v2435 = vadd.f32 %v2386, %v2411
        %v2436 = vadd.f32 %v2387, %v2412
        %v2437 = vadd.f32 %v2388, %v2413
        %v2438 = vadd.f32 %v2389, %v2414
        %v2439 = vadd.f32 %v2390, %v2415
        %v2440 = vadd.f32 %v2391, %v2416
        %v2441 = vadd.f32 %v2392, %v2417
        %v2442 = vadd.f32 %v2393, %v2418
        %v2443 = vadd.f32 %v2394, %v2419
        %v2444 = vadd.f32 %v2395, %v2420
        %v2445 = vadd.f32 %v2396, %v2421
        %v2446 = vadd.f32 %v2397, %v2422
        %v2447 = vadd.f32 %v2398, %v2423
        %v2448 = vadd.f32 %v2399, %v2424
        %v2449 = vadd.f32 %v2400, %v2425
        %v2450 = vadd.f32 %v2401, %v2426
        %v2451 = vadd.f32 %v2402, %v2427
        %v2452 = vadd.f32 %v2403, %v2428
        %v2453 = vadd.f32 %v2404, %v2429
        %v2454 = vadd.f32 %v2405, %v2430
        %v2455 = vperm.slane %v566, 6
        %v2456 = vmul.f32 %v528, %v2455
        %v2457 = vmul.f32 %v529, %v2455
        %v2458 = vmul.f32 %v530, %v2455
        %v2459 = vmul.f32 %v531, %v2455
        %v2460 = vmul.f32 %v532, %v2455
        %v2461 = vmul.f32 %v533, %v2455
        %v2462 = vmul.f32 %v534, %v2455
        %v2463 = vmul.f32 %v535, %v2455
        %v2464 = vmul.f32 %v536, %v2455
        %v2465 = vmul.f32 %v537, %v2455
        %v2466 = vmul.f32 %v538, %v2455
        %v2467 = vmul.f32 %v539, %v2455
        %v2468 = vmul.f32 %v540, %v2455
        %v2469 = vmul.f32 %v541, %v2455
        %v2470 = vmul.f32 %v542, %v2455
        %v2471 = vmul.f32 %v543, %v2455
        %v2472 = vmul.f32 %v544, %v2455
        %v2473 = vmul.f32 %v545, %v2455
        %v2474 = vmul.f32 %v546, %v2455
        %v2475 = vmul.f32 %v547, %v2455
        %v2476 = vmul.f32 %v548, %v2455
        %v2477 = vmul.f32 %v549, %v2455
        %v2478 = vmul.f32 %v550, %v2455
        %v2479 = vmul.f32 %v551, %v2455
        %v2480 = vadd.f32 %v2431, %v2456
        %v2481 = vadd.f32 %v2432, %v2457
        %v2482 = vadd.f32 %v2433, %v2458
        %v2483 = vadd.f32 %v2434, %v2459
        %v2484 = vadd.f32 %v2435, %v2460
        %v2485 = vadd.f32 %v2436, %v2461
        %v2486 = vadd.f32 %v2437, %v2462
        %v2487 = vadd.f32 %v2438, %v2463
        %v2488 = vadd.f32 %v2439, %v2464
        %v2489 = vadd.f32 %v2440, %v2465
        %v2490 = vadd.f32 %v2441, %v2466
        %v2491 = vadd.f32 %v2442, %v2467
        %v2492 = vadd.f32 %v2443, %v2468
        %v2493 = vadd.f32 %v2444, %v2469
        %v2494 = vadd.f32 %v2445, %v2470
        %v2495 = vadd.f32 %v2446, %v2471
        %v2496 = vadd.f32 %v2447, %v2472
        %v2497 = vadd.f32 %v2448, %v2473
        %v2498 = vadd.f32 %v2449, %v2474
        %v2499 = vadd.f32 %v2450, %v2475
        %v2500 = vadd.f32 %v2451, %v2476
        %v2501 = vadd.f32 %v2452, %v2477
        %v2502 = vadd.f32 %v2453, %v2478
        %v2503 = vadd.f32 %v2454, %v2479
        %v2504 = vperm.slane %v567, 6
        %v2505 = vmul.f32 %v531, %v2504
        %v2506 = vmul.f32 %v532, %v2504
        %v2507 = vmul.f32 %v533, %v2504
        %v2508 = vmul.f32 %v534, %v2504
        %v2509 = vmul.f32 %v535, %v2504
        %v2510 = vmul.f32 %v536, %v2504
        %v2511 = vmul.f32 %v537, %v2504
        %v2512 = vmul.f32 %v538, %v2504
        %v2513 = vmul.f32 %v539, %v2504
        %v2514 = vmul.f32 %v540, %v2504
        %v2515 = vmul.f32 %v541, %v2504
        %v2516 = vmul.f32 %v542, %v2504
        %v2517 = vmul.f32 %v543, %v2504
        %v2518 = vmul.f32 %v544, %v2504
        %v2519 = vmul.f32 %v545, %v2504
        %v2520 = vmul.f32 %v546, %v2504
        %v2521 = vmul.f32 %v547, %v2504
        %v2522 = vmul.f32 %v548, %v2504
        %v2523 = vmul.f32 %v549, %v2504
        %v2524 = vmul.f32 %v550, %v2504
        %v2525 = vmul.f32 %v551, %v2504
        %v2526 = vmul.f32 %v552, %v2504
        %v2527 = vmul.f32 %v553, %v2504
        %v2528 = vmul.f32 %v554, %v2504
        %v2529 = vadd.f32 %v2480, %v2505
        %v2530 = vadd.f32 %v2481, %v2506
        %v2531 = vadd.f32 %v2482, %v2507
        %v2532 = vadd.f32 %v2483, %v2508
        %v2533 = vadd.f32 %v2484, %v2509
        %v2534 = vadd.f32 %v2485, %v2510
        %v2535 = vadd.f32 %v2486, %v2511
        %v2536 = vadd.f32 %v2487, %v2512
        %v2537 = vadd.f32 %v2488, %v2513
        %v2538 = vadd.f32 %v2489, %v2514
        %v2539 = vadd.f32 %v2490, %v2515
        %v2540 = vadd.f32 %v2491, %v2516
        %v2541 = vadd.f32 %v2492, %v2517
        %v2542 = vadd.f32 %v2493, %v2518
        %v2543 = vadd.f32 %v2494, %v2519
        %v2544 = vadd.f32 %v2495, %v2520
        %v2545 = vadd.f32 %v2496, %v2521
        %v2546 = vadd.f32 %v2497, %v2522
        %v2547 = vadd.f32 %v2498, %v2523
        %v2548 = vadd.f32 %v2499, %v2524
        %v2549 = vadd.f32 %v2500, %v2525
        %v2550 = vadd.f32 %v2501, %v2526
        %v2551 = vadd.f32 %v2502, %v2527
        %v2552 = vadd.f32 %v2503, %v2528
        %v2553 = vperm.slane %v568, 6
        %v2554 = vmul.f32 %v534, %v2553
        %v2555 = vmul.f32 %v535, %v2553
        %v2556 = vmul.f32 %v536, %v2553
        %v2557 = vmul.f32 %v537, %v2553
        %v2558 = vmul.f32 %v538, %v2553
        %v2559 = vmul.f32 %v539, %v2553
        %v2560 = vmul.f32 %v540, %v2553
        %v2561 = vmul.f32 %v541, %v2553
        %v2562 = vmul.f32 %v542, %v2553
        %v2563 = vmul.f32 %v543, %v2553
        %v2564 = vmul.f32 %v544, %v2553
        %v2565 = vmul.f32 %v545, %v2553
        %v2566 = vmul.f32 %v546, %v2553
        %v2567 = vmul.f32 %v547, %v2553
        %v2568 = vmul.f32 %v548, %v2553
        %v2569 = vmul.f32 %v549, %v2553
        %v2570 = vmul.f32 %v550, %v2553
        %v2571 = vmul.f32 %v551, %v2553
        %v2572 = vmul.f32 %v552, %v2553
        %v2573 = vmul.f32 %v553, %v2553
        %v2574 = vmul.f32 %v554, %v2553
        %v2575 = vmul.f32 %v555, %v2553
        %v2576 = vmul.f32 %v556, %v2553
        %v2577 = vmul.f32 %v557, %v2553
        %v2578 = vadd.f32 %v2529, %v2554
        %v2579 = vadd.f32 %v2530, %v2555
        %v2580 = vadd.f32 %v2531, %v2556
        %v2581 = vadd.f32 %v2532, %v2557
        %v2582 = vadd.f32 %v2533, %v2558
        %v2583 = vadd.f32 %v2534, %v2559
        %v2584 = vadd.f32 %v2535, %v2560
        %v2585 = vadd.f32 %v2536, %v2561
        %v2586 = vadd.f32 %v2537, %v2562
        %v2587 = vadd.f32 %v2538, %v2563
        %v2588 = vadd.f32 %v2539, %v2564
        %v2589 = vadd.f32 %v2540, %v2565
        %v2590 = vadd.f32 %v2541, %v2566
        %v2591 = vadd.f32 %v2542, %v2567
        %v2592 = vadd.f32 %v2543, %v2568
        %v2593 = vadd.f32 %v2544, %v2569
        %v2594 = vadd.f32 %v2545, %v2570
        %v2595 = vadd.f32 %v2546, %v2571
        %v2596 = vadd.f32 %v2547, %v2572
        %v2597 = vadd.f32 %v2548, %v2573
        %v2598 = vadd.f32 %v2549, %v2574
        %v2599 = vadd.f32 %v2550, %v2575
        %v2600 = vadd.f32 %v2551, %v2576
        %v2601 = vadd.f32 %v2552, %v2577
        %v2602 = vperm.slane %v569, 6
        %v2603 = vmul.f32 %v537, %v2602
        %v2604 = vmul.f32 %v538, %v2602
        %v2605 = vmul.f32 %v539, %v2602
        %v2606 = vmul.f32 %v540, %v2602
        %v2607 = vmul.f32 %v541, %v2602
        %v2608 = vmul.f32 %v542, %v2602
        %v2609 = vmul.f32 %v543, %v2602
        %v2610 = vmul.f32 %v544, %v2602
        %v2611 = vmul.f32 %v545, %v2602
        %v2612 = vmul.f32 %v546, %v2602
        %v2613 = vmul.f32 %v547, %v2602
        %v2614 = vmul.f32 %v548, %v2602
        %v2615 = vmul.f32 %v549, %v2602
        %v2616 = vmul.f32 %v550, %v2602
        %v2617 = vmul.f32 %v551, %v2602
        %v2618 = vmul.f32 %v552, %v2602
        %v2619 = vmul.f32 %v553, %v2602
        %v2620 = vmul.f32 %v554, %v2602
        %v2621 = vmul.f32 %v555, %v2602
        %v2622 = vmul.f32 %v556, %v2602
        %v2623 = vmul.f32 %v557, %v2602
        %v2624 = vmul.f32 %v558, %v2602
        %v2625 = vmul.f32 %v559, %v2602
        %v2626 = vmul.f32 %v560, %v2602
        %v2627 = vadd.f32 %v2578, %v2603
        %v2628 = vadd.f32 %v2579, %v2604
        %v2629 = vadd.f32 %v2580, %v2605
        %v2630 = vadd.f32 %v2581, %v2606
        %v2631 = vadd.f32 %v2582, %v2607
        %v2632 = vadd.f32 %v2583, %v2608
        %v2633 = vadd.f32 %v2584, %v2609
        %v2634 = vadd.f32 %v2585, %v2610
        %v2635 = vadd.f32 %v2586, %v2611
        %v2636 = vadd.f32 %v2587, %v2612
        %v2637 = vadd.f32 %v2588, %v2613
        %v2638 = vadd.f32 %v2589, %v2614
        %v2639 = vadd.f32 %v2590, %v2615
        %v2640 = vadd.f32 %v2591, %v2616
        %v2641 = vadd.f32 %v2592, %v2617
        %v2642 = vadd.f32 %v2593, %v2618
        %v2643 = vadd.f32 %v2594, %v2619
        %v2644 = vadd.f32 %v2595, %v2620
        %v2645 = vadd.f32 %v2596, %v2621
        %v2646 = vadd.f32 %v2597, %v2622
        %v2647 = vadd.f32 %v2598, %v2623
        %v2648 = vadd.f32 %v2599, %v2624
        %v2649 = vadd.f32 %v2600, %v2625
        %v2650 = vadd.f32 %v2601, %v2626
        %v2651 = vperm.slane %v570, 6
        %v2652 = vmul.f32 %v540, %v2651
        %v2653 = vmul.f32 %v541, %v2651
        %v2654 = vmul.f32 %v542, %v2651
        %v2655 = vmul.f32 %v543, %v2651
        %v2656 = vmul.f32 %v544, %v2651
        %v2657 = vmul.f32 %v545, %v2651
        %v2658 = vmul.f32 %v546, %v2651
        %v2659 = vmul.f32 %v547, %v2651
        %v2660 = vmul.f32 %v548, %v2651
        %v2661 = vmul.f32 %v549, %v2651
        %v2662 = vmul.f32 %v550, %v2651
        %v2663 = vmul.f32 %v551, %v2651
        %v2664 = vmul.f32 %v552, %v2651
        %v2665 = vmul.f32 %v553, %v2651
        %v2666 = vmul.f32 %v554, %v2651
        %v2667 = vmul.f32 %v555, %v2651
        %v2668 = vmul.f32 %v556, %v2651
        %v2669 = vmul.f32 %v557, %v2651
        %v2670 = vmul.f32 %v558, %v2651
        %v2671 = vmul.f32 %v559, %v2651
        %v2672 = vmul.f32 %v560, %v2651
        %v2673 = vmul.f32 %v561, %v2651
        %v2674 = vmul.f32 %v562, %v2651
        %v2675 = vmul.f32 %v563, %v2651
        %v2676 = vadd.f32 %v2627, %v2652
        %v2677 = vadd.f32 %v2628, %v2653
        %v2678 = vadd.f32 %v2629, %v2654
        %v2679 = vadd.f32 %v2630, %v2655
        %v2680 = vadd.f32 %v2631, %v2656
        %v2681 = vadd.f32 %v2632, %v2657
        %v2682 = vadd.f32 %v2633, %v2658
        %v2683 = vadd.f32 %v2634, %v2659
        %v2684 = vadd.f32 %v2635, %v2660
        %v2685 = vadd.f32 %v2636, %v2661
        %v2686 = vadd.f32 %v2637, %v2662
        %v2687 = vadd.f32 %v2638, %v2663
        %v2688 = vadd.f32 %v2639, %v2664
        %v2689 = vadd.f32 %v2640, %v2665
        %v2690 = vadd.f32 %v2641, %v2666
        %v2691 = vadd.f32 %v2642, %v2667
        %v2692 = vadd.f32 %v2643, %v2668
        %v2693 = vadd.f32 %v2644, %v2669
        %v2694 = vadd.f32 %v2645, %v2670
        %v2695 = vadd.f32 %v2646, %v2671
        %v2696 = vadd.f32 %v2647, %v2672
        %v2697 = vadd.f32 %v2648, %v2673
        %v2698 = vadd.f32 %v2649, %v2674
        %v2699 = vadd.f32 %v2650, %v2675
        %vm2724 = vcmask 1046528
        %v2725 = vrot.slane %v1081, 1
        %v2726 = vrot.slane %v1082, 1
        %v2727 = vsel %vm2724, %v2725, %v2726
        %v2728 = vrot.slane %v1083, 1
        %v2729 = vsel %vm2724, %v2726, %v2728
        %v2730 = vrot.slane %v1084, 1
        %v2731 = vrot.slane %v1085, 1
        %v2732 = vsel %vm2724, %v2730, %v2731
        %v2733 = vrot.slane %v1086, 1
        %v2734 = vsel %vm2724, %v2731, %v2733
        %v2735 = vrot.slane %v1087, 1
        %v2736 = vrot.slane %v1088, 1
        %v2737 = vsel %vm2724, %v2735, %v2736
        %v2738 = vrot.slane %v1089, 1
        %v2739 = vsel %vm2724, %v2736, %v2738
        %v2740 = vrot.slane %v1090, 1
        %v2741 = vrot.slane %v1091, 1
        %v2742 = vsel %vm2724, %v2740, %v2741
        %v2743 = vrot.slane %v1092, 1
        %v2744 = vsel %vm2724, %v2741, %v2743
        %v2745 = vrot.slane %v1093, 1
        %v2746 = vrot.slane %v1094, 1
        %v2747 = vsel %vm2724, %v2745, %v2746
        %v2748 = vrot.slane %v1095, 1
        %v2749 = vsel %vm2724, %v2746, %v2748
        %v2750 = vrot.slane %v1096, 1
        %v2751 = vrot.slane %v1097, 1
        %v2752 = vsel %vm2724, %v2750, %v2751
        %v2753 = vrot.slane %v1098, 1
        %v2754 = vsel %vm2724, %v2751, %v2753
        %v2755 = vrot.slane %v1099, 1
        %v2756 = vrot.slane %v1100, 1
        %v2757 = vsel %vm2724, %v2755, %v2756
        %v2758 = vrot.slane %v1101, 1
        %v2759 = vsel %vm2724, %v2756, %v2758
        %v2760 = vrot.slane %v1102, 1
        %v2761 = vrot.slane %v1103, 1
        %v2762 = vsel %vm2724, %v2760, %v2761
        %v2763 = vrot.slane %v1104, 1
        %v2764 = vsel %vm2724, %v2761, %v2763
        %v2781 = vadd.f32 %v770, %v2727
        %v2782 = vadd.f32 %v771, %v2729
        %v2783 = vadd.f32 %v772, %v2732
        %v2784 = vadd.f32 %v773, %v2734
        %v2785 = vadd.f32 %v774, %v2737
        %v2786 = vadd.f32 %v775, %v2739
        %v2787 = vadd.f32 %v776, %v2742
        %v2788 = vadd.f32 %v777, %v2744
        %v2789 = vadd.f32 %v778, %v2747
        %v2790 = vadd.f32 %v779, %v2749
        %v2791 = vadd.f32 %v780, %v2752
        %v2792 = vadd.f32 %v781, %v2754
        %v2793 = vadd.f32 %v782, %v2757
        %v2794 = vadd.f32 %v783, %v2759
        %v2795 = vadd.f32 %v784, %v2762
        %v2796 = vadd.f32 %v785, %v2764
        %v2821 = vrot.slane %v1719, 1
        %v2822 = vrot.slane %v1720, 1
        %v2823 = vsel %vm2724, %v2821, %v2822
        %v2824 = vrot.slane %v1721, 1
        %v2825 = vsel %vm2724, %v2822, %v2824
        %v2826 = vrot.slane %v1722, 1
        %v2827 = vrot.slane %v1723, 1
        %v2828 = vsel %vm2724, %v2826, %v2827
        %v2829 = vrot.slane %v1724, 1
        %v2830 = vsel %vm2724, %v2827, %v2829
        %v2831 = vrot.slane %v1725, 1
        %v2832 = vrot.slane %v1726, 1
        %v2833 = vsel %vm2724, %v2831, %v2832
        %v2834 = vrot.slane %v1727, 1
        %v2835 = vsel %vm2724, %v2832, %v2834
        %v2836 = vrot.slane %v1728, 1
        %v2837 = vrot.slane %v1729, 1
        %v2838 = vsel %vm2724, %v2836, %v2837
        %v2839 = vrot.slane %v1730, 1
        %v2840 = vsel %vm2724, %v2837, %v2839
        %v2841 = vrot.slane %v1731, 1
        %v2842 = vrot.slane %v1732, 1
        %v2843 = vsel %vm2724, %v2841, %v2842
        %v2844 = vrot.slane %v1733, 1
        %v2845 = vsel %vm2724, %v2842, %v2844
        %v2846 = vrot.slane %v1734, 1
        %v2847 = vrot.slane %v1735, 1
        %v2848 = vsel %vm2724, %v2846, %v2847
        %v2849 = vrot.slane %v1736, 1
        %v2850 = vsel %vm2724, %v2847, %v2849
        %v2851 = vrot.slane %v1737, 1
        %v2852 = vrot.slane %v1738, 1
        %v2853 = vsel %vm2724, %v2851, %v2852
        %v2854 = vrot.slane %v1739, 1
        %v2855 = vsel %vm2724, %v2852, %v2854
        %v2856 = vrot.slane %v1740, 1
        %v2857 = vrot.slane %v1741, 1
        %v2858 = vsel %vm2724, %v2856, %v2857
        %v2859 = vrot.slane %v1742, 1
        %v2860 = vsel %vm2724, %v2857, %v2859
        %v2885 = vadd.f32 %v1400, %v2823
        %v2886 = vadd.f32 %v1401, %v2825
        %v2887 = vadd.f32 %v1402, %v2824
        %v2888 = vadd.f32 %v1403, %v2828
        %v2889 = vadd.f32 %v1404, %v2830
        %v2890 = vadd.f32 %v1405, %v2829
        %v2891 = vadd.f32 %v1406, %v2833
        %v2892 = vadd.f32 %v1407, %v2835
        %v2893 = vadd.f32 %v1408, %v2834
        %v2894 = vadd.f32 %v1409, %v2838
        %v2895 = vadd.f32 %v1410, %v2840
        %v2896 = vadd.f32 %v1411, %v2839
        %v2897 = vadd.f32 %v1412, %v2843
        %v2898 = vadd.f32 %v1413, %v2845
        %v2899 = vadd.f32 %v1414, %v2844
        %v2900 = vadd.f32 %v1415, %v2848
        %v2901 = vadd.f32 %v1416, %v2850
        %v2902 = vadd.f32 %v1417, %v2849
        %v2903 = vadd.f32 %v1418, %v2853
        %v2904 = vadd.f32 %v1419, %v2855
        %v2905 = vadd.f32 %v1420, %v2854
        %v2906 = vadd.f32 %v1421, %v2858
        %v2907 = vadd.f32 %v1422, %v2860
        %v2908 = vadd.f32 %v1423, %v2859
        %v2933 = vrot.slane %v2357, 1
        %v2934 = vrot.slane %v2358, 1
        %v2935 = vsel %vm2724, %v2933, %v2934
        %v2936 = vrot.slane %v2359, 1
        %v2937 = vsel %vm2724, %v2934, %v2936
        %v2938 = vrot.slane %v2360, 1
        %v2939 = vrot.slane %v2361, 1
        %v2940 = vsel %vm2724, %v2938, %v2939
        %v2941 = vrot.slane %v2362, 1
        %v2942 = vsel %vm2724, %v2939, %v2941
        %v2943 = vrot.slane %v2363, 1
        %v2944 = vrot.slane %v2364, 1
        %v2945 = vsel %vm2724, %v2943, %v2944
        %v2946 = vrot.slane %v2365, 1
        %v2947 = vsel %vm2724, %v2944, %v2946
        %v2948 = vrot.slane %v2366, 1
        %v2949 = vrot.slane %v2367, 1
        %v2950 = vsel %vm2724, %v2948, %v2949
        %v2951 = vrot.slane %v2368, 1
        %v2952 = vsel %vm2724, %v2949, %v2951
        %v2953 = vrot.slane %v2369, 1
        %v2954 = vrot.slane %v2370, 1
        %v2955 = vsel %vm2724, %v2953, %v2954
        %v2956 = vrot.slane %v2371, 1
        %v2957 = vsel %vm2724, %v2954, %v2956
        %v2958 = vrot.slane %v2372, 1
        %v2959 = vrot.slane %v2373, 1
        %v2960 = vsel %vm2724, %v2958, %v2959
        %v2961 = vrot.slane %v2374, 1
        %v2962 = vsel %vm2724, %v2959, %v2961
        %v2963 = vrot.slane %v2375, 1
        %v2964 = vrot.slane %v2376, 1
        %v2965 = vsel %vm2724, %v2963, %v2964
        %v2966 = vrot.slane %v2377, 1
        %v2967 = vsel %vm2724, %v2964, %v2966
        %v2968 = vrot.slane %v2378, 1
        %v2969 = vrot.slane %v2379, 1
        %v2970 = vsel %vm2724, %v2968, %v2969
        %v2971 = vrot.slane %v2380, 1
        %v2972 = vsel %vm2724, %v2969, %v2971
        %v2997 = vadd.f32 %v2038, %v2935
        %v2998 = vadd.f32 %v2039, %v2937
        %v2999 = vadd.f32 %v2040, %v2936
        %v3000 = vadd.f32 %v2041, %v2940
        %v3001 = vadd.f32 %v2042, %v2942
        %v3002 = vadd.f32 %v2043, %v2941
        %v3003 = vadd.f32 %v2044, %v2945
        %v3004 = vadd.f32 %v2045, %v2947
        %v3005 = vadd.f32 %v2046, %v2946
        %v3006 = vadd.f32 %v2047, %v2950
        %v3007 = vadd.f32 %v2048, %v2952
        %v3008 = vadd.f32 %v2049, %v2951
        %v3009 = vadd.f32 %v2050, %v2955
        %v3010 = vadd.f32 %v2051, %v2957
        %v3011 = vadd.f32 %v2052, %v2956
        %v3012 = vadd.f32 %v2053, %v2960
        %v3013 = vadd.f32 %v2054, %v2962
        %v3014 = vadd.f32 %v2055, %v2961
        %v3015 = vadd.f32 %v2056, %v2965
        %v3016 = vadd.f32 %v2057, %v2967
        %v3017 = vadd.f32 %v2058, %v2966
        %v3018 = vadd.f32 %v2059, %v2970
        %v3019 = vadd.f32 %v2060, %v2972
        %v3020 = vadd.f32 %v2061, %v2971
        %vm3045 = vcmask 1045504
        %v3046 = vrot.slane %v2885, 2
        %v3047 = vrot.slane %v2886, 2
        %v3048 = vsel %vm3045, %v3046, %v3047
        %v3049 = vrot.slane %v2887, 2
        %v3050 = vsel %vm3045, %v3047, %v3049
        %v3051 = vrot.slane %v2888, 2
        %v3052 = vrot.slane %v2889, 2
        %v3053 = vsel %vm3045, %v3051, %v3052
        %v3054 = vrot.slane %v2890, 2
        %v3055 = vsel %vm3045, %v3052, %v3054
        %v3056 = vrot.slane %v2891, 2
        %v3057 = vrot.slane %v2892, 2
        %v3058 = vsel %vm3045, %v3056, %v3057
        %v3059 = vrot.slane %v2893, 2
        %v3060 = vsel %vm3045, %v3057, %v3059
        %v3061 = vrot.slane %v2894, 2
        %v3062 = vrot.slane %v2895, 2
        %v3063 = vsel %vm3045, %v3061, %v3062
        %v3064 = vrot.slane %v2896, 2
        %v3065 = vsel %vm3045, %v3062, %v3064
        %v3066 = vrot.slane %v2897, 2
        %v3067 = vrot.slane %v2898, 2
        %v3068 = vsel %vm3045, %v3066, %v3067
        %v3069 = vrot.slane %v2899, 2
        %v3070 = vsel %vm3045, %v3067, %v3069
        %v3071 = vrot.slane %v2900, 2
        %v3072 = vrot.slane %v2901, 2
        %v3073 = vsel %vm3045, %v3071, %v3072
        %v3074 = vrot.slane %v2902, 2
        %v3075 = vsel %vm3045, %v3072, %v3074
        %v3076 = vrot.slane %v2903, 2
        %v3077 = vrot.slane %v2904, 2
        %v3078 = vsel %vm3045, %v3076, %v3077
        %v3079 = vrot.slane %v2905, 2
        %v3080 = vsel %vm3045, %v3077, %v3079
        %v3081 = vrot.slane %v2906, 2
        %v3082 = vrot.slane %v2907, 2
        %v3083 = vsel %vm3045, %v3081, %v3082
        %v3084 = vrot.slane %v2908, 2
        %v3085 = vsel %vm3045, %v3082, %v3084
        %v3102 = vadd.f32 %v2781, %v3048
        %v3103 = vadd.f32 %v2782, %v3050
        %v3104 = vadd.f32 %v2783, %v3053
        %v3105 = vadd.f32 %v2784, %v3055
        %v3106 = vadd.f32 %v2785, %v3058
        %v3107 = vadd.f32 %v2786, %v3060
        %v3108 = vadd.f32 %v2787, %v3063
        %v3109 = vadd.f32 %v2788, %v3065
        %v3110 = vadd.f32 %v2789, %v3068
        %v3111 = vadd.f32 %v2790, %v3070
        %v3112 = vadd.f32 %v2791, %v3073
        %v3113 = vadd.f32 %v2792, %v3075
        %v3114 = vadd.f32 %v2793, %v3078
        %v3115 = vadd.f32 %v2794, %v3080
        %v3116 = vadd.f32 %v2795, %v3083
        %v3117 = vadd.f32 %v2796, %v3085
        %v3142 = vrot.slane %v2676, 2
        %v3143 = vrot.slane %v2677, 2
        %v3144 = vsel %vm3045, %v3142, %v3143
        %v3145 = vrot.slane %v2678, 2
        %v3146 = vsel %vm3045, %v3143, %v3145
        %v3147 = vrot.slane %v2679, 2
        %v3148 = vrot.slane %v2680, 2
        %v3149 = vsel %vm3045, %v3147, %v3148
        %v3150 = vrot.slane %v2681, 2
        %v3151 = vsel %vm3045, %v3148, %v3150
        %v3152 = vrot.slane %v2682, 2
        %v3153 = vrot.slane %v2683, 2
        %v3154 = vsel %vm3045, %v3152, %v3153
        %v3155 = vrot.slane %v2684, 2
        %v3156 = vsel %vm3045, %v3153, %v3155
        %v3157 = vrot.slane %v2685, 2
        %v3158 = vrot.slane %v2686, 2
        %v3159 = vsel %vm3045, %v3157, %v3158
        %v3160 = vrot.slane %v2687, 2
        %v3161 = vsel %vm3045, %v3158, %v3160
        %v3162 = vrot.slane %v2688, 2
        %v3163 = vrot.slane %v2689, 2
        %v3164 = vsel %vm3045, %v3162, %v3163
        %v3165 = vrot.slane %v2690, 2
        %v3166 = vsel %vm3045, %v3163, %v3165
        %v3167 = vrot.slane %v2691, 2
        %v3168 = vrot.slane %v2692, 2
        %v3169 = vsel %vm3045, %v3167, %v3168
        %v3170 = vrot.slane %v2693, 2
        %v3171 = vsel %vm3045, %v3168, %v3170
        %v3172 = vrot.slane %v2694, 2
        %v3173 = vrot.slane %v2695, 2
        %v3174 = vsel %vm3045, %v3172, %v3173
        %v3175 = vrot.slane %v2696, 2
        %v3176 = vsel %vm3045, %v3173, %v3175
        %v3177 = vrot.slane %v2697, 2
        %v3178 = vrot.slane %v2698, 2
        %v3179 = vsel %vm3045, %v3177, %v3178
        %v3180 = vrot.slane %v2699, 2
        %v3181 = vsel %vm3045, %v3178, %v3180
        %v3206 = vadd.f32 %v2997, %v3144
        %v3207 = vadd.f32 %v2998, %v3146
        %v3208 = vadd.f32 %v2999, %v3145
        %v3209 = vadd.f32 %v3000, %v3149
        %v3210 = vadd.f32 %v3001, %v3151
        %v3211 = vadd.f32 %v3002, %v3150
        %v3212 = vadd.f32 %v3003, %v3154
        %v3213 = vadd.f32 %v3004, %v3156
        %v3214 = vadd.f32 %v3005, %v3155
        %v3215 = vadd.f32 %v3006, %v3159
        %v3216 = vadd.f32 %v3007, %v3161
        %v3217 = vadd.f32 %v3008, %v3160
        %v3218 = vadd.f32 %v3009, %v3164
        %v3219 = vadd.f32 %v3010, %v3166
        %v3220 = vadd.f32 %v3011, %v3165
        %v3221 = vadd.f32 %v3012, %v3169
        %v3222 = vadd.f32 %v3013, %v3171
        %v3223 = vadd.f32 %v3014, %v3170
        %v3224 = vadd.f32 %v3015, %v3174
        %v3225 = vadd.f32 %v3016, %v3176
        %v3226 = vadd.f32 %v3017, %v3175
        %v3227 = vadd.f32 %v3018, %v3179
        %v3228 = vadd.f32 %v3019, %v3181
        %v3229 = vadd.f32 %v3020, %v3180
        %vm3254 = vcmask 1043456
        %v3255 = vrot.slane %v3206, 4
        %v3256 = vrot.slane %v3207, 4
        %v3257 = vsel %vm3254, %v3255, %v3256
        %v3258 = vrot.slane %v3208, 4
        %v3259 = vsel %vm3254, %v3256, %v3258
        %v3260 = vrot.slane %v3209, 4
        %v3261 = vrot.slane %v3210, 4
        %v3262 = vsel %vm3254, %v3260, %v3261
        %v3263 = vrot.slane %v3211, 4
        %v3264 = vsel %vm3254, %v3261, %v3263
        %v3265 = vrot.slane %v3212, 4
        %v3266 = vrot.slane %v3213, 4
        %v3267 = vsel %vm3254, %v3265, %v3266
        %v3268 = vrot.slane %v3214, 4
        %v3269 = vsel %vm3254, %v3266, %v3268
        %v3270 = vrot.slane %v3215, 4
        %v3271 = vrot.slane %v3216, 4
        %v3272 = vsel %vm3254, %v3270, %v3271
        %v3273 = vrot.slane %v3217, 4
        %v3274 = vsel %vm3254, %v3271, %v3273
        %v3275 = vrot.slane %v3218, 4
        %v3276 = vrot.slane %v3219, 4
        %v3277 = vsel %vm3254, %v3275, %v3276
        %v3278 = vrot.slane %v3220, 4
        %v3279 = vsel %vm3254, %v3276, %v3278
        %v3280 = vrot.slane %v3221, 4
        %v3281 = vrot.slane %v3222, 4
        %v3282 = vsel %vm3254, %v3280, %v3281
        %v3283 = vrot.slane %v3223, 4
        %v3284 = vsel %vm3254, %v3281, %v3283
        %v3285 = vrot.slane %v3224, 4
        %v3286 = vrot.slane %v3225, 4
        %v3287 = vsel %vm3254, %v3285, %v3286
        %v3288 = vrot.slane %v3226, 4
        %v3289 = vsel %vm3254, %v3286, %v3288
        %v3290 = vrot.slane %v3227, 4
        %v3291 = vrot.slane %v3228, 4
        %v3292 = vsel %vm3254, %v3290, %v3291
        %v3293 = vrot.slane %v3229, 4
        %v3294 = vsel %vm3254, %v3291, %v3293
        %v3311 = vadd.f32 %v3102, %v3257
        %v3312 = vadd.f32 %v3103, %v3259
        %v3313 = vadd.f32 %v3104, %v3262
        %v3314 = vadd.f32 %v3105, %v3264
        %v3315 = vadd.f32 %v3106, %v3267
        %v3316 = vadd.f32 %v3107, %v3269
        %v3317 = vadd.f32 %v3108, %v3272
        %v3318 = vadd.f32 %v3109, %v3274
        %v3319 = vadd.f32 %v3110, %v3277
        %v3320 = vadd.f32 %v3111, %v3279
        %v3321 = vadd.f32 %v3112, %v3282
        %v3322 = vadd.f32 %v3113, %v3284
        %v3323 = vadd.f32 %v3114, %v3287
        %v3324 = vadd.f32 %v3115, %v3289
        %v3325 = vadd.f32 %v3116, %v3292
        %v3326 = vadd.f32 %v3117, %v3294
        %v3327 = vld [vmem:[%s2] sm:$0x1]
        %v3329 = vperm.slane %v3327, 0
        %v3331 = vadd.f32 %v3311, %v3329
        %v3332 = vadd.f32 %v3312, %v3329
        %v3333 = vadd.f32 %v3313, %v3329
        %v3334 = vadd.f32 %v3314, %v3329
        %v3335 = vadd.f32 %v3315, %v3329
        %v3336 = vadd.f32 %v3316, %v3329
        %v3337 = vadd.f32 %v3317, %v3329
        %v3338 = vadd.f32 %v3318, %v3329
        %v3339 = vadd.f32 %v3319, %v3329
        %v3340 = vadd.f32 %v3320, %v3329
        %v3341 = vadd.f32 %v3321, %v3329
        %v3342 = vadd.f32 %v3322, %v3329
        %v3343 = vadd.f32 %v3323, %v3329
        %v3344 = vadd.f32 %v3324, %v3329
        %v3345 = vadd.f32 %v3325, %v3329
        %v3346 = vadd.f32 %v3326, %v3329
        %v3347 = vsel %vm445, %v3331, 0.0
        %3348 = vadd.xlane.f32.xlu0 %v3347
        %v3349 = vpop.xlane.xlu0 %3348
        %v3350 = vsel %vm445, %v3332, 0.0
        %3351 = vadd.xlane.f32.xlu0 %v3350
        %v3352 = vpop.xlane.xlu0 %3351
        %v3353 = vsel %vm445, %v3333, 0.0
        %3354 = vadd.xlane.f32.xlu0 %v3353
        %v3355 = vpop.xlane.xlu0 %3354
        %v3356 = vsel %vm445, %v3334, 0.0
        %3357 = vadd.xlane.f32.xlu0 %v3356
        %v3358 = vpop.xlane.xlu0 %3357
        %v3359 = vsel %vm445, %v3335, 0.0
        %3360 = vadd.xlane.f32.xlu0 %v3359
        %v3361 = vpop.xlane.xlu0 %3360
        %v3362 = vsel %vm445, %v3336, 0.0
        %3363 = vadd.xlane.f32.xlu0 %v3362
        %v3364 = vpop.xlane.xlu0 %3363
        %v3365 = vsel %vm445, %v3337, 0.0
        %3366 = vadd.xlane.f32.xlu0 %v3365
        %v3367 = vpop.xlane.xlu0 %3366
        %v3368 = vsel %vm445, %v3338, 0.0
        %3369 = vadd.xlane.f32.xlu0 %v3368
        %v3370 = vpop.xlane.xlu0 %3369
        %v3371 = vsel %vm445, %v3339, 0.0
        %3372 = vadd.xlane.f32.xlu0 %v3371
        %v3373 = vpop.xlane.xlu0 %3372
        %v3374 = vsel %vm445, %v3340, 0.0
        %3375 = vadd.xlane.f32.xlu0 %v3374
        %v3376 = vpop.xlane.xlu0 %3375
        %v3377 = vsel %vm445, %v3341, 0.0
        %3378 = vadd.xlane.f32.xlu0 %v3377
        %v3379 = vpop.xlane.xlu0 %3378
        %v3380 = vsel %vm445, %v3342, 0.0
        %3381 = vadd.xlane.f32.xlu0 %v3380
        %v3382 = vpop.xlane.xlu0 %3381
        %v3383 = vsel %vm445, %v3343, 0.0
        %3384 = vadd.xlane.f32.xlu0 %v3383
        %v3385 = vpop.xlane.xlu0 %3384
        %v3386 = vsel %vm445, %v3344, 0.0
        %3387 = vadd.xlane.f32.xlu0 %v3386
        %v3388 = vpop.xlane.xlu0 %3387
        %v3389 = vsel %vm445, %v3345, 0.0
        %3390 = vadd.xlane.f32.xlu0 %v3389
        %v3391 = vpop.xlane.xlu0 %3390
        %v3392 = vsel %vm445, %v3346, 0.0
        %3393 = vadd.xlane.f32.xlu0 %v3392
        %v3394 = vpop.xlane.xlu0 %3393
        %v3395 = vmul.f32 %v3349, 0.03125
        %v3396 = vmul.f32 %v3352, 0.03125
        %v3397 = vmul.f32 %v3355, 0.03125
        %v3398 = vmul.f32 %v3358, 0.03125
        %v3399 = vmul.f32 %v3361, 0.03125
        %v3400 = vmul.f32 %v3364, 0.03125
        %v3401 = vmul.f32 %v3367, 0.03125
        %v3402 = vmul.f32 %v3370, 0.03125
        %v3403 = vmul.f32 %v3373, 0.03125
        %v3404 = vmul.f32 %v3376, 0.03125
        %v3405 = vmul.f32 %v3379, 0.03125
        %v3406 = vmul.f32 %v3382, 0.03125
        %v3407 = vmul.f32 %v3385, 0.03125
        %v3408 = vmul.f32 %v3388, 0.03125
        %v3409 = vmul.f32 %v3391, 0.03125
        %v3410 = vmul.f32 %v3394, 0.03125
        %v3411 = vmul.f32 %v3331, %v3331
        %v3412 = vmul.f32 %v3332, %v3332
        %v3413 = vmul.f32 %v3333, %v3333
        %v3414 = vmul.f32 %v3334, %v3334
        %v3415 = vmul.f32 %v3335, %v3335
        %v3416 = vmul.f32 %v3336, %v3336
        %v3417 = vmul.f32 %v3337, %v3337
        %v3418 = vmul.f32 %v3338, %v3338
        %v3419 = vmul.f32 %v3339, %v3339
        %v3420 = vmul.f32 %v3340, %v3340
        %v3421 = vmul.f32 %v3341, %v3341
        %v3422 = vmul.f32 %v3342, %v3342
        %v3423 = vmul.f32 %v3343, %v3343
        %v3424 = vmul.f32 %v3344, %v3344
        %v3425 = vmul.f32 %v3345, %v3345
        %v3426 = vmul.f32 %v3346, %v3346
        %v3427 = vsel %vm445, %v3411, 0.0
        %3428 = vadd.xlane.f32.xlu0 %v3427
        %v3429 = vpop.xlane.xlu0 %3428
        %v3430 = vsel %vm445, %v3412, 0.0
        %3431 = vadd.xlane.f32.xlu0 %v3430
        %v3432 = vpop.xlane.xlu0 %3431
        %v3433 = vsel %vm445, %v3413, 0.0
        %3434 = vadd.xlane.f32.xlu0 %v3433
        %v3435 = vpop.xlane.xlu0 %3434
        %v3436 = vsel %vm445, %v3414, 0.0
        %3437 = vadd.xlane.f32.xlu0 %v3436
        %v3438 = vpop.xlane.xlu0 %3437
        %v3439 = vsel %vm445, %v3415, 0.0
        %3440 = vadd.xlane.f32.xlu0 %v3439
        %v3441 = vpop.xlane.xlu0 %3440
        %v3442 = vsel %vm445, %v3416, 0.0
        %3443 = vadd.xlane.f32.xlu0 %v3442
        %v3444 = vpop.xlane.xlu0 %3443
        %v3445 = vsel %vm445, %v3417, 0.0
        %3446 = vadd.xlane.f32.xlu0 %v3445
        %v3447 = vpop.xlane.xlu0 %3446
        %v3448 = vsel %vm445, %v3418, 0.0
        %3449 = vadd.xlane.f32.xlu0 %v3448
        %v3450 = vpop.xlane.xlu0 %3449
        %v3451 = vsel %vm445, %v3419, 0.0
        %3452 = vadd.xlane.f32.xlu0 %v3451
        %v3453 = vpop.xlane.xlu0 %3452
        %v3454 = vsel %vm445, %v3420, 0.0
        %3455 = vadd.xlane.f32.xlu0 %v3454
        %v3456 = vpop.xlane.xlu0 %3455
        %v3457 = vsel %vm445, %v3421, 0.0
        %3458 = vadd.xlane.f32.xlu0 %v3457
        %v3459 = vpop.xlane.xlu0 %3458
        %v3460 = vsel %vm445, %v3422, 0.0
        %3461 = vadd.xlane.f32.xlu0 %v3460
        %v3462 = vpop.xlane.xlu0 %3461
        %v3463 = vsel %vm445, %v3423, 0.0
        %3464 = vadd.xlane.f32.xlu0 %v3463
        %v3465 = vpop.xlane.xlu0 %3464
        %v3466 = vsel %vm445, %v3424, 0.0
        %3467 = vadd.xlane.f32.xlu0 %v3466
        %v3468 = vpop.xlane.xlu0 %3467
        %v3469 = vsel %vm445, %v3425, 0.0
        %3470 = vadd.xlane.f32.xlu0 %v3469
        %v3471 = vpop.xlane.xlu0 %3470
        %v3472 = vsel %vm445, %v3426, 0.0
        %3473 = vadd.xlane.f32.xlu0 %v3472
        %v3474 = vpop.xlane.xlu0 %3473
        %v3475 = vmul.f32 %v3429, 0.03125
        %v3476 = vmul.f32 %v3432, 0.03125
        %v3477 = vmul.f32 %v3435, 0.03125
        %v3478 = vmul.f32 %v3438, 0.03125
        %v3479 = vmul.f32 %v3441, 0.03125
        %v3480 = vmul.f32 %v3444, 0.03125
        %v3481 = vmul.f32 %v3447, 0.03125
        %v3482 = vmul.f32 %v3450, 0.03125
        %v3483 = vmul.f32 %v3453, 0.03125
        %v3484 = vmul.f32 %v3456, 0.03125
        %v3485 = vmul.f32 %v3459, 0.03125
        %v3486 = vmul.f32 %v3462, 0.03125
        %v3487 = vmul.f32 %v3465, 0.03125
        %v3488 = vmul.f32 %v3468, 0.03125
        %v3489 = vmul.f32 %v3471, 0.03125
        %v3490 = vmul.f32 %v3474, 0.03125
        %v3491 = vmul.f32 %v3395, %v3395
        %v3492 = vmul.f32 %v3396, %v3396
        %v3493 = vmul.f32 %v3397, %v3397
        %v3494 = vmul.f32 %v3398, %v3398
        %v3495 = vmul.f32 %v3399, %v3399
        %v3496 = vmul.f32 %v3400, %v3400
        %v3497 = vmul.f32 %v3401, %v3401
        %v3498 = vmul.f32 %v3402, %v3402
        %v3499 = vmul.f32 %v3403, %v3403
        %v3500 = vmul.f32 %v3404, %v3404
        %v3501 = vmul.f32 %v3405, %v3405
        %v3502 = vmul.f32 %v3406, %v3406
        %v3503 = vmul.f32 %v3407, %v3407
        %v3504 = vmul.f32 %v3408, %v3408
        %v3505 = vmul.f32 %v3409, %v3409
        %v3506 = vmul.f32 %v3410, %v3410
        %v3507 = vsub.f32 %v3475, %v3491
        %v3508 = vsub.f32 %v3476, %v3492
        %v3509 = vsub.f32 %v3477, %v3493
        %v3510 = vsub.f32 %v3478, %v3494
        %v3511 = vsub.f32 %v3479, %v3495
        %v3512 = vsub.f32 %v3480, %v3496
        %v3513 = vsub.f32 %v3481, %v3497
        %v3514 = vsub.f32 %v3482, %v3498
        %v3515 = vsub.f32 %v3483, %v3499
        %v3516 = vsub.f32 %v3484, %v3500
        %v3517 = vsub.f32 %v3485, %v3501
        %v3518 = vsub.f32 %v3486, %v3502
        %v3519 = vsub.f32 %v3487, %v3503
        %v3520 = vsub.f32 %v3488, %v3504
        %v3521 = vsub.f32 %v3489, %v3505
        %v3522 = vsub.f32 %v3490, %v3506
        %v3523 = vsub.f32 %v3331, %v3395
        %v3524 = vsub.f32 %v3332, %v3396
        %v3525 = vsub.f32 %v3333, %v3397
        %v3526 = vsub.f32 %v3334, %v3398
        %v3527 = vsub.f32 %v3335, %v3399
        %v3528 = vsub.f32 %v3336, %v3400
        %v3529 = vsub.f32 %v3337, %v3401
        %v3530 = vsub.f32 %v3338, %v3402
        %v3531 = vsub.f32 %v3339, %v3403
        %v3532 = vsub.f32 %v3340, %v3404
        %v3533 = vsub.f32 %v3341, %v3405
        %v3534 = vsub.f32 %v3342, %v3406
        %v3535 = vsub.f32 %v3343, %v3407
        %v3536 = vsub.f32 %v3344, %v3408
        %v3537 = vsub.f32 %v3345, %v3409
        %v3538 = vsub.f32 %v3346, %v3410
        %v3539 = vadd.f32 %v3507, 1e-06
        %v3540 = vadd.f32 %v3508, 1e-06
        %v3541 = vadd.f32 %v3509, 1e-06
        %v3542 = vadd.f32 %v3510, 1e-06
        %v3543 = vadd.f32 %v3511, 1e-06
        %v3544 = vadd.f32 %v3512, 1e-06
        %v3545 = vadd.f32 %v3513, 1e-06
        %v3546 = vadd.f32 %v3514, 1e-06
        %v3547 = vadd.f32 %v3515, 1e-06
        %v3548 = vadd.f32 %v3516, 1e-06
        %v3549 = vadd.f32 %v3517, 1e-06
        %v3550 = vadd.f32 %v3518, 1e-06
        %v3551 = vadd.f32 %v3519, 1e-06
        %v3552 = vadd.f32 %v3520, 1e-06
        %v3553 = vadd.f32 %v3521, 1e-06
        %v3554 = vadd.f32 %v3522, 1e-06
        %v3555 = vrsqrt.pop %v3539
        %v3556 = vmul.f32 %v3555, %v3539
        %v3557 = vmul.f32 %v3556, %v3555
        %v3558 = vmul.f32 0.5, %v3557
        %v3559 = vsub.f32 1.5, %v3558
        %v3560 = vmul.f32 %v3555, %v3559
        %vm3561 = vweird.f32 %v3539
        %vm3562 = vweird.f32 %v3555
        %vm3563 = vmor %vm3561, %vm3562
        %v3564 = vsel %vm3563, %v3555, %v3560
        %v3565 = vrsqrt.pop %v3540
        %v3566 = vmul.f32 %v3565, %v3540
        %v3567 = vmul.f32 %v3566, %v3565
        %v3568 = vmul.f32 0.5, %v3567
        %v3569 = vsub.f32 1.5, %v3568
        %v3570 = vmul.f32 %v3565, %v3569
        %vm3571 = vweird.f32 %v3540
        %vm3572 = vweird.f32 %v3565
        %vm3573 = vmor %vm3571, %vm3572
        %v3574 = vsel %vm3573, %v3565, %v3570
        %v3575 = vrsqrt.pop %v3541
        %v3576 = vmul.f32 %v3575, %v3541
        %v3577 = vmul.f32 %v3576, %v3575
        %v3578 = vmul.f32 0.5, %v3577
        %v3579 = vsub.f32 1.5, %v3578
        %v3580 = vmul.f32 %v3575, %v3579
        %vm3581 = vweird.f32 %v3541
        %vm3582 = vweird.f32 %v3575
        %vm3583 = vmor %vm3581, %vm3582
        %v3584 = vsel %vm3583, %v3575, %v3580
        %v3585 = vrsqrt.pop %v3542
        %v3586 = vmul.f32 %v3585, %v3542
        %v3587 = vmul.f32 %v3586, %v3585
        %v3588 = vmul.f32 0.5, %v3587
        %v3589 = vsub.f32 1.5, %v3588
        %v3590 = vmul.f32 %v3585, %v3589
        %vm3591 = vweird.f32 %v3542
        %vm3592 = vweird.f32 %v3585
        %vm3593 = vmor %vm3591, %vm3592
        %v3594 = vsel %vm3593, %v3585, %v3590
        %v3595 = vrsqrt.pop %v3543
        %v3596 = vmul.f32 %v3595, %v3543
        %v3597 = vmul.f32 %v3596, %v3595
        %v3598 = vmul.f32 0.5, %v3597
        %v3599 = vsub.f32 1.5, %v3598
        %v3600 = vmul.f32 %v3595, %v3599
        %vm3601 = vweird.f32 %v3543
        %vm3602 = vweird.f32 %v3595
        %vm3603 = vmor %vm3601, %vm3602
        %v3604 = vsel %vm3603, %v3595, %v3600
        %v3605 = vrsqrt.pop %v3544
        %v3606 = vmul.f32 %v3605, %v3544
        %v3607 = vmul.f32 %v3606, %v3605
        %v3608 = vmul.f32 0.5, %v3607
        %v3609 = vsub.f32 1.5, %v3608
        %v3610 = vmul.f32 %v3605, %v3609
        %vm3611 = vweird.f32 %v3544
        %vm3612 = vweird.f32 %v3605
        %vm3613 = vmor %vm3611, %vm3612
        %v3614 = vsel %vm3613, %v3605, %v3610
        %v3615 = vrsqrt.pop %v3545
        %v3616 = vmul.f32 %v3615, %v3545
        %v3617 = vmul.f32 %v3616, %v3615
        %v3618 = vmul.f32 0.5, %v3617
        %v3619 = vsub.f32 1.5, %v3618
        %v3620 = vmul.f32 %v3615, %v3619
        %vm3621 = vweird.f32 %v3545
        %vm3622 = vweird.f32 %v3615
        %vm3623 = vmor %vm3621, %vm3622
        %v3624 = vsel %vm3623, %v3615, %v3620
        %v3625 = vrsqrt.pop %v3546
        %v3626 = vmul.f32 %v3625, %v3546
        %v3627 = vmul.f32 %v3626, %v3625
        %v3628 = vmul.f32 0.5, %v3627
        %v3629 = vsub.f32 1.5, %v3628
        %v3630 = vmul.f32 %v3625, %v3629
        %vm3631 = vweird.f32 %v3546
        %vm3632 = vweird.f32 %v3625
        %vm3633 = vmor %vm3631, %vm3632
        %v3634 = vsel %vm3633, %v3625, %v3630
        %v3635 = vrsqrt.pop %v3547
        %v3636 = vmul.f32 %v3635, %v3547
        %v3637 = vmul.f32 %v3636, %v3635
        %v3638 = vmul.f32 0.5, %v3637
        %v3639 = vsub.f32 1.5, %v3638
        %v3640 = vmul.f32 %v3635, %v3639
        %vm3641 = vweird.f32 %v3547
        %vm3642 = vweird.f32 %v3635
        %vm3643 = vmor %vm3641, %vm3642
        %v3644 = vsel %vm3643, %v3635, %v3640
        %v3645 = vrsqrt.pop %v3548
        %v3646 = vmul.f32 %v3645, %v3548
        %v3647 = vmul.f32 %v3646, %v3645
        %v3648 = vmul.f32 0.5, %v3647
        %v3649 = vsub.f32 1.5, %v3648
        %v3650 = vmul.f32 %v3645, %v3649
        %vm3651 = vweird.f32 %v3548
        %vm3652 = vweird.f32 %v3645
        %vm3653 = vmor %vm3651, %vm3652
        %v3654 = vsel %vm3653, %v3645, %v3650
        %v3655 = vrsqrt.pop %v3549
        %v3656 = vmul.f32 %v3655, %v3549
        %v3657 = vmul.f32 %v3656, %v3655
        %v3658 = vmul.f32 0.5, %v3657
        %v3659 = vsub.f32 1.5, %v3658
        %v3660 = vmul.f32 %v3655, %v3659
        %vm3661 = vweird.f32 %v3549
        %vm3662 = vweird.f32 %v3655
        %vm3663 = vmor %vm3661, %vm3662
        %v3664 = vsel %vm3663, %v3655, %v3660
        %v3665 = vrsqrt.pop %v3550
        %v3666 = vmul.f32 %v3665, %v3550
        %v3667 = vmul.f32 %v3666, %v3665
        %v3668 = vmul.f32 0.5, %v3667
        %v3669 = vsub.f32 1.5, %v3668
        %v3670 = vmul.f32 %v3665, %v3669
        %vm3671 = vweird.f32 %v3550
        %vm3672 = vweird.f32 %v3665
        %vm3673 = vmor %vm3671, %vm3672
        %v3674 = vsel %vm3673, %v3665, %v3670
        %v3675 = vrsqrt.pop %v3551
        %v3676 = vmul.f32 %v3675, %v3551
        %v3677 = vmul.f32 %v3676, %v3675
        %v3678 = vmul.f32 0.5, %v3677
        %v3679 = vsub.f32 1.5, %v3678
        %v3680 = vmul.f32 %v3675, %v3679
        %vm3681 = vweird.f32 %v3551
        %vm3682 = vweird.f32 %v3675
        %vm3683 = vmor %vm3681, %vm3682
        %v3684 = vsel %vm3683, %v3675, %v3680
        %v3685 = vrsqrt.pop %v3552
        %v3686 = vmul.f32 %v3685, %v3552
        %v3687 = vmul.f32 %v3686, %v3685
        %v3688 = vmul.f32 0.5, %v3687
        %v3689 = vsub.f32 1.5, %v3688
        %v3690 = vmul.f32 %v3685, %v3689
        %vm3691 = vweird.f32 %v3552
        %vm3692 = vweird.f32 %v3685
        %vm3693 = vmor %vm3691, %vm3692
        %v3694 = vsel %vm3693, %v3685, %v3690
        %v3695 = vrsqrt.pop %v3553
        %v3696 = vmul.f32 %v3695, %v3553
        %v3697 = vmul.f32 %v3696, %v3695
        %v3698 = vmul.f32 0.5, %v3697
        %v3699 = vsub.f32 1.5, %v3698
        %v3700 = vmul.f32 %v3695, %v3699
        %vm3701 = vweird.f32 %v3553
        %vm3702 = vweird.f32 %v3695
        %vm3703 = vmor %vm3701, %vm3702
        %v3704 = vsel %vm3703, %v3695, %v3700
        %v3705 = vrsqrt.pop %v3554
        %v3706 = vmul.f32 %v3705, %v3554
        %v3707 = vmul.f32 %v3706, %v3705
        %v3708 = vmul.f32 0.5, %v3707
        %v3709 = vsub.f32 1.5, %v3708
        %v3710 = vmul.f32 %v3705, %v3709
        %vm3711 = vweird.f32 %v3554
        %vm3712 = vweird.f32 %v3705
        %vm3713 = vmor %vm3711, %vm3712
        %v3714 = vsel %vm3713, %v3705, %v3710
        %v3715 = vmul.f32 %v3523, %v3564
        %v3716 = vmul.f32 %v3524, %v3574
        %v3717 = vmul.f32 %v3525, %v3584
        %v3718 = vmul.f32 %v3526, %v3594
        %v3719 = vmul.f32 %v3527, %v3604
        %v3720 = vmul.f32 %v3528, %v3614
        %v3721 = vmul.f32 %v3529, %v3624
        %v3722 = vmul.f32 %v3530, %v3634
        %v3723 = vmul.f32 %v3531, %v3644
        %v3724 = vmul.f32 %v3532, %v3654
        %v3725 = vmul.f32 %v3533, %v3664
        %v3726 = vmul.f32 %v3534, %v3674
        %v3727 = vmul.f32 %v3535, %v3684
        %v3728 = vmul.f32 %v3536, %v3694
        %v3729 = vmul.f32 %v3537, %v3704
        %v3730 = vmul.f32 %v3538, %v3714
        %v3731 = vld [vmem:[%s3] sm:$0x1]
        %v3733 = vperm.slane %v3731, 0
        %v3735 = vmul.f32 %v3715, %v3733
        %v3736 = vmul.f32 %v3716, %v3733
        %v3737 = vmul.f32 %v3717, %v3733
        %v3738 = vmul.f32 %v3718, %v3733
        %v3739 = vmul.f32 %v3719, %v3733
        %v3740 = vmul.f32 %v3720, %v3733
        %v3741 = vmul.f32 %v3721, %v3733
        %v3742 = vmul.f32 %v3722, %v3733
        %v3743 = vmul.f32 %v3723, %v3733
        %v3744 = vmul.f32 %v3724, %v3733
        %v3745 = vmul.f32 %v3725, %v3733
        %v3746 = vmul.f32 %v3726, %v3733
        %v3747 = vmul.f32 %v3727, %v3733
        %v3748 = vmul.f32 %v3728, %v3733
        %v3749 = vmul.f32 %v3729, %v3733
        %v3750 = vmul.f32 %v3730, %v3733
        %v3751 = vld [vmem:[%s4] sm:$0x1]
        %v3753 = vperm.slane %v3751, 0
        %v3755 = vadd.f32 %v3735, %v3753
        %v3756 = vadd.f32 %v3736, %v3753
        %v3757 = vadd.f32 %v3737, %v3753
        %v3758 = vadd.f32 %v3738, %v3753
        %v3759 = vadd.f32 %v3739, %v3753
        %v3760 = vadd.f32 %v3740, %v3753
        %v3761 = vadd.f32 %v3741, %v3753
        %v3762 = vadd.f32 %v3742, %v3753
        %v3763 = vadd.f32 %v3743, %v3753
        %v3764 = vadd.f32 %v3744, %v3753
        %v3765 = vadd.f32 %v3745, %v3753
        %v3766 = vadd.f32 %v3746, %v3753
        %v3767 = vadd.f32 %v3747, %v3753
        %v3768 = vadd.f32 %v3748, %v3753
        %v3769 = vadd.f32 %v3749, %v3753
        %v3770 = vadd.f32 %v3750, %v3753
        %v3771 = vpack.c.bf16 %v3756, %v3755
        %v3772 = vpack.c.bf16 %v3758, %v3757
        %v3773 = vpack.c.bf16 %v3760, %v3759
        %v3774 = vpack.c.bf16 %v3762, %v3761
        %v3775 = vpack.c.bf16 %v3764, %v3763
        %v3776 = vpack.c.bf16 %v3766, %v3765
        %v3777 = vpack.c.bf16 %v3768, %v3767
        %v3778 = vpack.c.bf16 %v3770, %v3769
        %v3779 = vld [vmem:[%s5] sm:$0xf]
        %v3780 = vld [vmem:[%s5 + $0x4] sm:$0xf]
        %v3781 = vld [vmem:[%s5 + $0x8] sm:$0xf]
        %v3782 = vld [vmem:[%s5 + $0xc] sm:$0xf]
        %v3783 = vld [vmem:[%s6] sm:$0x1]
        %v3785 = vperm.slane %v3783, 0
        %v3791 = vunpack.c.l.b16 %v3779
        %v3792 = vunpack.c.l.b16 %v3780
        %v3793 = vunpack.c.l.b16 %v3781
        %v3794 = vunpack.c.l.b16 %v3782
        %v3795 = vpack.c.b16 %v3792, %v3791
        %v3796 = vpack.c.b16 %v3794, %v3793
        %v3800 = vsel %vm445, %v3771, 0
        %v3803 = vsel %vm445, %v3772, 0
        %v3806 = vsel %vm445, %v3773, 0
        %v3809 = vsel %vm445, %v3774, 0
        %v3812 = vsel %vm445, %v3775, 0
        %v3815 = vsel %vm445, %v3776, 0
        %v3818 = vsel %vm445, %v3777, 0
        %v3821 = vsel %vm445, %v3778, 0
        %3823 = vmatpush.bf16.msra.mxu0 0
        %3824 = vmatpush.bf16.msra.mxu0 0
        %3825 = vmatpush.bf16.msra.mxu0 0
        %3826 = vmatpush.bf16.msra.mxu0 0
        %3827 = vmatpush.bf16.msra.mxu0 0
        %3828 = vmatpush.bf16.msra.mxu0 0
        %3829 = vmatpush.bf16.msra.mxu0 %v3796
        %3830 = vmatpush.bf16.msra.mxu0 %v3795
        %3831 = vmatmul.bf16.gmra.mxu0 %v3800
        %v3832 = vpop.f32.mrf.mxu0
        %v3833 = vadd.f32 %v3785, %v3832
        %v3834 = vpop.f32.mrf.mxu0
        %v3835 = vadd.f32 %v3785, %v3834
        %3836 = vmatmul.bf16.gmra.mxu0 %v3803
        %v3837 = vpop.f32.mrf.mxu0
        %v3838 = vadd.f32 %v3785, %v3837
        %v3839 = vpop.f32.mrf.mxu0
        %v3840 = vadd.f32 %v3785, %v3839
        %3841 = vmatmul.bf16.gmra.mxu0 %v3806
        %v3842 = vpop.f32.mrf.mxu0
        %v3843 = vadd.f32 %v3785, %v3842
        %v3844 = vpop.f32.mrf.mxu0
        %v3845 = vadd.f32 %v3785, %v3844
        %3846 = vmatmul.bf16.gmra.mxu0 %v3809
        %v3847 = vpop.f32.mrf.mxu0
        %v3848 = vadd.f32 %v3785, %v3847
        %v3849 = vpop.f32.mrf.mxu0
        %v3850 = vadd.f32 %v3785, %v3849
        %3851 = vmatmul.bf16.gmra.mxu0 %v3812
        %v3852 = vpop.f32.mrf.mxu0
        %v3853 = vadd.f32 %v3785, %v3852
        %v3854 = vpop.f32.mrf.mxu0
        %v3855 = vadd.f32 %v3785, %v3854
        %3856 = vmatmul.bf16.gmra.mxu0 %v3815
        %v3857 = vpop.f32.mrf.mxu0
        %v3858 = vadd.f32 %v3785, %v3857
        %v3859 = vpop.f32.mrf.mxu0
        %v3860 = vadd.f32 %v3785, %v3859
        %3861 = vmatmul.bf16.gmra.mxu0 %v3818
        %v3862 = vpop.f32.mrf.mxu0
        %v3863 = vadd.f32 %v3785, %v3862
        %v3864 = vpop.f32.mrf.mxu0
        %v3865 = vadd.f32 %v3785, %v3864
        %3866 = vmatmul.bf16.gmra.mxu0 %v3821
        %v3867 = vpop.f32.mrf.mxu0
        %v3868 = vadd.f32 %v3785, %v3867
        %v3869 = vpop.f32.mrf.mxu0
        %v3870 = vadd.f32 %v3785, %v3869
        %3871 = vdwg.mxu0
        %v3872 = vmul.f32 %v3833, 0.5
        %v3873 = vmul.f32 %v3835, 0.5
        %v3874 = vmul.f32 %v3838, 0.5
        %v3875 = vmul.f32 %v3840, 0.5
        %v3876 = vmul.f32 %v3843, 0.5
        %v3877 = vmul.f32 %v3845, 0.5
        %v3878 = vmul.f32 %v3848, 0.5
        %v3879 = vmul.f32 %v3850, 0.5
        %v3880 = vmul.f32 %v3853, 0.5
        %v3881 = vmul.f32 %v3855, 0.5
        %v3882 = vmul.f32 %v3858, 0.5
        %v3883 = vmul.f32 %v3860, 0.5
        %v3884 = vmul.f32 %v3863, 0.5
        %v3885 = vmul.f32 %v3865, 0.5
        %v3886 = vmul.f32 %v3868, 0.5
        %v3887 = vmul.f32 %v3870, 0.5
        %v3888 = vmul.f32 %v3833, 0.044715
        %v3889 = vmul.f32 %v3835, 0.044715
        %v3890 = vmul.f32 %v3838, 0.044715
        %v3891 = vmul.f32 %v3840, 0.044715
        %v3892 = vmul.f32 %v3843, 0.044715
        %v3893 = vmul.f32 %v3845, 0.044715
        %v3894 = vmul.f32 %v3848, 0.044715
        %v3895 = vmul.f32 %v3850, 0.044715
        %v3896 = vmul.f32 %v3853, 0.044715
        %v3897 = vmul.f32 %v3855, 0.044715
        %v3898 = vmul.f32 %v3858, 0.044715
        %v3899 = vmul.f32 %v3860, 0.044715
        %v3900 = vmul.f32 %v3863, 0.044715
        %v3901 = vmul.f32 %v3865, 0.044715
        %v3902 = vmul.f32 %v3868, 0.044715
        %v3903 = vmul.f32 %v3870, 0.044715
        %v3904 = vmul.f32 %v3888, %v3833
        %v3905 = vmul.f32 %v3889, %v3835
        %v3906 = vmul.f32 %v3890, %v3838
        %v3907 = vmul.f32 %v3891, %v3840
        %v3908 = vmul.f32 %v3892, %v3843
        %v3909 = vmul.f32 %v3893, %v3845
        %v3910 = vmul.f32 %v3894, %v3848
        %v3911 = vmul.f32 %v3895, %v3850
        %v3912 = vmul.f32 %v3896, %v3853
        %v3913 = vmul.f32 %v3897, %v3855
        %v3914 = vmul.f32 %v3898, %v3858
        %v3915 = vmul.f32 %v3899, %v3860
        %v3916 = vmul.f32 %v3900, %v3863
        %v3917 = vmul.f32 %v3901, %v3865
        %v3918 = vmul.f32 %v3902, %v3868
        %v3919 = vmul.f32 %v3903, %v3870
        %v3920 = vmul.f32 %v3904, %v3833
        %v3921 = vmul.f32 %v3905, %v3835
        %v3922 = vmul.f32 %v3906, %v3838
        %v3923 = vmul.f32 %v3907, %v3840
        %v3924 = vmul.f32 %v3908, %v3843
        %v3925 = vmul.f32 %v3909, %v3845
        %v3926 = vmul.f32 %v3910, %v3848
        %v3927 = vmul.f32 %v3911, %v3850
        %v3928 = vmul.f32 %v3912, %v3853
        %v3929 = vmul.f32 %v3913, %v3855
        %v3930 = vmul.f32 %v3914, %v3858
        %v3931 = vmul.f32 %v3915, %v3860
        %v3932 = vmul.f32 %v3916, %v3863
        %v3933 = vmul.f32 %v3917, %v3865
        %v3934 = vmul.f32 %v3918, %v3868
        %v3935 = vmul.f32 %v3919, %v3870
        %v3936 = vadd.f32 %v3833, %v3920
        %v3937 = vadd.f32 %v3835, %v3921
        %v3938 = vadd.f32 %v3838, %v3922
        %v3939 = vadd.f32 %v3840, %v3923
        %v3940 = vadd.f32 %v3843, %v3924
        %v3941 = vadd.f32 %v3845, %v3925
        %v3942 = vadd.f32 %v3848, %v3926
        %v3943 = vadd.f32 %v3850, %v3927
        %v3944 = vadd.f32 %v3853, %v3928
        %v3945 = vadd.f32 %v3855, %v3929
        %v3946 = vadd.f32 %v3858, %v3930
        %v3947 = vadd.f32 %v3860, %v3931
        %v3948 = vadd.f32 %v3863, %v3932
        %v3949 = vadd.f32 %v3865, %v3933
        %v3950 = vadd.f32 %v3868, %v3934
        %v3951 = vadd.f32 %v3870, %v3935
        %v3952 = vmul.f32 %v3936, 0.7978846
        %v3953 = vmul.f32 %v3937, 0.7978846
        %v3954 = vmul.f32 %v3938, 0.7978846
        %v3955 = vmul.f32 %v3939, 0.7978846
        %v3956 = vmul.f32 %v3940, 0.7978846
        %v3957 = vmul.f32 %v3941, 0.7978846
        %v3958 = vmul.f32 %v3942, 0.7978846
        %v3959 = vmul.f32 %v3943, 0.7978846
        %v3960 = vmul.f32 %v3944, 0.7978846
        %v3961 = vmul.f32 %v3945, 0.7978846
        %v3962 = vmul.f32 %v3946, 0.7978846
        %v3963 = vmul.f32 %v3947, 0.7978846
        %v3964 = vmul.f32 %v3948, 0.7978846
        %v3965 = vmul.f32 %v3949, 0.7978846
        %v3966 = vmul.f32 %v3950, 0.7978846
        %v3967 = vmul.f32 %v3951, 0.7978846
        %v3968 = vtanh.pop %v3952
        %v3969 = vtanh.pop %v3953
        %v3970 = vtanh.pop %v3954
        %v3971 = vtanh.pop %v3955
        %v3972 = vtanh.pop %v3956
        %v3973 = vtanh.pop %v3957
        %v3974 = vtanh.pop %v3958
        %v3975 = vtanh.pop %v3959
        %v3976 = vtanh.pop %v3960
        %v3977 = vtanh.pop %v3961
        %v3978 = vtanh.pop %v3962
        %v3979 = vtanh.pop %v3963
        %v3980 = vtanh.pop %v3964
        %v3981 = vtanh.pop %v3965
        %v3982 = vtanh.pop %v3966
        %v3983 = vtanh.pop %v3967
        %v3984 = vadd.f32 %v3968, 1.0
        %v3985 = vadd.f32 %v3969, 1.0
        %v3986 = vadd.f32 %v3970, 1.0
        %v3987 = vadd.f32 %v3971, 1.0
        %v3988 = vadd.f32 %v3972, 1.0
        %v3989 = vadd.f32 %v3973, 1.0
        %v3990 = vadd.f32 %v3974, 1.0
        %v3991 = vadd.f32 %v3975, 1.0
        %v3992 = vadd.f32 %v3976, 1.0
        %v3993 = vadd.f32 %v3977, 1.0
        %v3994 = vadd.f32 %v3978, 1.0
        %v3995 = vadd.f32 %v3979, 1.0
        %v3996 = vadd.f32 %v3980, 1.0
        %v3997 = vadd.f32 %v3981, 1.0
        %v3998 = vadd.f32 %v3982, 1.0
        %v3999 = vadd.f32 %v3983, 1.0
        %v4000 = vmul.f32 %v3872, %v3984
        %v4001 = vmul.f32 %v3873, %v3985
        %v4002 = vmul.f32 %v3874, %v3986
        %v4003 = vmul.f32 %v3875, %v3987
        %v4004 = vmul.f32 %v3876, %v3988
        %v4005 = vmul.f32 %v3877, %v3989
        %v4006 = vmul.f32 %v3878, %v3990
        %v4007 = vmul.f32 %v3879, %v3991
        %v4008 = vmul.f32 %v3880, %v3992
        %v4009 = vmul.f32 %v3881, %v3993
        %v4010 = vmul.f32 %v3882, %v3994
        %v4011 = vmul.f32 %v3883, %v3995
        %v4012 = vmul.f32 %v3884, %v3996
        %v4013 = vmul.f32 %v3885, %v3997
        %v4014 = vmul.f32 %v3886, %v3998
        %v4015 = vmul.f32 %v3887, %v3999
        %v4016 = vpack.c.bf16 %v4001, %v4000
        %v4017 = vpack.c.bf16 %v4003, %v4002
        %v4018 = vpack.c.bf16 %v4005, %v4004
        %v4019 = vpack.c.bf16 %v4007, %v4006
        %v4020 = vpack.c.bf16 %v4009, %v4008
        %v4021 = vpack.c.bf16 %v4011, %v4010
        %v4022 = vpack.c.bf16 %v4013, %v4012
        %v4023 = vpack.c.bf16 %v4015, %v4014
        %v4024 = vld [vmem:[%s7] sm:$0xf]
        %v4025 = vld [vmem:[%s7 + $0x4] sm:$0xf]
        %v4026 = vld [vmem:[%s7 + $0x8] sm:$0xf]
        %v4027 = vld [vmem:[%s7 + $0xc] sm:$0xf]
        %v4028 = vld [vmem:[%s7 + $0x10] sm:$0xf]
        %v4029 = vld [vmem:[%s7 + $0x14] sm:$0xf]
        %v4030 = vld [vmem:[%s7 + $0x18] sm:$0xf]
        %v4031 = vld [vmem:[%s7 + $0x1c] sm:$0xf]
        %v4032 = vld [vmem:[%s7 + $0x20] sm:$0xf]
        %v4033 = vld [vmem:[%s7 + $0x24] sm:$0xf]
        %v4034 = vld [vmem:[%s7 + $0x28] sm:$0xf]
        %v4035 = vld [vmem:[%s7 + $0x2c] sm:$0xf]
        %v4036 = vld [vmem:[%s7 + $0x30] sm:$0xf]
        %v4037 = vld [vmem:[%s7 + $0x34] sm:$0xf]
        %v4038 = vld [vmem:[%s7 + $0x38] sm:$0xf]
        %v4039 = vld [vmem:[%s7 + $0x3c] sm:$0xf]
        %v4040 = vld [vmem:[%s8] sm:$0x1]
        %v4042 = vperm.slane %v4040, 0
        %v4060 = vunpack.c.l.b16 %v4024
        %v4061 = vunpack.c.l.b16 %v4025
        %v4062 = vunpack.c.l.b16 %v4026
        %v4063 = vunpack.c.l.b16 %v4027
        %v4064 = vunpack.c.l.b16 %v4028
        %v4065 = vunpack.c.l.b16 %v4029
        %v4066 = vunpack.c.l.b16 %v4030
        %v4067 = vunpack.c.l.b16 %v4031
        %v4068 = vunpack.c.l.b16 %v4032
        %v4069 = vunpack.c.l.b16 %v4033
        %v4070 = vunpack.c.l.b16 %v4034
        %v4071 = vunpack.c.l.b16 %v4035
        %v4072 = vunpack.c.l.b16 %v4036
        %v4073 = vunpack.c.l.b16 %v4037
        %v4074 = vunpack.c.l.b16 %v4038
        %v4075 = vunpack.c.l.b16 %v4039
        %v4076 = vpack.c.b16 %v4061, %v4060
        %v4077 = vpack.c.b16 %v4063, %v4062
        %v4078 = vpack.c.b16 %v4065, %v4064
        %v4079 = vpack.c.b16 %v4067, %v4066
        %v4080 = vpack.c.b16 %v4069, %v4068
        %v4081 = vpack.c.b16 %v4071, %v4070
        %v4082 = vpack.c.b16 %v4073, %v4072
        %v4083 = vpack.c.b16 %v4075, %v4074
        %4092 = vmatpush.bf16.msra.mxu0 %v4083
        %4093 = vmatpush.bf16.msra.mxu0 %v4082
        %4094 = vmatpush.bf16.msra.mxu0 %v4081
        %4095 = vmatpush.bf16.msra.mxu0 %v4080
        %4096 = vmatpush.bf16.msra.mxu0 %v4079
        %4097 = vmatpush.bf16.msra.mxu0 %v4078
        %4098 = vmatpush.bf16.msra.mxu0 %v4077
        %4099 = vmatpush.bf16.msra.mxu0 %v4076
        %4100 = vmatmul.bf16.gmra.mxu0 %v4016
        %v4101 = vpop.f32.mrf.mxu0
        %v4102 = vadd.f32 %v4042, %v4101
        %v4103 = vpop.f32.mrf.mxu0
        %v4104 = vadd.f32 %v4042, %v4103
        %4105 = vmatmul.bf16.gmra.mxu0 %v4017
        %v4106 = vpop.f32.mrf.mxu0
        %v4107 = vadd.f32 %v4042, %v4106
        %v4108 = vpop.f32.mrf.mxu0
        %v4109 = vadd.f32 %v4042, %v4108
        %4110 = vmatmul.bf16.gmra.mxu0 %v4018
        %v4111 = vpop.f32.mrf.mxu0
        %v4112 = vadd.f32 %v4042, %v4111
        %v4113 = vpop.f32.mrf.mxu0
        %v4114 = vadd.f32 %v4042, %v4113
        %4115 = vmatmul.bf16.gmra.mxu0 %v4019
        %v4116 = vpop.f32.mrf.mxu0
        %v4117 = vadd.f32 %v4042, %v4116
        %v4118 = vpop.f32.mrf.mxu0
        %v4119 = vadd.f32 %v4042, %v4118
        %4120 = vmatmul.bf16.gmra.mxu0 %v4020
        %v4121 = vpop.f32.mrf.mxu0
        %v4122 = vadd.f32 %v4042, %v4121
        %v4123 = vpop.f32.mrf.mxu0
        %v4124 = vadd.f32 %v4042, %v4123
        %4125 = vmatmul.bf16.gmra.mxu0 %v4021
        %v4126 = vpop.f32.mrf.mxu0
        %v4127 = vadd.f32 %v4042, %v4126
        %v4128 = vpop.f32.mrf.mxu0
        %v4129 = vadd.f32 %v4042, %v4128
        %4130 = vmatmul.bf16.gmra.mxu0 %v4022
        %v4131 = vpop.f32.mrf.mxu0
        %v4132 = vadd.f32 %v4042, %v4131
        %v4133 = vpop.f32.mrf.mxu0
        %v4134 = vadd.f32 %v4042, %v4133
        %4135 = vmatmul.bf16.gmra.mxu0 %v4023
        %v4136 = vpop.f32.mrf.mxu0
        %v4137 = vadd.f32 %v4042, %v4136
        %v4138 = vpop.f32.mrf.mxu0
        %v4139 = vadd.f32 %v4042, %v4138
        %4140 = vdwg.mxu0
        %v4141 = vld [vmem:[%s9] sm:$0x1]
        %v4143 = vperm.slane %v4141, 0
        %v4145 = vmul.f32 %v4102, %v4143
        %v4146 = vmul.f32 %v4104, %v4143
        %v4147 = vmul.f32 %v4107, %v4143
        %v4148 = vmul.f32 %v4109, %v4143
        %v4149 = vmul.f32 %v4112, %v4143
        %v4150 = vmul.f32 %v4114, %v4143
        %v4151 = vmul.f32 %v4117, %v4143
        %v4152 = vmul.f32 %v4119, %v4143
        %v4153 = vmul.f32 %v4122, %v4143
        %v4154 = vmul.f32 %v4124, %v4143
        %v4155 = vmul.f32 %v4127, %v4143
        %v4156 = vmul.f32 %v4129, %v4143
        %v4157 = vmul.f32 %v4132, %v4143
        %v4158 = vmul.f32 %v4134, %v4143
        %v4159 = vmul.f32 %v4137, %v4143
        %v4160 = vmul.f32 %v4139, %v4143
        %v4161 = vadd.f32 %v428, %v4145
        %v4162 = vadd.f32 %v429, %v4146
        %v4163 = vadd.f32 %v430, %v4147
        %v4164 = vadd.f32 %v431, %v4148
        %v4165 = vadd.f32 %v432, %v4149
        %v4166 = vadd.f32 %v433, %v4150
        %v4167 = vadd.f32 %v434, %v4151
        %v4168 = vadd.f32 %v435, %v4152
        %v4169 = vadd.f32 %v436, %v4153
        %v4170 = vadd.f32 %v437, %v4154
        %v4171 = vadd.f32 %v438, %v4155
        %v4172 = vadd.f32 %v439, %v4156
        %v4173 = vadd.f32 %v440, %v4157
        %v4174 = vadd.f32 %v441, %v4158
        %v4175 = vadd.f32 %v442, %v4159
        %v4176 = vadd.f32 %v443, %v4160
        %4177 = vst.msk [vmem:[%s393] sm:$0xff] %vm445, %v4161
        %4178 = vst.msk [vmem:[%s393 + $0x8] sm:$0xff] %vm445, %v4162
        %4179 = vst.msk [vmem:[%s393 + $0x10] sm:$0xff] %vm445, %v4163
        %4180 = vst.msk [vmem:[%s393 + $0x18] sm:$0xff] %vm445, %v4164
        %4181 = vst.msk [vmem:[%s393 + $0x20] sm:$0xff] %vm445, %v4165
        %4182 = vst.msk [vmem:[%s393 + $0x28] sm:$0xff] %vm445, %v4166
        %4183 = vst.msk [vmem:[%s393 + $0x30] sm:$0xff] %vm445, %v4167
        %4184 = vst.msk [vmem:[%s393 + $0x38] sm:$0xff] %vm445, %v4168
        %4185 = vst.msk [vmem:[%s393 + $0x40] sm:$0xff] %vm445, %v4169
        %4186 = vst.msk [vmem:[%s393 + $0x48] sm:$0xff] %vm445, %v4170
        %4187 = vst.msk [vmem:[%s393 + $0x50] sm:$0xff] %vm445, %v4171
        %4188 = vst.msk [vmem:[%s393 + $0x58] sm:$0xff] %vm445, %v4172
        %4189 = vst.msk [vmem:[%s393 + $0x60] sm:$0xff] %vm445, %v4173
        %4190 = vst.msk [vmem:[%s393 + $0x68] sm:$0xff] %vm445, %v4174
        %4191 = vst.msk [vmem:[%s393 + $0x70] sm:$0xff] %vm445, %v4175
        %4192 = vst.msk [vmem:[%s393 + $0x78] sm:$0xff] %vm445, %v4176
        %s4193 = sand.u32 %s264, 1
        %s4194 = scalar_lea.sflag [#allocation5], %s4193
        %s4195 = sand.u32 %s264, 1
        %s4196 = smul.addr %s4195, 128
        %s4197 = scalar_lea.vmem [#allocation6], %s4196
        // Predicated region
        $region81: #{tpu_custom_call.1} parent=59 // pred_check
          %p4198 = pneg %p274
        $region82: #{tpu_custom_call.1} parent=59 // pred_check_branch
          %4200 = sbr.rel (%p4198) target = $region84
        $region83: #{tpu_custom_call.1} parent=59 // pred_region
          %s4201 = smul.u32 8, %s32
          %4203 = vsyncadd %s4194, 0
          %s4204 = smul.addr %s4201, 2
          %s4205 = smul.addr %s31, 32
          %s4206 = sadd.s32 %s4204, %s4205
          %s4207 = smul.addr %s4206, 8
          %s4208 = scalar_lea.hbm %s10, %s4207
          %s4209 = sshll.u32 %s4197, 4
          %s4210 = int_to_ptr.vmem [resolvable:$true] %s4209
          %s4211 = sshll.u32 %s4208, 4
          %s4212 = int_to_ptr.hbm [resolvable:$true] %s4211
          %4217 = dma.vmem_to_hbm [thread:$0]  %s4210, 2048, %s4212, %s4194, 128, 128, 8
        $region84: #{tpu_custom_call.1} parent=59 // pred_fallthru
          _
      $region60: #{tpu_custom_call.1} parent=5 // pred_fallthru
        _
      %p4218 = scmp.le.s32.totalorder 2, %s22
      // Predicated region
      $region85: #{tpu_custom_call.1} parent=5 // pred_check
        %p4219 = pneg %p4218
      $region86: #{tpu_custom_call.1} parent=5 // pred_check_branch
        %4221 = sbr.rel (%p4219) target = $region88
      $region87: #{tpu_custom_call.1} parent=5 // pred_region
        %s4222 = ssub.s32 %s22, 2
        // Predicated region
        $region89: #{tpu_custom_call.1} parent=87 // pred_check
          %p4223 = pneg %p280
        $region90: #{tpu_custom_call.1} parent=87 // pred_check_branch
          %4225 = sbr.rel (%p4223) target = $region92
        $region91: #{tpu_custom_call.1} parent=87 // pred_region
          %s4226 = sand.u32 %s265, 1
          %s4227 = scalar_lea.sflag [#allocation5], %s4226
          %s4228 = sand.u32 %s265, 1
          %s4229 = smul.addr %s4228, 128
          %s4230 = scalar_lea.vmem [#allocation6], %s4229
          %4232 = dma.done %s4227, 2048
        $region92: #{tpu_custom_call.1} parent=87 // pred_fallthru
          _
      $region88: #{tpu_custom_call.1} parent=5 // pred_fallthru
        _
    $region6: #{tpu_custom_call.1} parent=1 // loop_footer
      %s26 = sadd.s32 1, %s22
    $region7: #{tpu_custom_call.1} parent=1 // loop_footer_branch
      %21 = sbr.rel target = $region3
    $region8: #{tpu_custom_call.1} parent=1 // loop_exit
      _
    %4233 = vsyncpa [#allocation4], 1
    %s4234 = scalar_lea.sflag [#allocation4], 1
    %4235 = vsyncpa %s4234, 1
    %4236 = vsyncpa [#allocation5], 1
    %s4237 = scalar_lea.sflag [#allocation5], 1
    %4238 = vsyncpa %s4237, 1

</llo_original>
